<compile_context>
chip_gen: v5e
topology: v5e:2x2
jax: 0.10.0
libtpu: 0.0.40
codegen_flags: <defaults>
</compile_context>

<pallas_src>
import functools

import jax
import jax.numpy as jnp
from jax import lax
from jax.experimental import pallas as pl
from jax.experimental.pallas import tpu as pltpu


_EPS = 1e-6                      # SAM LayerNorm2d eps
# Scoped-VMEM request: <= 48 MiB is safe on every generation (v7x has 64 MiB
# physical per TensorCore); can be raised toward 64-96 MiB on v5e/v6e
# (128 MiB parts) if profiling shows DMA exposure at larger row tiles.
_VMEM_LIMIT = 48 * 1024 * 1024


# -----------------------------------------------------------------------------
# Kernel 1: Conv2d(Cin, Cmid, k=1, bias=False) + LayerNorm2d, row-tiled.
# The concatenated input is never materialized: SAM and hist embeddings stream
# in as two separate bf16 row tiles with a split 1x1 weight.
# -----------------------------------------------------------------------------
def _conv1x1_ln_kernel(xs_ref, xh_ref, ws_ref, wh_ref, g_ref, b_ref, y_ref):
    # xs: (1, TR, Csam) bf16 ; xh: (1, TR, Chist) bf16
    # ws: (Csam, Cmid) bf16 ; wh: (Chist, Cmid) bf16 ; g/b: (1, Cmid) f32
    y = (jnp.dot(xs_ref[0], ws_ref[...], preferred_element_type=jnp.float32)
         + jnp.dot(xh_ref[0], wh_ref[...], preferred_element_type=jnp.float32))

    # Mean-centered LayerNorm over the channel (lane) dim, f32 statistics.
    mu = jnp.mean(y, axis=-1, keepdims=True)
    d = y - mu
    var = jnp.mean(d * d, axis=-1, keepdims=True)
    z = d * lax.rsqrt(var + _EPS)
    y_ref[0] = (z * g_ref[...] + b_ref[...]).astype(y_ref.dtype)        # bf16 store


def conv1x1_ln_pallas(xs, xh, ws, wh, g1, b1, *, W, rows_per_block):
    """xs: (B, H*W, Csam) bf16, xh: (B, H*W, Chist) bf16 -> y: (B, H*W, Cmid) bf16."""
    B, HW, Csam = xs.shape
    _, _, Chist = xh.shape
    TR = rows_per_block * W
    assert HW % TR == 0
    nb = HW // TR
    Cmid = ws.shape[1]
    assert wh.shape == (Chist, Cmid)

    grid_spec = pltpu.PrefetchScalarGridSpec(
        num_scalar_prefetch=0,
        grid=(B, nb),
        in_specs=[
            pl.BlockSpec((1, TR, Csam), lambda b, r: (b, r, 0)),
            pl.BlockSpec((1, TR, Chist), lambda b, r: (b, r, 0)),
            pl.BlockSpec((Csam, Cmid), lambda b, r: (0, 0)),
            pl.BlockSpec((Chist, Cmid), lambda b, r: (0, 0)),
            pl.BlockSpec((1, Cmid), lambda b, r: (0, 0)),
            pl.BlockSpec((1, Cmid), lambda b, r: (0, 0)),
        ],
        out_specs=pl.BlockSpec((1, TR, Cmid), lambda b, r: (b, r, 0)),
    )
    return pl.pallas_call(
        _conv1x1_ln_kernel,
        out_shape=jax.ShapeDtypeStruct((B, HW, Cmid), jnp.bfloat16),
        grid_spec=grid_spec,
        compiler_params=pltpu.CompilerParams(
            dimension_semantics=("parallel", "parallel"),
            vmem_limit_bytes=_VMEM_LIMIT),
    )(xs, xh, ws, wh, g1, b1)


# -----------------------------------------------------------------------------
# Kernel 2: Conv2d(Cmid, Cout, k=3, pad=1, bias=False) + LayerNorm2d.
# Unpadded y resident per batch; SAME padding built once per batch in a VMEM
# scratch; output row-tiled.
# -----------------------------------------------------------------------------
def _make_conv3x3_ln_kernel(W, TR, HW):
    def kernel(y_ref, w3_ref, g_ref, b_ref, o_ref, ypad_ref):
        # y_ref:    (1, HW, Cmid) bf16 -- whole image, resident per batch.
        # w3_ref:   (9, Cmid, Cout) bf16, HWIO taps flattened as dh*3 + dw.
        # ypad_ref: (HW + 2W, Cmid) bf16 scratch = y with W zero rows on each
        #           side (== SAME zero padding of the 3x3 conv).
        Cmid = y_ref.shape[-1]
        r = pl.program_id(1)

        # Per-batch setup: copy the freshly-DMA'd y into the padded scratch
        # and zero the two W-row borders (VMEM->VMEM only, no HBM round trip).
        @pl.when(r == 0)
        def _():
            ypad_ref[pl.ds(0, W), :] = jnp.zeros((W, Cmid), ypad_ref.dtype)
            ypad_ref[pl.ds(W + HW, W), :] = jnp.zeros((W, Cmid), ypad_ref.dtype)
            ypad_ref[pl.ds(W, HW), :] = y_ref[0]

        # Three sublane-aligned row slices, each reused for 3 column taps.
        base = pl.multiple_of(r * TR, 8)
        s0 = ypad_ref[pl.ds(base, TR), :]                                 # rows q - W
        s1 = ypad_ref[pl.ds(pl.multiple_of(base + W, 8), TR), :]          # rows q
        s2 = ypad_ref[pl.ds(pl.multiple_of(base + 2 * W, 8), TR), :]      # rows q + W

        # One column tap = chained sum of its 3 dh matmuls in a single
        # expression: keeps the reduction in the MXU result buffer (v7x MRB)
        # and only 2 live (TR, Cout) f32 arrays (acc + current tap).
        def tap(dw):
            return (jnp.dot(s0, w3_ref[dw], preferred_element_type=jnp.float32)
                    + jnp.dot(s1, w3_ref[3 + dw], preferred_element_type=jnp.float32)
                    + jnp.dot(s2, w3_ref[6 + dw], preferred_element_type=jnp.float32))

        # dw = -1/+1 column taps: a +-1 shift along flattened pixel rows
        # commutes with the channel matmul, so roll the f32 tap (XLU) and zero
        # the column wrap with a precomputed {0,1} mask.  Because TR % W == 0
        # the roll's tile-boundary wrap lands exactly on masked columns.
        col = lax.broadcasted_iota(jnp.int32, (TR, 1), 0) % W
        mask_l = (col != 0).astype(jnp.float32)
        mask_r = (col != W - 1).astype(jnp.float32)

        acc = tap(1)                                                      # dw = 0 (center)
        acc = acc + mask_l * pltpu.roll(tap(0), 1, axis=0)                # dw = -1
        acc = acc + mask_r * pltpu.roll(tap(2), TR - 1, axis=0)           # dw = +1

        # Mean-centered LayerNorm #2 (f32 statistics).
        mu = jnp.mean(acc, axis=-1, keepdims=True)
        d = acc - mu
        var = jnp.mean(d * d, axis=-1, keepdims=True)
        z = d * lax.rsqrt(var + _EPS)
        o_ref[0] = (z * g_ref[...] + b_ref[...]).astype(o_ref.dtype)

    return kernel


def conv3x3_ln_pallas(y, w3, g2, b2, *, H, W, rows_per_block,
                      out_dtype=jnp.float32):
    """y: (B, H*W, Cmid) bf16 (unpadded) -> (B, H*W, Cout) out_dtype."""
    B, HW, Cmid = y.shape
    assert HW == H * W
    # Sublane alignment of the dh row slices: all pl.ds starts are multiples of
    # W.  SAM's 64x64 grid satisfies this; pad the grid upstream otherwise.
    assert W % 8 == 0, "W must be a multiple of 8 for aligned row slices"
    TR = rows_per_block * W
    assert HW % TR == 0
    assert TR % W == 0, "roll/mask column-tap scheme requires whole image rows per tile"
    nb = HW // TR
    Cout = w3.shape[-1]

    kernel = _make_conv3x3_ln_kernel(W, TR, HW)
    grid_spec = pltpu.PrefetchScalarGridSpec(
        num_scalar_prefetch=0,
        grid=(B, nb),
        in_specs=[
            # Whole (unpadded) y stays resident across the row-block axis.
            # TODO(synk): for grids much larger than SAM's 64x64, switch to a
            # per-row-block halo window so the VMEM footprint stays O(TR).
            pl.BlockSpec((1, HW, Cmid), lambda b, r: (b, 0, 0)),
            pl.BlockSpec((9, Cmid, Cout), lambda b, r: (0, 0, 0)),
            pl.BlockSpec((1, Cout), lambda b, r: (0, 0)),
            pl.BlockSpec((1, Cout), lambda b, r: (0, 0)),
        ],
        out_specs=pl.BlockSpec((1, TR, Cout), lambda b, r: (b, r, 0)),
        scratch_shapes=[pltpu.VMEM((HW + 2 * W, Cmid), jnp.bfloat16)],
    )
    return pl.pallas_call(
        kernel,
        out_shape=jax.ShapeDtypeStruct((B, HW, Cout), out_dtype),
        grid_spec=grid_spec,
        compiler_params=pltpu.CompilerParams(
            # Row axis is "arbitrary": the padded-y scratch is built at r == 0
            # and reused by the following row blocks of the same batch.
            dimension_semantics=("parallel", "arbitrary"),
            vmem_limit_bytes=_VMEM_LIMIT),
    )(y, w3, g2, b2)


# -----------------------------------------------------------------------------
# Glue (plain JAX): InterpolationUpSampler + HistoSAM forward
# -----------------------------------------------------------------------------
def interpolation_upsampler(hist_tokens, out_h, out_w):
    """(B, N, D) patch tokens -> (B, out_h, out_w, D) via bilinear interpolation.
    TODO(synk): the real InterpolationUpSampler targets a fixed 64x64 grid and may
    drop a CLS token; here we upsample to the (scaled-down) SAM grid size."""
    B, N, D = hist_tokens.shape
    s = int(round(N ** 0.5))
    grid = hist_tokens.reshape(B, s, s, D)
    return jax.image.resize(grid, (B, out_h, out_w, D), method="bilinear")


def _pick_rows_per_block(H, W, target_pixels=1024):
    """Largest divisor of H whose row tile is <= ~target_pixels pixels."""
    rpb = max(1, min(H, target_pixels // max(W, 1)))
    while H % rpb != 0:
        rpb -= 1
    return rpb


def histosam_forward(sam_emb, hist_tokens, params, *, rows_per_block=None,
                     out_dtype=jnp.float32):
    """embedding_as_input=True, do_merge=True, no attention fusion/refinement.
    sam_emb: (B, H, W, Csam) NHWC; hist_tokens: (B, N, Chist).
    Returns image_embeddings in NCHW (B, Cout, H, W), matching the PyTorch neck."""
    B, H, W, Csam = sam_emb.shape
    if rows_per_block is None:
        rows_per_block = _pick_rows_per_block(H, W)

    # Upsample hist tokens directly in bf16 (the MXU operand dtype).  The
    # concat with the SAM embedding is fused into kernel 1 via the split 1x1
    # weight, so the (B, H*W, Csam+Chist) tensor never touches HBM.
    up = interpolation_upsampler(hist_tokens.astype(jnp.bfloat16), H, W)
    xh = up.reshape(B, H * W, up.shape[-1])
    xs = sam_emb.reshape(B, H * W, Csam).astype(jnp.bfloat16)
    Chist = xh.shape[-1]

    Cmid = params["w1"].shape[1]
    Cout = params["w3"].shape[-1]
    assert params["w1"].shape[0] == Csam + Chist
    w1 = params["w1"].astype(jnp.bfloat16)
    ws, wh = w1[:Csam], w1[Csam:]
    w3 = params["w3"].reshape(9, Cmid, Cout).astype(jnp.bfloat16)    # HWIO -> (9,Cmid,Cout)
    g1 = params["g1"].reshape(1, -1).astype(jnp.float32)
    b1 = params["b1"].reshape(1, -1).astype(jnp.float32)
    g2 = params["g2"].reshape(1, -1).astype(jnp.float32)
    b2 = params["b2"].reshape(1, -1).astype(jnp.float32)

    # Stage 1: conv1x1 + LN1 (two streamed bf16 inputs -> bf16 y).
    y = conv1x1_ln_pallas(xs, xh, ws, wh, g1, b1, W=W, rows_per_block=rows_per_block)

    # Stage 2: conv3x3 + LN2 (unpadded y; SAME padding built in VMEM).
    # out_dtype can be bf16 if the downstream SAM mask decoder accepts it
    # (halves the final writeback + NHWC->NCHW transpose cost).
    out = conv3x3_ln_pallas(y, w3, g2, b2, H=H, W=W,
                            rows_per_block=rows_per_block, out_dtype=out_dtype)
    return out.reshape(B, H, W, Cout).transpose(0, 3, 1, 2)          # NCHW


# -----------------------------------------------------------------------------
# Pure-JAX reference (f32, for correctness check)
# -----------------------------------------------------------------------------
def _layernorm_c(x, g, b, eps=_EPS):
    mu = x.mean(-1, keepdims=True)
    var = ((x - mu) ** 2).mean(-1, keepdims=True)
    return (x - mu) / jnp.sqrt(var + eps) * g + b


def histosam_reference(sam_emb, hist_tokens, params):
    B, H, W, _ = sam_emb.shape
    up = interpolation_upsampler(hist_tokens, H, W)
    x = jnp.concatenate([sam_emb, up], axis=-1)                      # NHWC
    y = jnp.einsum("bhwc,cd->bhwd", x, params["w1"])                 # conv1x1
    y = _layernorm_c(y, params["g1"], params["b1"])
    y = lax.conv_general_dilated(y, params["w3"], window_strides=(1, 1),
                                 padding="SAME",
                                 dimension_numbers=("NHWC", "HWIO", "NHWC"))
    y = _layernorm_c(y, params["g2"], params["b2"])
    return y.transpose(0, 3, 1, 2)                                   # NCHW


# -----------------------------------------------------------------------------
# Deterministic parameter init (nn.Conv2d weights + LayerNorm2d affine)
# -----------------------------------------------------------------------------
def init_params(key, Cin, Cmid, Cout):
    k1, k2, k3, k4, k5, k6 = jax.random.split(key, 6)
    return dict(
        w1=0.02 * jax.random.normal(k1, (Cin, Cmid), jnp.float32),        # conv1x1
        g1=1.0 + 0.01 * jax.random.normal(k2, (Cmid,), jnp.float32),
        b1=0.01 * jax.random.normal(k3, (Cmid,), jnp.float32),
        w3=0.02 * jax.random.normal(k4, (3, 3, Cmid, Cout), jnp.float32),  # conv3x3 HWIO
        g2=1.0 + 0.01 * jax.random.normal(k5, (Cout,), jnp.float32),
        b2=0.01 * jax.random.normal(k6, (Cout,), jnp.float32),
    )


if __name__ == "__main__":
    # Small shapes consistent with the forward (channels MXU-friendly, neck
    # out_chans kept at the module's 256):
    #   SAM embedding (B, H, W, sam_dim), hist tokens (B, num_patches, hist_dim).
    B, H, W = 2, 8, 8
    SAM_DIM, HIST_DIM, N_PATCH = 128, 128, 16
    OUT_CHANS = 256
    CIN = SAM_DIM + HIST_DIM

    key = jax.random.PRNGKey(0)
    k_sam, k_hist, k_par = jax.random.split(key, 3)
    sam_emb = jax.random.normal(k_sam, (B, H, W, SAM_DIM), jnp.float32)
    hist_tokens = jax.random.normal(k_hist, (B, N_PATCH, HIST_DIM), jnp.float32)
    params = init_params(k_par, CIN, OUT_CHANS, OUT_CHANS)

    # rows_per_block=4 -> 2 row blocks per batch: exercises the row tiling, the
    # per-batch padded-scratch init, resident-y revisiting and the roll/mask
    # tile-boundary handling.
    fwd = jax.jit(functools.partial(histosam_forward, rows_per_block=4))
    out = jax.block_until_ready(fwd(sam_emb, hist_tokens, params))
    assert out.shape == (B, OUT_CHANS, H, W), out.shape

    ref = jax.block_until_ready(histosam_reference(sam_emb, hist_tokens, params))
    max_err = float(jnp.max(jnp.abs(out - ref)))
    mean_err = float(jnp.mean(jnp.abs(out - ref)))
    # bf16 inputs/weights/intermediate (f32 accumulation) -> relaxed tolerance.
    assert max_err < 1e-1 and mean_err < 1e-2, (max_err, mean_err)

    print("KERNEL_OK")
</pallas_src>

<mosaic_0001>
module attributes {stable_mosaic.version = 11 : i64} {
  func.func @_conv1x1_ln_kernel(%arg0: i32, %arg1: i32, %arg2: memref<1x32x128xbf16, #tpu.memory_space<vmem>>, %arg3: memref<1x32x128xbf16, #tpu.memory_space<vmem>>, %arg4: memref<128x256xbf16, #tpu.memory_space<vmem>>, %arg5: memref<128x256xbf16, #tpu.memory_space<vmem>>, %arg6: memref<1x256xf32, #tpu.memory_space<vmem>>, %arg7: memref<1x256xf32, #tpu.memory_space<vmem>>, %arg8: memref<1x32x256xbf16, #tpu.memory_space<vmem>>) attributes {dimension_semantics = [#tpu.dimension_semantics<parallel>, #tpu.dimension_semantics<parallel>], iteration_bounds = array<i64: 2, 2>, scalar_prefetch = 0 : i64, scratch_operands = 0 : i64, tpu.core_type = #tpu.core_type<tc>, window_params = [{transform_indices = @transform_0, window_bounds = array<i64: 1, 32, 128>}, {transform_indices = @transform_1, window_bounds = array<i64: 1, 32, 128>}, {pipeline_mode = #tpu.pipeline_mode<synchronous>, transform_indices = @transform_2, window_bounds = array<i64: 128, 256>}, {pipeline_mode = #tpu.pipeline_mode<synchronous>, transform_indices = @transform_3, window_bounds = array<i64: 128, 256>}, {pipeline_mode = #tpu.pipeline_mode<synchronous>, transform_indices = @transform_4, window_bounds = array<i64: 1, 256>}, {pipeline_mode = #tpu.pipeline_mode<synchronous>, transform_indices = @transform_5, window_bounds = array<i64: 1, 256>}, {transform_indices = @transform_6, window_bounds = array<i64: 1, 32, 256>}]} {
    %c0 = arith.constant 0 : index
    %c0_0 = arith.constant 0 : index
    %c0_1 = arith.constant 0 : index
    %0 = vector.load %arg2[%c0, %c0_0, %c0_1] : memref<1x32x128xbf16, #tpu.memory_space<vmem>>, vector<1x32x128xbf16>
    %1 = vector.shape_cast %0 : vector<1x32x128xbf16> to vector<32x128xbf16>
    %c0_2 = arith.constant 0 : index
    %c0_3 = arith.constant 0 : index
    %2 = vector.load %arg4[%c0_2, %c0_3] : memref<128x256xbf16, #tpu.memory_space<vmem>>, vector<128x256xbf16>
    %cst = arith.constant dense<0.000000e+00> : vector<32x256xf32>
    %3 = tpu.matmul %1, %2, %cst {dimension_numbers = #tpu.dot_dimension_numbers<[1], [0], [0], [1], [0, 0, 1, 1], [], []>} : vector<32x128xbf16>, vector<128x256xbf16>, vector<32x256xf32> -> vector<32x256xf32>
    %c0_4 = arith.constant 0 : index
    %c0_5 = arith.constant 0 : index
    %c0_6 = arith.constant 0 : index
    %4 = vector.load %arg3[%c0_4, %c0_5, %c0_6] : memref<1x32x128xbf16, #tpu.memory_space<vmem>>, vector<1x32x128xbf16>
    %5 = vector.shape_cast %4 : vector<1x32x128xbf16> to vector<32x128xbf16>
    %c0_7 = arith.constant 0 : index
    %c0_8 = arith.constant 0 : index
    %6 = vector.load %arg5[%c0_7, %c0_8] : memref<128x256xbf16, #tpu.memory_space<vmem>>, vector<128x256xbf16>
    %cst_9 = arith.constant dense<0.000000e+00> : vector<32x256xf32>
    %7 = tpu.matmul %5, %6, %cst_9 {dimension_numbers = #tpu.dot_dimension_numbers<[1], [0], [0], [1], [0, 0, 1, 1], [], []>} : vector<32x128xbf16>, vector<128x256xbf16>, vector<32x256xf32> -> vector<32x256xf32>
    %8 = arith.addf %3, %7 : vector<32x256xf32>
    %cst_10 = arith.constant dense<0.000000e+00> : vector<32xf32>
    %9 = vector.multi_reduction <add>, %8, %cst_10 [1] : vector<32x256xf32> to vector<32xf32>
    %10 = vector.shape_cast %9 : vector<32xf32> to vector<32x1xf32>
    %cst_11 = arith.constant 2.560000e+02 : f32
    %11 = vector.broadcast %cst_11 : f32 to vector<32x1xf32>
    %12 = arith.divf %10, %11 : vector<32x1xf32>
    %13 = vector.broadcast %12 : vector<32x1xf32> to vector<32x256xf32>
    %14 = arith.subf %8, %13 : vector<32x256xf32>
    %15 = arith.mulf %14, %14 : vector<32x256xf32>
    %cst_12 = arith.constant dense<0.000000e+00> : vector<32xf32>
    %16 = vector.multi_reduction <add>, %15, %cst_12 [1] : vector<32x256xf32> to vector<32xf32>
    %17 = vector.shape_cast %16 : vector<32xf32> to vector<32x1xf32>
    %cst_13 = arith.constant 2.560000e+02 : f32
    %18 = vector.broadcast %cst_13 : f32 to vector<32x1xf32>
    %19 = arith.divf %17, %18 : vector<32x1xf32>
    %cst_14 = arith.constant 9.99999997E-7 : f32
    %20 = vector.broadcast %cst_14 : f32 to vector<32x1xf32>
    %21 = arith.addf %19, %20 : vector<32x1xf32>
    %22 = math.rsqrt %21 : vector<32x1xf32>
    %23 = vector.broadcast %22 : vector<32x1xf32> to vector<32x256xf32>
    %24 = arith.mulf %14, %23 : vector<32x256xf32>
    %c0_15 = arith.constant 0 : index
    %c0_16 = arith.constant 0 : index
    %25 = vector.load %arg6[%c0_15, %c0_16] : memref<1x256xf32, #tpu.memory_space<vmem>>, vector<1x256xf32>
    %26 = vector.broadcast %25 : vector<1x256xf32> to vector<32x256xf32>
    %27 = arith.mulf %24, %26 : vector<32x256xf32>
    %c0_17 = arith.constant 0 : index
    %c0_18 = arith.constant 0 : index
    %28 = vector.load %arg7[%c0_17, %c0_18] : memref<1x256xf32, #tpu.memory_space<vmem>>, vector<1x256xf32>
    %29 = vector.broadcast %28 : vector<1x256xf32> to vector<32x256xf32>
    %30 = arith.addf %27, %29 : vector<32x256xf32>
    %31 = arith.truncf %30 : vector<32x256xf32> to vector<32x256xbf16>
    %c0_19 = arith.constant 0 : index
    %c0_20 = arith.constant 0 : index
    %c0_21 = arith.constant 0 : index
    %32 = vector.load %arg8[%c0_19, %c0_20, %c0_21] : memref<1x32x256xbf16, #tpu.memory_space<vmem>>, vector<1x32x256xbf16>
    %33 = vector.shape_cast %32 : vector<1x32x256xbf16> to vector<32x256xbf16>
    %34 = vector.shape_cast %31 : vector<32x256xbf16> to vector<1x32x256xbf16>
    tpu.vector_store %arg8[%c0_19, %c0_20, %c0_21], %34 {strides = array<i32>} : memref<1x32x256xbf16, #tpu.memory_space<vmem>>, vector<1x32x256xbf16>,
    return
  }
  func.func @transform_0(%arg0: i32, %arg1: i32) -> (i32, i32, i32) {
    %c0_i32 = arith.constant 0 : i32
    %c0_i32_0 = arith.constant 0 : i32
    return %arg0, %arg1, %c0_i32 : i32, i32, i32
  }
  func.func @transform_1(%arg0: i32, %arg1: i32) -> (i32, i32, i32) {
    %c0_i32 = arith.constant 0 : i32
    %c0_i32_0 = arith.constant 0 : i32
    return %arg0, %arg1, %c0_i32 : i32, i32, i32
  }
  func.func @transform_2(%arg0: i32, %arg1: i32) -> (i32, i32) {
    %c0_i32 = arith.constant 0 : i32
    %c0_i32_0 = arith.constant 0 : i32
    %c0_i32_1 = arith.constant 0 : i32
    return %c0_i32, %c0_i32_0 : i32, i32
  }
  func.func @transform_3(%arg0: i32, %arg1: i32) -> (i32, i32) {
    %c0_i32 = arith.constant 0 : i32
    %c0_i32_0 = arith.constant 0 : i32
    %c0_i32_1 = arith.constant 0 : i32
    return %c0_i32, %c0_i32_0 : i32, i32
  }
  func.func @transform_4(%arg0: i32, %arg1: i32) -> (i32, i32) {
    %c0_i32 = arith.constant 0 : i32
    %c0_i32_0 = arith.constant 0 : i32
    %c0_i32_1 = arith.constant 0 : i32
    return %c0_i32, %c0_i32_0 : i32, i32
  }
  func.func @transform_5(%arg0: i32, %arg1: i32) -> (i32, i32) {
    %c0_i32 = arith.constant 0 : i32
    %c0_i32_0 = arith.constant 0 : i32
    %c0_i32_1 = arith.constant 0 : i32
    return %c0_i32, %c0_i32_0 : i32, i32
  }
  func.func @transform_6(%arg0: i32, %arg1: i32) -> (i32, i32, i32) {
    %c0_i32 = arith.constant 0 : i32
    %c0_i32_0 = arith.constant 0 : i32
    return %arg0, %arg1, %c0_i32 : i32, i32, i32
  }
}

module attributes {stable_mosaic.version = 11 : i64} {
  func.func @kernel(%arg0: i32, %arg1: i32, %arg2: memref<1x64x256xbf16, #tpu.memory_space<vmem>>, %arg3: memref<9x256x256xbf16, #tpu.memory_space<vmem>>, %arg4: memref<1x256xf32, #tpu.memory_space<vmem>>, %arg5: memref<1x256xf32, #tpu.memory_space<vmem>>, %arg6: memref<1x32x256xf32, #tpu.memory_space<vmem>>, %arg7: memref<80x256xbf16, #tpu.memory_space<vmem>>) attributes {dimension_semantics = [#tpu.dimension_semantics<parallel>, #tpu.dimension_semantics<arbitrary>], iteration_bounds = array<i64: 2, 2>, scalar_prefetch = 0 : i64, scratch_operands = 1 : i64, tpu.core_type = #tpu.core_type<tc>, window_params = [{transform_indices = @transform_0, window_bounds = array<i64: 1, 64, 256>}, {pipeline_mode = #tpu.pipeline_mode<synchronous>, transform_indices = @transform_1, window_bounds = array<i64: 9, 256, 256>}, {pipeline_mode = #tpu.pipeline_mode<synchronous>, transform_indices = @transform_2, window_bounds = array<i64: 1, 256>}, {pipeline_mode = #tpu.pipeline_mode<synchronous>, transform_indices = @transform_3, window_bounds = array<i64: 1, 256>}, {transform_indices = @transform_4, window_bounds = array<i64: 1, 32, 256>}]} {
    %c0_i32 = arith.constant 0 : i32
    %0 = arith.cmpi eq, %arg1, %c0_i32 : i32
    %1 = arith.extui %0 : i1 to i32
    %c0_i32_0 = arith.constant 0 : i32
    %2 = arith.cmpi ne, %1, %c0_i32_0 : i32
    scf.if %2 {
      %cst_49 = arith.constant 0.000000e+00 : bf16
      %106 = vector.broadcast %cst_49 : bf16 to vector<8x256xbf16>
      %c0_50 = arith.constant 0 : index
      %c0_51 = arith.constant 0 : index
      %107 = vector.load %arg7[%c0_50, %c0_51] : memref<80x256xbf16, #tpu.memory_space<vmem>>, vector<8x256xbf16>
      tpu.vector_store %arg7[%c0_50, %c0_51], %106 {strides = array<i32>} : memref<80x256xbf16, #tpu.memory_space<vmem>>, vector<8x256xbf16>,
      %cst_52 = arith.constant 0.000000e+00 : bf16
      %108 = vector.broadcast %cst_52 : bf16 to vector<8x256xbf16>
      %c72 = arith.constant 72 : index
      %c0_53 = arith.constant 0 : index
      %109 = vector.load %arg7[%c72, %c0_53] : memref<80x256xbf16, #tpu.memory_space<vmem>>, vector<8x256xbf16>
      tpu.vector_store %arg7[%c72, %c0_53], %108 {strides = array<i32>} : memref<80x256xbf16, #tpu.memory_space<vmem>>, vector<8x256xbf16>,
      %c0_54 = arith.constant 0 : index
      %c0_55 = arith.constant 0 : index
      %c0_56 = arith.constant 0 : index
      %110 = vector.load %arg2[%c0_54, %c0_55, %c0_56] : memref<1x64x256xbf16, #tpu.memory_space<vmem>>, vector<1x64x256xbf16>
      %111 = vector.shape_cast %110 : vector<1x64x256xbf16> to vector<64x256xbf16>
      %c8_57 = arith.constant 8 : index
      %c0_58 = arith.constant 0 : index
      %112 = vector.load %arg7[%c8_57, %c0_58] : memref<80x256xbf16, #tpu.memory_space<vmem>>, vector<64x256xbf16>
      tpu.vector_store %arg7[%c8_57, %c0_58], %111 {strides = array<i32>} : memref<80x256xbf16, #tpu.memory_space<vmem>>, vector<64x256xbf16>,
    } else {
    }
    %c32_i32 = arith.constant 32 : i32
    %3 = arith.muli %arg1, %c32_i32 : i32
    %4 = tpu.assume_multiple %3, 8 : i32
    %5 = arith.index_cast %4 : i32 to index
    %c0 = arith.constant 0 : index
    %6 = vector.load %arg7[%5, %c0] : memref<80x256xbf16, #tpu.memory_space<vmem>>, vector<32x256xbf16>
    %c8_i32 = arith.constant 8 : i32
    %7 = arith.addi %4, %c8_i32 : i32
    %8 = tpu.assume_multiple %7, 8 : i32
    %9 = arith.index_cast %8 : i32 to index
    %c0_1 = arith.constant 0 : index
    %10 = vector.load %arg7[%9, %c0_1] : memref<80x256xbf16, #tpu.memory_space<vmem>>, vector<32x256xbf16>
    %c16_i32 = arith.constant 16 : i32
    %11 = arith.addi %4, %c16_i32 : i32
    %12 = tpu.assume_multiple %11, 8 : i32
    %13 = arith.index_cast %12 : i32 to index
    %c0_2 = arith.constant 0 : index
    %14 = vector.load %arg7[%13, %c0_2] : memref<80x256xbf16, #tpu.memory_space<vmem>>, vector<32x256xbf16>
    %15 = tpu.iota {dimensions = array<i32: 0>} : vector<32x1xi32>
    %c8_i32_3 = arith.constant 8 : i32
    %c0_i32_4 = arith.constant 0 : i32
    %16 = arith.cmpi eq, %c8_i32_3, %c0_i32_4 : i32
    %c1_i32 = arith.constant 1 : i32
    %17 = arith.select %16, %c1_i32, %c8_i32_3 : i32
    %18 = vector.broadcast %17 : i32 to vector<32x1xi32>
    %19 = arith.remsi %15, %18 : vector<32x1xi32>
    %c0_i32_5 = arith.constant 0 : i32
    %20 = vector.broadcast %c0_i32_5 : i32 to vector<32x1xi32>
    %21 = arith.cmpi ne, %19, %20 : vector<32x1xi32>
    %c0_i32_6 = arith.constant 0 : i32
    %22 = vector.broadcast %c0_i32_6 : i32 to vector<32x1xi32>
    %23 = arith.cmpi slt, %19, %22 : vector<32x1xi32>
    %c0_i32_7 = arith.constant 0 : i32
    %24 = arith.cmpi slt, %17, %c0_i32_7 : i32
    %25 = vector.broadcast %24 : i1 to vector<32x1xi1>
    %26 = vector.broadcast %25 : vector<32x1xi1> to vector<32x1xi1>
    %27 = arith.xori %23, %26 : vector<32x1xi1>
    %28 = arith.andi %27, %21 : vector<32x1xi1>
    %29 = vector.broadcast %17 : i32 to vector<32x1xi32>
    %30 = arith.addi %19, %29 : vector<32x1xi32>
    %31 = arith.select %28, %30, %19 : vector<32x1xi1>, vector<32x1xi32>
    %c0_i32_8 = arith.constant 0 : i32
    %32 = vector.broadcast %c0_i32_8 : i32 to vector<32x1xi32>
    %33 = arith.cmpi ne, %31, %32 : vector<32x1xi32>
    %34 = arith.extui %33 : vector<32x1xi1> to vector<32x1xi32>
    %35 = arith.sitofp %34 : vector<32x1xi32> to vector<32x1xf32>
    %c7_i32 = arith.constant 7 : i32
    %36 = vector.broadcast %c7_i32 : i32 to vector<32x1xi32>
    %37 = arith.cmpi ne, %31, %36 : vector<32x1xi32>
    %38 = arith.extui %37 : vector<32x1xi1> to vector<32x1xi32>
    %39 = arith.sitofp %38 : vector<32x1xi32> to vector<32x1xf32>
    %c1 = arith.constant 1 : index
    %c0_9 = arith.constant 0 : index
    %c0_10 = arith.constant 0 : index
    %40 = vector.load %arg3[%c1, %c0_9, %c0_10] : memref<9x256x256xbf16, #tpu.memory_space<vmem>>, vector<1x256x256xbf16>
    %41 = vector.shape_cast %40 : vector<1x256x256xbf16> to vector<256x256xbf16>
    %cst = arith.constant dense<0.000000e+00> : vector<32x256xf32>
    %42 = tpu.matmul %6, %41, %cst {dimension_numbers = #tpu.dot_dimension_numbers<[1], [0], [0], [1], [0, 0, 1, 1], [], []>} : vector<32x256xbf16>, vector<256x256xbf16>, vector<32x256xf32> -> vector<32x256xf32>
    %c4 = arith.constant 4 : index
    %c0_11 = arith.constant 0 : index
    %c0_12 = arith.constant 0 : index
    %43 = vector.load %arg3[%c4, %c0_11, %c0_12] : memref<9x256x256xbf16, #tpu.memory_space<vmem>>, vector<1x256x256xbf16>
    %44 = vector.shape_cast %43 : vector<1x256x256xbf16> to vector<256x256xbf16>
    %cst_13 = arith.constant dense<0.000000e+00> : vector<32x256xf32>
    %45 = tpu.matmul %10, %44, %cst_13 {dimension_numbers = #tpu.dot_dimension_numbers<[1], [0], [0], [1], [0, 0, 1, 1], [], []>} : vector<32x256xbf16>, vector<256x256xbf16>, vector<32x256xf32> -> vector<32x256xf32>
    %46 = arith.addf %42, %45 : vector<32x256xf32>
    %c7 = arith.constant 7 : index
    %c0_14 = arith.constant 0 : index
    %c0_15 = arith.constant 0 : index
    %47 = vector.load %arg3[%c7, %c0_14, %c0_15] : memref<9x256x256xbf16, #tpu.memory_space<vmem>>, vector<1x256x256xbf16>
    %48 = vector.shape_cast %47 : vector<1x256x256xbf16> to vector<256x256xbf16>
    %cst_16 = arith.constant dense<0.000000e+00> : vector<32x256xf32>
    %49 = tpu.matmul %14, %48, %cst_16 {dimension_numbers = #tpu.dot_dimension_numbers<[1], [0], [0], [1], [0, 0, 1, 1], [], []>} : vector<32x256xbf16>, vector<256x256xbf16>, vector<32x256xf32> -> vector<32x256xf32>
    %50 = arith.addf %46, %49 : vector<32x256xf32>
    %c0_17 = arith.constant 0 : index
    %c0_18 = arith.constant 0 : index
    %c0_19 = arith.constant 0 : index
    %51 = vector.load %arg3[%c0_17, %c0_18, %c0_19] : memref<9x256x256xbf16, #tpu.memory_space<vmem>>, vector<1x256x256xbf16>
    %52 = vector.shape_cast %51 : vector<1x256x256xbf16> to vector<256x256xbf16>
    %cst_20 = arith.constant dense<0.000000e+00> : vector<32x256xf32>
    %53 = tpu.matmul %6, %52, %cst_20 {dimension_numbers = #tpu.dot_dimension_numbers<[1], [0], [0], [1], [0, 0, 1, 1], [], []>} : vector<32x256xbf16>, vector<256x256xbf16>, vector<32x256xf32> -> vector<32x256xf32>
    %c3 = arith.constant 3 : index
    %c0_21 = arith.constant 0 : index
    %c0_22 = arith.constant 0 : index
    %54 = vector.load %arg3[%c3, %c0_21, %c0_22] : memref<9x256x256xbf16, #tpu.memory_space<vmem>>, vector<1x256x256xbf16>
    %55 = vector.shape_cast %54 : vector<1x256x256xbf16> to vector<256x256xbf16>
    %cst_23 = arith.constant dense<0.000000e+00> : vector<32x256xf32>
    %56 = tpu.matmul %10, %55, %cst_23 {dimension_numbers = #tpu.dot_dimension_numbers<[1], [0], [0], [1], [0, 0, 1, 1], [], []>} : vector<32x256xbf16>, vector<256x256xbf16>, vector<32x256xf32> -> vector<32x256xf32>
    %57 = arith.addf %53, %56 : vector<32x256xf32>
    %c6 = arith.constant 6 : index
    %c0_24 = arith.constant 0 : index
    %c0_25 = arith.constant 0 : index
    %58 = vector.load %arg3[%c6, %c0_24, %c0_25] : memref<9x256x256xbf16, #tpu.memory_space<vmem>>, vector<1x256x256xbf16>
    %59 = vector.shape_cast %58 : vector<1x256x256xbf16> to vector<256x256xbf16>
    %cst_26 = arith.constant dense<0.000000e+00> : vector<32x256xf32>
    %60 = tpu.matmul %14, %59, %cst_26 {dimension_numbers = #tpu.dot_dimension_numbers<[1], [0], [0], [1], [0, 0, 1, 1], [], []>} : vector<32x256xbf16>, vector<256x256xbf16>, vector<32x256xf32> -> vector<32x256xf32>
    %61 = arith.addf %57, %60 : vector<32x256xf32>
    %c1_i32_27 = arith.constant 1 : i32
    %62 = tpu.dynamic_rotate %61 by %c1_i32_27 dim 0 : vector<32x256xf32>, i32 -> vector<32x256xf32>
    %63 = vector.broadcast %35 : vector<32x1xf32> to vector<32x256xf32>
    %64 = arith.mulf %63, %62 : vector<32x256xf32>
    %65 = arith.addf %50, %64 : vector<32x256xf32>
    %c2 = arith.constant 2 : index
    %c0_28 = arith.constant 0 : index
    %c0_29 = arith.constant 0 : index
    %66 = vector.load %arg3[%c2, %c0_28, %c0_29] : memref<9x256x256xbf16, #tpu.memory_space<vmem>>, vector<1x256x256xbf16>
    %67 = vector.shape_cast %66 : vector<1x256x256xbf16> to vector<256x256xbf16>
    %cst_30 = arith.constant dense<0.000000e+00> : vector<32x256xf32>
    %68 = tpu.matmul %6, %67, %cst_30 {dimension_numbers = #tpu.dot_dimension_numbers<[1], [0], [0], [1], [0, 0, 1, 1], [], []>} : vector<32x256xbf16>, vector<256x256xbf16>, vector<32x256xf32> -> vector<32x256xf32>
    %c5 = arith.constant 5 : index
    %c0_31 = arith.constant 0 : index
    %c0_32 = arith.constant 0 : index
    %69 = vector.load %arg3[%c5, %c0_31, %c0_32] : memref<9x256x256xbf16, #tpu.memory_space<vmem>>, vector<1x256x256xbf16>
    %70 = vector.shape_cast %69 : vector<1x256x256xbf16> to vector<256x256xbf16>
    %cst_33 = arith.constant dense<0.000000e+00> : vector<32x256xf32>
    %71 = tpu.matmul %10, %70, %cst_33 {dimension_numbers = #tpu.dot_dimension_numbers<[1], [0], [0], [1], [0, 0, 1, 1], [], []>} : vector<32x256xbf16>, vector<256x256xbf16>, vector<32x256xf32> -> vector<32x256xf32>
    %72 = arith.addf %68, %71 : vector<32x256xf32>
    %c8 = arith.constant 8 : index
    %c0_34 = arith.constant 0 : index
    %c0_35 = arith.constant 0 : index
    %73 = vector.load %arg3[%c8, %c0_34, %c0_35] : memref<9x256x256xbf16, #tpu.memory_space<vmem>>, vector<1x256x256xbf16>
    %74 = vector.shape_cast %73 : vector<1x256x256xbf16> to vector<256x256xbf16>
    %cst_36 = arith.constant dense<0.000000e+00> : vector<32x256xf32>
    %75 = tpu.matmul %14, %74, %cst_36 {dimension_numbers = #tpu.dot_dimension_numbers<[1], [0], [0], [1], [0, 0, 1, 1], [], []>} : vector<32x256xbf16>, vector<256x256xbf16>, vector<32x256xf32> -> vector<32x256xf32>
    %76 = arith.addf %72, %75 : vector<32x256xf32>
    %c31_i32 = arith.constant 31 : i32
    %77 = tpu.dynamic_rotate %76 by %c31_i32 dim 0 : vector<32x256xf32>, i32 -> vector<32x256xf32>
    %78 = vector.broadcast %39 : vector<32x1xf32> to vector<32x256xf32>
    %79 = arith.mulf %78, %77 : vector<32x256xf32>
    %80 = arith.addf %65, %79 : vector<32x256xf32>
    %cst_37 = arith.constant dense<0.000000e+00> : vector<32xf32>
    %81 = vector.multi_reduction <add>, %80, %cst_37 [1] : vector<32x256xf32> to vector<32xf32>
    %82 = vector.shape_cast %81 : vector<32xf32> to vector<32x1xf32>
    %cst_38 = arith.constant 2.560000e+02 : f32
    %83 = vector.broadcast %cst_38 : f32 to vector<32x1xf32>
    %84 = arith.divf %82, %83 : vector<32x1xf32>
    %85 = vector.broadcast %84 : vector<32x1xf32> to vector<32x256xf32>
    %86 = arith.subf %80, %85 : vector<32x256xf32>
    %87 = arith.mulf %86, %86 : vector<32x256xf32>
    %cst_39 = arith.constant dense<0.000000e+00> : vector<32xf32>
    %88 = vector.multi_reduction <add>, %87, %cst_39 [1] : vector<32x256xf32> to vector<32xf32>
    %89 = vector.shape_cast %88 : vector<32xf32> to vector<32x1xf32>
    %cst_40 = arith.constant 2.560000e+02 : f32
    %90 = vector.broadcast %cst_40 : f32 to vector<32x1xf32>
    %91 = arith.divf %89, %90 : vector<32x1xf32>
    %cst_41 = arith.constant 9.99999997E-7 : f32
    %92 = vector.broadcast %cst_41 : f32 to vector<32x1xf32>
    %93 = arith.addf %91, %92 : vector<32x1xf32>
    %94 = math.rsqrt %93 : vector<32x1xf32>
    %95 = vector.broadcast %94 : vector<32x1xf32> to vector<32x256xf32>
    %96 = arith.mulf %86, %95 : vector<32x256xf32>
    %c0_42 = arith.constant 0 : index
    %c0_43 = arith.constant 0 : index
    %97 = vector.load %arg4[%c0_42, %c0_43] : memref<1x256xf32, #tpu.memory_space<vmem>>, vector<1x256xf32>
    %98 = vector.broadcast %97 : vector<1x256xf32> to vector<32x256xf32>
    %99 = arith.mulf %96, %98 : vector<32x256xf32>
    %c0_44 = arith.constant 0 : index
    %c0_45 = arith.constant 0 : index
    %100 = vector.load %arg5[%c0_44, %c0_45] : memref<1x256xf32, #tpu.memory_space<vmem>>, vector<1x256xf32>
    %101 = vector.broadcast %100 : vector<1x256xf32> to vector<32x256xf32>
    %102 = arith.addf %99, %101 : vector<32x256xf32>
    %c0_46 = arith.constant 0 : index
    %c0_47 = arith.constant 0 : index
    %c0_48 = arith.constant 0 : index
    %103 = vector.load %arg6[%c0_46, %c0_47, %c0_48] : memref<1x32x256xf32, #tpu.memory_space<vmem>>, vector<1x32x256xf32>
    %104 = vector.shape_cast %103 : vector<1x32x256xf32> to vector<32x256xf32>
    %105 = vector.shape_cast %102 : vector<32x256xf32> to vector<1x32x256xf32>
    tpu.vector_store %arg6[%c0_46, %c0_47, %c0_48], %105 {strides = array<i32>} : memref<1x32x256xf32, #tpu.memory_space<vmem>>, vector<1x32x256xf32>,
    return
  }
  func.func @transform_0(%arg0: i32, %arg1: i32) -> (i32, i32, i32) {
    %c0_i32 = arith.constant 0 : i32
    %c0_i32_0 = arith.constant 0 : i32
    %c0_i32_1 = arith.constant 0 : i32
    return %arg0, %c0_i32, %c0_i32_0 : i32, i32, i32
  }
  func.func @transform_1(%arg0: i32, %arg1: i32) -> (i32, i32, i32) {
    %c0_i32 = arith.constant 0 : i32
    %c0_i32_0 = arith.constant 0 : i32
    %c0_i32_1 = arith.constant 0 : i32
    %c0_i32_2 = arith.constant 0 : i32
    return %c0_i32, %c0_i32_0, %c0_i32_1 : i32, i32, i32
  }
  func.func @transform_2(%arg0: i32, %arg1: i32) -> (i32, i32) {
    %c0_i32 = arith.constant 0 : i32
    %c0_i32_0 = arith.constant 0 : i32
    %c0_i32_1 = arith.constant 0 : i32
    return %c0_i32, %c0_i32_0 : i32, i32
  }
  func.func @transform_3(%arg0: i32, %arg1: i32) -> (i32, i32) {
    %c0_i32 = arith.constant 0 : i32
    %c0_i32_0 = arith.constant 0 : i32
    %c0_i32_1 = arith.constant 0 : i32
    return %c0_i32, %c0_i32_0 : i32, i32
  }
  func.func @transform_4(%arg0: i32, %arg1: i32) -> (i32, i32, i32) {
    %c0_i32 = arith.constant 0 : i32
    %c0_i32_0 = arith.constant 0 : i32
    return %arg0, %arg1, %c0_i32 : i32, i32, i32
  }
}

</mosaic_0001>

<llo_original>
// kernel: histosam_forward.2
$region0: #{histosam_forward.2}
  #allocation0 [shape = 'u32[]', space=smem, size = 0x4, offset = 0x4, fixed_abs, tag = 'smem constant byte address 0x4 - core index']
  #allocation1 [shape = 'u32[72,128]{1,0:T(1,128)}', space=vmem, size = 0x9000, scoped, tag = 'internal scratch']
  %s0 = inlined_call_operand.vmem [shape: bf16[2,64,128], index: 0, kind: input, shape index: {}]
  %s1 = inlined_call_operand.vmem [shape: bf16[2,64,128], index: 1, kind: input, shape index: {}]
  %s2 = inlined_call_operand.vmem [shape: bf16[128,256], index: 2, kind: input, shape index: {}]
  %s3 = inlined_call_operand.vmem [shape: bf16[128,256], index: 3, kind: input, shape index: {}]
  %s4 = inlined_call_operand.hbm [shape: f32[1,256], index: 4, kind: input, shape index: {}]
  %s5 = inlined_call_operand.hbm [shape: f32[1,256], index: 5, kind: input, shape index: {}]
  %s6 = inlined_call_operand.vmem [shape: bf16[2,64,256], index: 6, kind: output, shape index: {}]
  %s7 = sld [smem:[#allocation0]]
  $region65: #{histosam_forward.2} parent=0
    _
  %s9 = ssub.s32 1, %s7
  %s10 = scalar_select 0, %s9, %s7
  $region1: #{histosam_forward.2} parent=0
    #allocation2 [shape = 'u8[1024]{0}', space=vmem, size = 0x400, scoped, tag = 'input window, operand 4, single buffered']
    #allocation3 [shape = 's32[2]{0}', space=sflag, size = 0x8, scoped, tag = 'scoped memory for histosam_forward.2']
    #allocation4 [shape = 'u8[1024]{0}', space=vmem, size = 0x400, scoped, tag = 'input window, operand 5, single buffered']
    #allocation5 [shape = 's32[1]{0}', space=sflag, size = 0x4, scoped, tag = 'scoped memory for histosam_forward.2']
    %11 = vsyncpa [#allocation3], 0
    %12 = vsyncpa [#allocation5], 0
    loop: start=0, step=1, limit=6
    $region2: #{histosam_forward.2} parent=1 // loop_pre_header
      _
    $region3: #{histosam_forward.2} parent=1 // loop_header
      %s14 = sphi 0, %s18
      %p15 = scmp.ge.s32.totalorder %s14, 6
      %s21 = sphi 0, %s33
      %s22 = sphi 0, %s29
      %s23 = sphi 0, %s21
      %s24 = sphi 0, %s22
      %s25 = sphi 0, %s23
      %s26 = sphi 0, %s24
      %s38 = sphi 0, %s40
      %s41 = sphi 0, %s38
      %s42 = sphi 0, %s41
      %s58 = sphi 0, %s42
      %s66 = sphi 0, %s68
      %s69 = sphi 0, %s66
      %s70 = sphi 0, %s69
      %s86 = sphi 0, %s70
      %s90 = sphi 0, %s90
      %s92 = sphi 0, %s90
      %s93 = sphi 0, %s92
      %s107 = sphi 0, %s93
      %s111 = sphi 0, %s111
      %s113 = sphi 0, %s111
      %s114 = sphi 0, %s113
      %s128 = sphi 0, %s114
      %s132 = sphi 0, %s132
      %s134 = sphi 0, %s132
      %s135 = sphi 0, %s134
      %s149 = sphi 0, %s135
      %s153 = sphi 0, %s153
      %s155 = sphi 0, %s153
      %s156 = sphi 0, %s155
      %s170 = sphi 0, %s156
      %s178 = sphi 0, %s180
      %s181 = sphi 0, %s178
      %s182 = sphi 0, %s181
      %s198 = sphi 0, %s182
    $region4: #{histosam_forward.2} parent=1 // loop_header_branch
      %17 = sbr.rel (%p15) target = $region8
    $region5: #{histosam_forward.2} parent=1 // loop_body
      %s19 = ssub.s32 %s14, 1
      %s20 = ssub.s32 %s14, 2
      %s27 = sadd.s32 1, %s22
      %p28 = scmp.ge.s32.totalorder %s27, 2
      %s29 = scalar_select %p28, 0, %s27
      %s30 = sadd.s32 1, %s21
      %s31 = scalar_select %p28, %s30, %s21
      %p32 = scmp.ge.s32.totalorder %s31, 2
      %s33 = scalar_select %p32, 0, %s31
      %s34 = ssub.s32 %s21, %s33
      %s35 = ssub.s32 %s22, %s29
      %s36 = sor.u32 %s34, %s35
      %p37 = scmp.eq.s32.totalorder %s36, 0
      %s39 = sadd.s32 %s38, 1
      %s40 = scalar_select %p37, %s38, %s39
      %p43 = pneg %p37
      %p44 = scmp.eq.s32.totalorder %s14, 3
      %p45 = por %p43, %p44
      %p46 = scmp.ne.s32.totalorder %s38, %s41
      %p47 = scmp.eq.s32.totalorder %s14, 0
      %p48 = por %p46, %p47
      %p49 = scmp.ne.s32.totalorder %s38, %s41
      %p50 = scmp.eq.s32.totalorder %s19, 3
      %p51 = por %p49, %p50
      %p52 = scmp.ne.s32.totalorder %s41, %s42
      %p53 = scmp.eq.s32.totalorder %s19, 0
      %p54 = por %p52, %p53
      %p55 = scmp.ne.s32.totalorder %s41, %s42
      %p56 = scmp.eq.s32.totalorder %s20, 3
      %p57 = por %p55, %p56
      %p59 = scmp.ne.s32.totalorder %s42, %s58
      %p60 = scmp.eq.s32.totalorder %s20, 0
      %p61 = por %p59, %p60
      %s62 = ssub.s32 %s21, %s33
      %s63 = ssub.s32 %s22, %s29
      %s64 = sor.u32 %s62, %s63
      %p65 = scmp.eq.s32.totalorder %s64, 0
      %s67 = sadd.s32 %s66, 1
      %s68 = scalar_select %p65, %s66, %s67
      %p71 = pneg %p65
      %p72 = scmp.eq.s32.totalorder %s14, 3
      %p73 = por %p71, %p72
      %p74 = scmp.ne.s32.totalorder %s66, %s69
      %p75 = scmp.eq.s32.totalorder %s14, 0
      %p76 = por %p74, %p75
      %p77 = scmp.ne.s32.totalorder %s66, %s69
      %p78 = scmp.eq.s32.totalorder %s19, 3
      %p79 = por %p77, %p78
      %p80 = scmp.ne.s32.totalorder %s69, %s70
      %p81 = scmp.eq.s32.totalorder %s19, 0
      %p82 = por %p80, %p81
      %p83 = scmp.ne.s32.totalorder %s69, %s70
      %p84 = scmp.eq.s32.totalorder %s20, 3
      %p85 = por %p83, %p84
      %p87 = scmp.ne.s32.totalorder %s70, %s86
      %p88 = scmp.eq.s32.totalorder %s20, 0
      %p89 = por %p87, %p88
      %s91 = sadd.s32 %s90, 1
      %p94 = scmp.eq.s32.totalorder %s14, 3
      %p95 = scmp.ne.s32.totalorder %s90, %s92
      %p96 = scmp.eq.s32.totalorder %s14, 0
      %p97 = por %p95, %p96
      %p98 = scmp.ne.s32.totalorder %s90, %s92
      %p99 = scmp.eq.s32.totalorder %s19, 3
      %p100 = por %p98, %p99
      %p101 = scmp.ne.s32.totalorder %s92, %s93
      %p102 = scmp.eq.s32.totalorder %s19, 0
      %p103 = por %p101, %p102
      %p104 = scmp.ne.s32.totalorder %s92, %s93
      %p105 = scmp.eq.s32.totalorder %s20, 3
      %p106 = por %p104, %p105
      %p108 = scmp.ne.s32.totalorder %s93, %s107
      %p109 = scmp.eq.s32.totalorder %s20, 0
      %p110 = por %p108, %p109
      %s112 = sadd.s32 %s111, 1
      %p115 = scmp.eq.s32.totalorder %s14, 3
      %p116 = scmp.ne.s32.totalorder %s111, %s113
      %p117 = scmp.eq.s32.totalorder %s14, 0
      %p118 = por %p116, %p117
      %p119 = scmp.ne.s32.totalorder %s111, %s113
      %p120 = scmp.eq.s32.totalorder %s19, 3
      %p121 = por %p119, %p120
      %p122 = scmp.ne.s32.totalorder %s113, %s114
      %p123 = scmp.eq.s32.totalorder %s19, 0
      %p124 = por %p122, %p123
      %p125 = scmp.ne.s32.totalorder %s113, %s114
      %p126 = scmp.eq.s32.totalorder %s20, 3
      %p127 = por %p125, %p126
      %p129 = scmp.ne.s32.totalorder %s114, %s128
      %p130 = scmp.eq.s32.totalorder %s20, 0
      %p131 = por %p129, %p130
      %s133 = sadd.s32 %s132, 1
      %p136 = scmp.eq.s32.totalorder %s14, 3
      %p137 = scmp.ne.s32.totalorder %s132, %s134
      %p138 = scmp.eq.s32.totalorder %s14, 0
      %p139 = por %p137, %p138
      %p140 = scmp.ne.s32.totalorder %s132, %s134
      %p141 = scmp.eq.s32.totalorder %s19, 3
      %p142 = por %p140, %p141
      %p143 = scmp.ne.s32.totalorder %s134, %s135
      %p144 = scmp.eq.s32.totalorder %s19, 0
      %p145 = por %p143, %p144
      %p146 = scmp.ne.s32.totalorder %s134, %s135
      %p147 = scmp.eq.s32.totalorder %s20, 3
      %p148 = por %p146, %p147
      %p150 = scmp.ne.s32.totalorder %s135, %s149
      %p151 = scmp.eq.s32.totalorder %s20, 0
      %p152 = por %p150, %p151
      %s154 = sadd.s32 %s153, 1
      %p157 = scmp.eq.s32.totalorder %s14, 3
      %p158 = scmp.ne.s32.totalorder %s153, %s155
      %p159 = scmp.eq.s32.totalorder %s14, 0
      %p160 = por %p158, %p159
      %p161 = scmp.ne.s32.totalorder %s153, %s155
      %p162 = scmp.eq.s32.totalorder %s19, 3
      %p163 = por %p161, %p162
      %p164 = scmp.ne.s32.totalorder %s155, %s156
      %p165 = scmp.eq.s32.totalorder %s19, 0
      %p166 = por %p164, %p165
      %p167 = scmp.ne.s32.totalorder %s155, %s156
      %p168 = scmp.eq.s32.totalorder %s20, 3
      %p169 = por %p167, %p168
      %p171 = scmp.ne.s32.totalorder %s156, %s170
      %p172 = scmp.eq.s32.totalorder %s20, 0
      %p173 = por %p171, %p172
      %s174 = ssub.s32 %s21, %s33
      %s175 = ssub.s32 %s22, %s29
      %s176 = sor.u32 %s174, %s175
      %p177 = scmp.eq.s32.totalorder %s176, 0
      %s179 = sadd.s32 %s178, 1
      %s180 = scalar_select %p177, %s178, %s179
      %p183 = pneg %p177
      %p184 = scmp.eq.s32.totalorder %s14, 3
      %p185 = por %p183, %p184
      %p186 = scmp.ne.s32.totalorder %s178, %s181
      %p187 = scmp.eq.s32.totalorder %s14, 0
      %p188 = por %p186, %p187
      %p189 = scmp.ne.s32.totalorder %s178, %s181
      %p190 = scmp.eq.s32.totalorder %s19, 3
      %p191 = por %p189, %p190
      %p192 = scmp.ne.s32.totalorder %s181, %s182
      %p193 = scmp.eq.s32.totalorder %s19, 0
      %p194 = por %p192, %p193
      %p195 = scmp.ne.s32.totalorder %s181, %s182
      %p196 = scmp.eq.s32.totalorder %s20, 3
      %p197 = por %p195, %p196
      %p199 = scmp.ne.s32.totalorder %s182, %s198
      %p200 = scmp.eq.s32.totalorder %s20, 0
      %p201 = por %p199, %p200
      %p202 = scmp.le.s32.totalorder 1, %s14
      %p203 = scmp.lt.s32.totalorder %s14, 5
      %p204 = pnand %p202, %p203
      %p205 = pneg %p204
      // Predicated region
      $region9: #{histosam_forward.2} parent=5 // pred_check
        _
      $region10: #{histosam_forward.2} parent=5 // pred_check_branch
        %207 = sbr.rel (%p204) target = $region12
      $region11: #{histosam_forward.2} parent=5 // pred_region
        %s208 = ssub.s32 %s14, 1
        // Predicated region
        $region13: #{histosam_forward.2} parent=11 // pred_check
          %p209 = pneg %p103
        $region14: #{histosam_forward.2} parent=11 // pred_check_branch
          %211 = sbr.rel (%p209) target = $region16
        $region15: #{histosam_forward.2} parent=11 // pred_region
          _
        $region16: #{histosam_forward.2} parent=11 // pred_fallthru
          _
        // Predicated region
        $region17: #{histosam_forward.2} parent=11 // pred_check
          %p212 = pneg %p124
        $region18: #{histosam_forward.2} parent=11 // pred_check_branch
          %214 = sbr.rel (%p212) target = $region20
        $region19: #{histosam_forward.2} parent=11 // pred_region
          _
        $region20: #{histosam_forward.2} parent=11 // pred_fallthru
          _
        // Predicated region
        $region21: #{histosam_forward.2} parent=11 // pred_check
          %p215 = pneg %p145
        $region22: #{histosam_forward.2} parent=11 // pred_check_branch
          %217 = sbr.rel (%p215) target = $region24
        $region23: #{histosam_forward.2} parent=11 // pred_region
          %219 = vsyncadd [#allocation3], 0
          %s221 = sshll.u32 %s4, 4
          %s222 = int_to_ptr.hbm [resolvable:$true] %s221
          %s223 = sshll.u32 [#allocation2], 4
          %s224 = int_to_ptr.vmem [resolvable:$true] %s223
          %226 = dma.hbm_to_vmem [thread:$0]  %s222, 32, %s224, [#allocation3]
        $region24: #{histosam_forward.2} parent=11 // pred_fallthru
          _
        // Predicated region
        $region25: #{histosam_forward.2} parent=11 // pred_check
          %p227 = pneg %p166
        $region26: #{histosam_forward.2} parent=11 // pred_check_branch
          %229 = sbr.rel (%p227) target = $region28
        $region27: #{histosam_forward.2} parent=11 // pred_region
          %231 = vsyncadd [#allocation5], 0
          %s233 = sshll.u32 %s5, 4
          %s234 = int_to_ptr.hbm [resolvable:$true] %s233
          %s235 = sshll.u32 [#allocation4], 4
          %s236 = int_to_ptr.vmem [resolvable:$true] %s235
          %238 = dma.hbm_to_vmem [thread:$0]  %s234, 32, %s236, [#allocation5]
        $region28: #{histosam_forward.2} parent=11 // pred_fallthru
          _
      $region12: #{histosam_forward.2} parent=5 // pred_fallthru
        _
      %p239 = scmp.lt.s32.totalorder %s14, 4
      // Predicated region
      $region29: #{histosam_forward.2} parent=5 // pred_check
        %p240 = pneg %p239
      $region30: #{histosam_forward.2} parent=5 // pred_check_branch
        %242 = sbr.rel (%p240) target = $region32
      $region31: #{histosam_forward.2} parent=5 // pred_region
        // Predicated region
        $region33: #{histosam_forward.2} parent=31 // pred_check
          %p243 = pneg %p48
        $region34: #{histosam_forward.2} parent=31 // pred_check_branch
          %245 = sbr.rel (%p243) target = $region36
        $region35: #{histosam_forward.2} parent=31 // pred_region
          %s246 = smul.u32 4, %s22
          %p247 = scmp.lt.s32.totalorder %s21, 1
          %s248 = scalar_select %p247, %s21, 1
          %p249 = scmp.lt.s32.totalorder %s246, 7
          %s250 = scalar_select %p249, %s246, 7
          %s251 = smul.addr %s248, 8
          %s252 = sadd.s32 %s250, %s251
          %s253 = smul.addr %s252, 4
          %s254 = scalar_lea.vmem %s0, %s253
          %s255 = smul.u32 4, %s22
        $region36: #{histosam_forward.2} parent=31 // pred_fallthru
          _
        // Predicated region
        $region37: #{histosam_forward.2} parent=31 // pred_check
          %p256 = pneg %p76
        $region38: #{histosam_forward.2} parent=31 // pred_check_branch
          %258 = sbr.rel (%p256) target = $region40
        $region39: #{histosam_forward.2} parent=31 // pred_region
          %s259 = smul.u32 4, %s22
          %p260 = scmp.lt.s32.totalorder %s21, 1
          %s261 = scalar_select %p260, %s21, 1
          %p262 = scmp.lt.s32.totalorder %s259, 7
          %s263 = scalar_select %p262, %s259, 7
          %s264 = smul.addr %s261, 8
          %s265 = sadd.s32 %s263, %s264
          %s266 = smul.addr %s265, 4
          %s267 = scalar_lea.vmem %s1, %s266
          %s268 = smul.u32 4, %s22
        $region40: #{histosam_forward.2} parent=31 // pred_fallthru
          _
      $region32: #{histosam_forward.2} parent=5 // pred_fallthru
        _
      %p269 = scmp.le.s32.totalorder 1, %s14
      %p270 = scmp.lt.s32.totalorder %s14, 5
      %p271 = pnand %p269, %p270
      %p272 = pneg %p271
      // Predicated region
      $region41: #{histosam_forward.2} parent=5 // pred_check
        _
      $region42: #{histosam_forward.2} parent=5 // pred_check_branch
        %274 = sbr.rel (%p271) target = $region44
      $region43: #{histosam_forward.2} parent=5 // pred_region
        %s275 = ssub.s32 %s14, 1
        // Predicated region
        $region45: #{histosam_forward.2} parent=43 // pred_check
          %p276 = pneg %p145
        $region46: #{histosam_forward.2} parent=43 // pred_check_branch
          %278 = sbr.rel (%p276) target = $region48
        $region47: #{histosam_forward.2} parent=43 // pred_region
          %280 = dma.done [#allocation3], 32
        $region48: #{histosam_forward.2} parent=43 // pred_fallthru
          _
        // Predicated region
        $region49: #{histosam_forward.2} parent=43 // pred_check
          %p281 = pneg %p166
        $region50: #{histosam_forward.2} parent=43 // pred_check_branch
          %283 = sbr.rel (%p281) target = $region52
        $region51: #{histosam_forward.2} parent=43 // pred_region
          %285 = dma.done [#allocation5], 32
        $region52: #{histosam_forward.2} parent=43 // pred_fallthru
          _
        %s286 = smul.u32 4, %s24
        %p287 = scmp.lt.s32.totalorder %s23, 1
        %s288 = scalar_select %p287, %s23, 1
        %p289 = scmp.lt.s32.totalorder %s286, 7
        %s290 = scalar_select %p289, %s286, 7
        %s291 = smul.addr %s288, 8
        %s292 = sadd.s32 %s290, %s291
        %s293 = smul.addr %s292, 4
        %s294 = scalar_lea.vmem %s0, %s293
        %p295 = pneg %p54
        %p296 = pneg %p51
        %s297 = smul.u32 4, %s24
        %p298 = scmp.lt.s32.totalorder %s23, 1
        %s299 = scalar_select %p298, %s23, 1
        %p300 = scmp.lt.s32.totalorder %s297, 7
        %s301 = scalar_select %p300, %s297, 7
        %s302 = smul.addr %s299, 8
        %s303 = sadd.s32 %s301, %s302
        %s304 = smul.addr %s303, 4
        %s305 = scalar_lea.vmem %s1, %s304
        %p306 = pneg %p82
        %p307 = pneg %p79
        %p308 = pneg %p103
        %p309 = pneg %p100
        %p310 = pneg %p124
        %p311 = pneg %p121
        %p312 = pneg %p145
        %p313 = pneg %p142
        %p314 = pneg %p166
        %p315 = pneg %p163
        %p316 = pneg %p194
        %p317 = pneg %p191
        %s318 = smul.u32 4, %s24
        %p319 = scmp.lt.s32.totalorder %s23, 1
        %s320 = scalar_select %p319, %s23, 1
        %p321 = scmp.lt.s32.totalorder %s318, 7
        %s322 = scalar_select %p321, %s318, 7
        %s323 = smul.addr %s322, 2
        %s324 = smul.addr %s320, 16
        %s325 = sadd.s32 %s323, %s324
        %s326 = smul.addr %s325, 4
        %s327 = scalar_lea.vmem %s6, %s326
        %s328 = smul.u32 4, %s24
        %p329 = scmp.lt.s32.totalorder %s23, 1
        %s330 = scalar_select %p329, %s23, 1
        %p331 = scmp.lt.s32.totalorder %s328, 7
        %s332 = scalar_select %p331, %s328, 7
        %s333 = smul.addr %s330, 8
        %s334 = sadd.s32 %s332, %s333
        %s335 = smul.addr %s334, 4
        %s336 = scalar_lea.vmem %s0, %s335
        %s337 = smul.u32 4, %s24
        %s338 = smul.u32 4, %s24
        %p339 = scmp.lt.s32.totalorder %s23, 1
        %s340 = scalar_select %p339, %s23, 1
        %p341 = scmp.lt.s32.totalorder %s338, 7
        %s342 = scalar_select %p341, %s338, 7
        %s343 = smul.addr %s340, 8
        %s344 = sadd.s32 %s342, %s343
        %s345 = smul.addr %s344, 4
        %s346 = scalar_lea.vmem %s1, %s345
        %s347 = smul.u32 4, %s24
        %s348 = smul.u32 4, %s24
        %p349 = scmp.lt.s32.totalorder %s23, 1
        %s350 = scalar_select %p349, %s23, 1
        %p351 = scmp.lt.s32.totalorder %s348, 7
        %s352 = scalar_select %p351, %s348, 7
        %s353 = smul.addr %s352, 2
        %s354 = smul.addr %s350, 16
        %s355 = sadd.s32 %s353, %s354
        %s356 = smul.addr %s355, 4
        %s357 = scalar_lea.vmem %s6, %s356
        %s358 = smul.u32 4, %s24
        %v359 = vld [vmem:[%s336] sm:$0xf]
        %v360 = vld [vmem:[%s336 + $0x4] sm:$0xf]
        %v361 = vld [vmem:[%s336 + $0x8] sm:$0xf]
        %v362 = vld [vmem:[%s336 + $0xc] sm:$0xf]
        %v363 = vld [vmem:[%s2] sm:$0xff]
        %v364 = vld [vmem:[%s2 + $0x8] sm:$0xff]
        %v365 = vld [vmem:[%s2 + $0x10] sm:$0xff]
        %v366 = vld [vmem:[%s2 + $0x18] sm:$0xff]
        %v367 = vld [vmem:[%s2 + $0x20] sm:$0xff]
        %v368 = vld [vmem:[%s2 + $0x28] sm:$0xff]
        %v369 = vld [vmem:[%s2 + $0x30] sm:$0xff]
        %v370 = vld [vmem:[%s2 + $0x38] sm:$0xff]
        %v371 = vld [vmem:[%s2 + $0x40] sm:$0xff]
        %v372 = vld [vmem:[%s2 + $0x48] sm:$0xff]
        %v373 = vld [vmem:[%s2 + $0x50] sm:$0xff]
        %v374 = vld [vmem:[%s2 + $0x58] sm:$0xff]
        %v375 = vld [vmem:[%s2 + $0x60] sm:$0xff]
        %v376 = vld [vmem:[%s2 + $0x68] sm:$0xff]
        %v377 = vld [vmem:[%s2 + $0x70] sm:$0xff]
        %v378 = vld [vmem:[%s2 + $0x78] sm:$0xff]
        %v379 = vld [vmem:[%s346] sm:$0xf]
        %v380 = vld [vmem:[%s346 + $0x4] sm:$0xf]
        %v381 = vld [vmem:[%s346 + $0x8] sm:$0xf]
        %v382 = vld [vmem:[%s346 + $0xc] sm:$0xf]
        %v383 = vld [vmem:[%s3] sm:$0xff]
        %v384 = vld [vmem:[%s3 + $0x8] sm:$0xff]
        %v385 = vld [vmem:[%s3 + $0x10] sm:$0xff]
        %v386 = vld [vmem:[%s3 + $0x18] sm:$0xff]
        %v387 = vld [vmem:[%s3 + $0x20] sm:$0xff]
        %v388 = vld [vmem:[%s3 + $0x28] sm:$0xff]
        %v389 = vld [vmem:[%s3 + $0x30] sm:$0xff]
        %v390 = vld [vmem:[%s3 + $0x38] sm:$0xff]
        %v391 = vld [vmem:[%s3 + $0x40] sm:$0xff]
        %v392 = vld [vmem:[%s3 + $0x48] sm:$0xff]
        %v393 = vld [vmem:[%s3 + $0x50] sm:$0xff]
        %v394 = vld [vmem:[%s3 + $0x58] sm:$0xff]
        %v395 = vld [vmem:[%s3 + $0x60] sm:$0xff]
        %v396 = vld [vmem:[%s3 + $0x68] sm:$0xff]
        %v397 = vld [vmem:[%s3 + $0x70] sm:$0xff]
        %v398 = vld [vmem:[%s3 + $0x78] sm:$0xff]
        %v403 = vunpack.c.l.b16 %v379
        %v404 = vunpack.c.l.b16 %v380
        %v405 = vunpack.c.l.b16 %v381
        %v406 = vunpack.c.l.b16 %v382
        %v407 = vpack.c.b16 %v404, %v403
        %v408 = vpack.c.b16 %v406, %v405
        %v427 = vunpack.c.l.b16 %v383
        %v428 = vunpack.c.h.b16 %v383
        %v429 = vunpack.c.l.b16 %v384
        %v430 = vunpack.c.h.b16 %v384
        %v431 = vunpack.c.l.b16 %v385
        %v432 = vunpack.c.h.b16 %v385
        %v433 = vunpack.c.l.b16 %v386
        %v434 = vunpack.c.h.b16 %v386
        %v435 = vunpack.c.l.b16 %v387
        %v436 = vunpack.c.h.b16 %v387
        %v437 = vunpack.c.l.b16 %v388
        %v438 = vunpack.c.h.b16 %v388
        %v439 = vunpack.c.l.b16 %v389
        %v440 = vunpack.c.h.b16 %v389
        %v441 = vunpack.c.l.b16 %v390
        %v442 = vunpack.c.h.b16 %v390
        %v443 = vunpack.c.l.b16 %v391
        %v444 = vunpack.c.h.b16 %v391
        %v445 = vunpack.c.l.b16 %v392
        %v446 = vunpack.c.h.b16 %v392
        %v447 = vunpack.c.l.b16 %v393
        %v448 = vunpack.c.h.b16 %v393
        %v449 = vunpack.c.l.b16 %v394
        %v450 = vunpack.c.h.b16 %v394
        %v451 = vunpack.c.l.b16 %v395
        %v452 = vunpack.c.h.b16 %v395
        %v453 = vunpack.c.l.b16 %v396
        %v454 = vunpack.c.h.b16 %v396
        %v455 = vunpack.c.l.b16 %v397
        %v456 = vunpack.c.h.b16 %v397
        %v457 = vunpack.c.l.b16 %v398
        %v458 = vunpack.c.h.b16 %v398
        %v459 = vpack.c.b16 %v429, %v427
        %v460 = vpack.c.b16 %v430, %v428
        %v461 = vpack.c.b16 %v433, %v431
        %v462 = vpack.c.b16 %v434, %v432
        %v463 = vpack.c.b16 %v437, %v435
        %v464 = vpack.c.b16 %v438, %v436
        %v465 = vpack.c.b16 %v441, %v439
        %v466 = vpack.c.b16 %v442, %v440
        %v467 = vpack.c.b16 %v445, %v443
        %v468 = vpack.c.b16 %v446, %v444
        %v469 = vpack.c.b16 %v449, %v447
        %v470 = vpack.c.b16 %v450, %v448
        %v471 = vpack.c.b16 %v453, %v451
        %v472 = vpack.c.b16 %v454, %v452
        %v473 = vpack.c.b16 %v457, %v455
        %v474 = vpack.c.b16 %v458, %v456
        %491 = vmatpush.bf16.msra.mxu0 %v473
        %492 = vmatpush.bf16.msra.mxu0 %v471
        %493 = vmatpush.bf16.msra.mxu0 %v469
        %494 = vmatpush.bf16.msra.mxu0 %v467
        %495 = vmatpush.bf16.msra.mxu0 %v465
        %496 = vmatpush.bf16.msra.mxu0 %v463
        %497 = vmatpush.bf16.msra.mxu0 %v461
        %498 = vmatpush.bf16.msra.mxu0 %v459
        %499 = vmatmul.bf16.gmra.mxu0 %v407
        %v500 = vpop.f32.mrf.mxu0
        %v501 = vadd.f32 0.0, %v500
        %v502 = vpop.f32.mrf.mxu0
        %v503 = vadd.f32 0.0, %v502
        %504 = vmatmul.bf16.gmra.mxu0 %v408
        %v505 = vpop.f32.mrf.mxu0
        %v506 = vadd.f32 0.0, %v505
        %v507 = vpop.f32.mrf.mxu0
        %v508 = vadd.f32 0.0, %v507
        %509 = vdwg.mxu0
        %510 = vmatpush.bf16.msra.mxu0 %v474
        %511 = vmatpush.bf16.msra.mxu0 %v472
        %512 = vmatpush.bf16.msra.mxu0 %v470
        %513 = vmatpush.bf16.msra.mxu0 %v468
        %514 = vmatpush.bf16.msra.mxu0 %v466
        %515 = vmatpush.bf16.msra.mxu0 %v464
        %516 = vmatpush.bf16.msra.mxu0 %v462
        %517 = vmatpush.bf16.msra.mxu0 %v460
        %518 = vmatmul.bf16.gmra.mxu0 %v407
        %v519 = vpop.f32.mrf.mxu0
        %v520 = vadd.f32 0.0, %v519
        %v521 = vpop.f32.mrf.mxu0
        %v522 = vadd.f32 0.0, %v521
        %523 = vmatmul.bf16.gmra.mxu0 %v408
        %v524 = vpop.f32.mrf.mxu0
        %v525 = vadd.f32 0.0, %v524
        %v526 = vpop.f32.mrf.mxu0
        %v527 = vadd.f32 0.0, %v526
        %528 = vdwg.mxu0
        %v533 = vunpack.c.l.b16 %v359
        %v534 = vunpack.c.l.b16 %v360
        %v535 = vunpack.c.l.b16 %v361
        %v536 = vunpack.c.l.b16 %v362
        %v537 = vpack.c.b16 %v534, %v533
        %v538 = vpack.c.b16 %v536, %v535
        %v557 = vunpack.c.l.b16 %v363
        %v558 = vunpack.c.h.b16 %v363
        %v559 = vunpack.c.l.b16 %v364
        %v560 = vunpack.c.h.b16 %v364
        %v561 = vunpack.c.l.b16 %v365
        %v562 = vunpack.c.h.b16 %v365
        %v563 = vunpack.c.l.b16 %v366
        %v564 = vunpack.c.h.b16 %v366
        %v565 = vunpack.c.l.b16 %v367
        %v566 = vunpack.c.h.b16 %v367
        %v567 = vunpack.c.l.b16 %v368
        %v568 = vunpack.c.h.b16 %v368
        %v569 = vunpack.c.l.b16 %v369
        %v570 = vunpack.c.h.b16 %v369
        %v571 = vunpack.c.l.b16 %v370
        %v572 = vunpack.c.h.b16 %v370
        %v573 = vunpack.c.l.b16 %v371
        %v574 = vunpack.c.h.b16 %v371
        %v575 = vunpack.c.l.b16 %v372
        %v576 = vunpack.c.h.b16 %v372
        %v577 = vunpack.c.l.b16 %v373
        %v578 = vunpack.c.h.b16 %v373
        %v579 = vunpack.c.l.b16 %v374
        %v580 = vunpack.c.h.b16 %v374
        %v581 = vunpack.c.l.b16 %v375
        %v582 = vunpack.c.h.b16 %v375
        %v583 = vunpack.c.l.b16 %v376
        %v584 = vunpack.c.h.b16 %v376
        %v585 = vunpack.c.l.b16 %v377
        %v586 = vunpack.c.h.b16 %v377
        %v587 = vunpack.c.l.b16 %v378
        %v588 = vunpack.c.h.b16 %v378
        %v589 = vpack.c.b16 %v559, %v557
        %v590 = vpack.c.b16 %v560, %v558
        %v591 = vpack.c.b16 %v563, %v561
        %v592 = vpack.c.b16 %v564, %v562
        %v593 = vpack.c.b16 %v567, %v565
        %v594 = vpack.c.b16 %v568, %v566
        %v595 = vpack.c.b16 %v571, %v569
        %v596 = vpack.c.b16 %v572, %v570
        %v597 = vpack.c.b16 %v575, %v573
        %v598 = vpack.c.b16 %v576, %v574
        %v599 = vpack.c.b16 %v579, %v577
        %v600 = vpack.c.b16 %v580, %v578
        %v601 = vpack.c.b16 %v583, %v581
        %v602 = vpack.c.b16 %v584, %v582
        %v603 = vpack.c.b16 %v587, %v585
        %v604 = vpack.c.b16 %v588, %v586
        %621 = vmatpush.bf16.msra.mxu0 %v603
        %622 = vmatpush.bf16.msra.mxu0 %v601
        %623 = vmatpush.bf16.msra.mxu0 %v599
        %624 = vmatpush.bf16.msra.mxu0 %v597
        %625 = vmatpush.bf16.msra.mxu0 %v595
        %626 = vmatpush.bf16.msra.mxu0 %v593
        %627 = vmatpush.bf16.msra.mxu0 %v591
        %628 = vmatpush.bf16.msra.mxu0 %v589
        %629 = vmatmul.bf16.gmra.mxu0 %v537
        %v630 = vpop.f32.mrf.mxu0
        %v631 = vadd.f32 %v501, %v630
        %v632 = vpop.f32.mrf.mxu0
        %v633 = vadd.f32 %v503, %v632
        %634 = vmatmul.bf16.gmra.mxu0 %v538
        %v635 = vpop.f32.mrf.mxu0
        %v636 = vadd.f32 %v506, %v635
        %v637 = vpop.f32.mrf.mxu0
        %v638 = vadd.f32 %v508, %v637
        %639 = vdwg.mxu0
        %640 = vmatpush.bf16.msra.mxu0 %v604
        %641 = vmatpush.bf16.msra.mxu0 %v602
        %642 = vmatpush.bf16.msra.mxu0 %v600
        %643 = vmatpush.bf16.msra.mxu0 %v598
        %644 = vmatpush.bf16.msra.mxu0 %v596
        %645 = vmatpush.bf16.msra.mxu0 %v594
        %646 = vmatpush.bf16.msra.mxu0 %v592
        %647 = vmatpush.bf16.msra.mxu0 %v590
        %648 = vmatmul.bf16.gmra.mxu0 %v537
        %v649 = vpop.f32.mrf.mxu0
        %v650 = vadd.f32 %v520, %v649
        %v651 = vpop.f32.mrf.mxu0
        %v652 = vadd.f32 %v522, %v651
        %653 = vmatmul.bf16.gmra.mxu0 %v538
        %v654 = vpop.f32.mrf.mxu0
        %v655 = vadd.f32 %v525, %v654
        %v656 = vpop.f32.mrf.mxu0
        %v657 = vadd.f32 %v527, %v656
        %658 = vdwg.mxu0
        %v659 = vadd.f32 %v631, %v650
        %660 = vadd.xlane.f32.xlu0 %v659
        %v661 = vpop.xlane.xlu0 %660
        %v662 = vadd.f32 %v633, %v652
        %663 = vadd.xlane.f32.xlu0 %v662
        %v664 = vpop.xlane.xlu0 %663
        %v665 = vadd.f32 %v636, %v655
        %666 = vadd.xlane.f32.xlu0 %v665
        %v667 = vpop.xlane.xlu0 %666
        %v668 = vadd.f32 %v638, %v657
        %669 = vadd.xlane.f32.xlu0 %v668
        %v670 = vpop.xlane.xlu0 %669
        %v671 = vrcp.pop 256.0
        %v672 = vmul.f32 256.0, %v671
        %v673 = vsub.f32 1.0, %v672
        %v674 = vmul.f32 %v671, %v673
        %v675 = vadd.f32 %v671, %v674
        %vm676 = vweird.f32 %v671
        %v677 = vsel %vm676, %v671, %v675
        %v678 = vmul.f32 %v661, %v677
        %v679 = vmul.f32 %v664, %v677
        %v680 = vmul.f32 %v667, %v677
        %v681 = vmul.f32 %v670, %v677
        %v682 = vsub.f32 %v631, %v678
        %v683 = vsub.f32 %v650, %v678
        %v684 = vsub.f32 %v633, %v679
        %v685 = vsub.f32 %v652, %v679
        %v686 = vsub.f32 %v636, %v680
        %v687 = vsub.f32 %v655, %v680
        %v688 = vsub.f32 %v638, %v681
        %v689 = vsub.f32 %v657, %v681
        %v690 = vmul.f32 %v682, %v682
        %v691 = vmul.f32 %v683, %v683
        %v692 = vmul.f32 %v684, %v684
        %v693 = vmul.f32 %v685, %v685
        %v694 = vmul.f32 %v686, %v686
        %v695 = vmul.f32 %v687, %v687
        %v696 = vmul.f32 %v688, %v688
        %v697 = vmul.f32 %v689, %v689
        %v698 = vadd.f32 %v690, %v691
        %699 = vadd.xlane.f32.xlu0 %v698
        %v700 = vpop.xlane.xlu0 %699
        %v701 = vadd.f32 %v692, %v693
        %702 = vadd.xlane.f32.xlu0 %v701
        %v703 = vpop.xlane.xlu0 %702
        %v704 = vadd.f32 %v694, %v695
        %705 = vadd.xlane.f32.xlu0 %v704
        %v706 = vpop.xlane.xlu0 %705
        %v707 = vadd.f32 %v696, %v697
        %708 = vadd.xlane.f32.xlu0 %v707
        %v709 = vpop.xlane.xlu0 %708
        %v710 = vmul.f32 %v700, %v677
        %v711 = vmul.f32 %v703, %v677
        %v712 = vmul.f32 %v706, %v677
        %v713 = vmul.f32 %v709, %v677
        %v714 = vadd.f32 %v710, 1e-06
        %v715 = vadd.f32 %v711, 1e-06
        %v716 = vadd.f32 %v712, 1e-06
        %v717 = vadd.f32 %v713, 1e-06
        %v718 = vrsqrt.pop %v714
        %v719 = vmul.f32 %v718, %v714
        %v720 = vmul.f32 %v719, %v718
        %v721 = vmul.f32 0.5, %v720
        %v722 = vsub.f32 1.5, %v721
        %v723 = vmul.f32 %v718, %v722
        %vm724 = vweird.f32 %v714
        %vm725 = vweird.f32 %v718
        %vm726 = vmor %vm724, %vm725
        %v727 = vsel %vm726, %v718, %v723
        %v728 = vrsqrt.pop %v715
        %v729 = vmul.f32 %v728, %v715
        %v730 = vmul.f32 %v729, %v728
        %v731 = vmul.f32 0.5, %v730
        %v732 = vsub.f32 1.5, %v731
        %v733 = vmul.f32 %v728, %v732
        %vm734 = vweird.f32 %v715
        %vm735 = vweird.f32 %v728
        %vm736 = vmor %vm734, %vm735
        %v737 = vsel %vm736, %v728, %v733
        %v738 = vrsqrt.pop %v716
        %v739 = vmul.f32 %v738, %v716
        %v740 = vmul.f32 %v739, %v738
        %v741 = vmul.f32 0.5, %v740
        %v742 = vsub.f32 1.5, %v741
        %v743 = vmul.f32 %v738, %v742
        %vm744 = vweird.f32 %v716
        %vm745 = vweird.f32 %v738
        %vm746 = vmor %vm744, %vm745
        %v747 = vsel %vm746, %v738, %v743
        %v748 = vrsqrt.pop %v717
        %v749 = vmul.f32 %v748, %v717
        %v750 = vmul.f32 %v749, %v748
        %v751 = vmul.f32 0.5, %v750
        %v752 = vsub.f32 1.5, %v751
        %v753 = vmul.f32 %v748, %v752
        %vm754 = vweird.f32 %v717
        %vm755 = vweird.f32 %v748
        %vm756 = vmor %vm754, %vm755
        %v757 = vsel %vm756, %v748, %v753
        %v758 = vmul.f32 %v682, %v727
        %v759 = vmul.f32 %v683, %v727
        %v760 = vmul.f32 %v684, %v737
        %v761 = vmul.f32 %v685, %v737
        %v762 = vmul.f32 %v686, %v747
        %v763 = vmul.f32 %v687, %v747
        %v764 = vmul.f32 %v688, %v757
        %v765 = vmul.f32 %v689, %v757
        %v766 = vld [vmem:[#allocation2] sm:$0x3]
        %v768 = vperm.slane %v766, 0
        %v769 = vperm.slane %v766, 1
        %v772 = vmul.f32 %v758, %v768
        %v773 = vmul.f32 %v759, %v769
        %v774 = vmul.f32 %v760, %v768
        %v775 = vmul.f32 %v761, %v769
        %v776 = vmul.f32 %v762, %v768
        %v777 = vmul.f32 %v763, %v769
        %v778 = vmul.f32 %v764, %v768
        %v779 = vmul.f32 %v765, %v769
        %v780 = vld [vmem:[#allocation4] sm:$0x3]
        %v782 = vperm.slane %v780, 0
        %v783 = vperm.slane %v780, 1
        %v786 = vadd.f32 %v772, %v782
        %v787 = vadd.f32 %v773, %v783
        %v788 = vadd.f32 %v774, %v782
        %v789 = vadd.f32 %v775, %v783
        %v790 = vadd.f32 %v776, %v782
        %v791 = vadd.f32 %v777, %v783
        %v792 = vadd.f32 %v778, %v782
        %v793 = vadd.f32 %v779, %v783
        %v794 = vpack.c.bf16 %v787, %v786
        %v795 = vpack.c.bf16 %v789, %v788
        %v796 = vpack.c.bf16 %v791, %v790
        %v797 = vpack.c.bf16 %v793, %v792
        %798 = vst [vmem:[%s357] sm:$0xff] %v794
        %799 = vst [vmem:[%s357 + $0x8] sm:$0xff] %v795
        %800 = vst [vmem:[%s357 + $0x10] sm:$0xff] %v796
        %801 = vst [vmem:[%s357 + $0x18] sm:$0xff] %v797
        %s802 = smul.u32 4, %s24
        %p803 = scmp.lt.s32.totalorder %s23, 1
        %s804 = scalar_select %p803, %s23, 1
        %p805 = scmp.lt.s32.totalorder %s802, 7
        %s806 = scalar_select %p805, %s802, 7
        %s807 = smul.addr %s806, 2
        %s808 = smul.addr %s804, 16
        %s809 = sadd.s32 %s807, %s808
        %s810 = smul.addr %s809, 4
        %s811 = scalar_lea.vmem %s6, %s810
        // Predicated region
        $region53: #{histosam_forward.2} parent=43 // pred_check
          %p812 = pneg %p191
        $region54: #{histosam_forward.2} parent=43 // pred_check_branch
          %814 = sbr.rel (%p812) target = $region56
        $region55: #{histosam_forward.2} parent=43 // pred_region
          %s815 = smul.u32 4, %s24
        $region56: #{histosam_forward.2} parent=43 // pred_fallthru
          _
      $region44: #{histosam_forward.2} parent=5 // pred_fallthru
        _
      %p816 = scmp.le.s32.totalorder 2, %s14
      // Predicated region
      $region57: #{histosam_forward.2} parent=5 // pred_check
        %p817 = pneg %p816
      $region58: #{histosam_forward.2} parent=5 // pred_check_branch
        %819 = sbr.rel (%p817) target = $region60
      $region59: #{histosam_forward.2} parent=5 // pred_region
        %s820 = ssub.s32 %s14, 2
        // Predicated region
        $region61: #{histosam_forward.2} parent=59 // pred_check
          %p821 = pneg %p197
        $region62: #{histosam_forward.2} parent=59 // pred_check_branch
          %823 = sbr.rel (%p821) target = $region64
        $region63: #{histosam_forward.2} parent=59 // pred_region
          %s824 = smul.u32 4, %s26
          %p825 = scmp.lt.s32.totalorder %s25, 1
          %s826 = scalar_select %p825, %s25, 1
          %p827 = scmp.lt.s32.totalorder %s824, 7
          %s828 = scalar_select %p827, %s824, 7
          %s829 = smul.addr %s828, 2
          %s830 = smul.addr %s826, 16
          %s831 = sadd.s32 %s829, %s830
          %s832 = smul.addr %s831, 4
          %s833 = scalar_lea.vmem %s6, %s832
        $region64: #{histosam_forward.2} parent=59 // pred_fallthru
          _
      $region60: #{histosam_forward.2} parent=5 // pred_fallthru
        _
    $region6: #{histosam_forward.2} parent=1 // loop_footer
      %s18 = sadd.s32 1, %s14
    $region7: #{histosam_forward.2} parent=1 // loop_footer_branch
      %13 = sbr.rel target = $region3
    $region8: #{histosam_forward.2} parent=1 // loop_exit
      _
    %834 = vsyncpa [#allocation3], 1
    %s835 = scalar_lea.sflag [#allocation3], 1
    %836 = vsyncpa %s835, 1
    %837 = vsyncpa [#allocation5], 1

// kernel: histosam_forward.3
$region0: #{histosam_forward.3}
  #allocation0 [shape = 'u32[]', space=smem, size = 0x4, offset = 0x4, fixed_abs, tag = 'smem constant byte address 0x4 - core index']
  #allocation1 [shape = 'u32[72,128]{1,0:T(1,128)}', space=vmem, size = 0x9000, scoped, tag = 'internal scratch']
  #allocation2 [shape = 'bf16[80,256]{1,0:T(8,128)(2,1)}', space=vmem, size = 0xa000, scoped, tag = 'scratch operand']
  %s0 = inlined_call_operand.vmem [shape: bf16[2,64,256], index: 0, kind: input, shape index: {}]
  %s1 = inlined_call_operand.vmem [shape: bf16[9,256,256], index: 1, kind: input, shape index: {}]
  %s2 = inlined_call_operand.vmem [shape: f32[1,256], index: 2, kind: input, shape index: {}]
  %s3 = inlined_call_operand.vmem [shape: f32[1,256], index: 3, kind: input, shape index: {}]
  %s4 = inlined_call_operand.hbm [shape: f32[2,64,256], index: 4, kind: output, shape index: {}]
  %s5 = sld [smem:[#allocation0]]
  $region53: #{histosam_forward.3} parent=0
    _
  %s7 = ssub.s32 1, %s5
  %s8 = scalar_select 0, %s7, %s5
  $region1: #{histosam_forward.3} parent=0
    #allocation3 [shape = 'u8[65536]{0}', space=vmem, size = 0x10000, scoped, tag = 'output window, operand 0']
    #allocation4 [shape = 's32[2]{0}', space=sflag, size = 0x8, scoped, tag = 'scoped memory for histosam_forward.3']
    %9 = vsyncpa [#allocation4], 0
    %s10 = scalar_lea.sflag [#allocation4], 1
    %11 = vsyncpa %s10, 0
    loop: start=0, step=1, limit=6
    $region2: #{histosam_forward.3} parent=1 // loop_pre_header
      _
    $region3: #{histosam_forward.3} parent=1 // loop_header
      %s13 = sphi 0, %s17
      %p14 = scmp.ge.s32.totalorder %s13, 6
      %s20 = sphi 0, %s32
      %s21 = sphi 0, %s28
      %s22 = sphi 0, %s20
      %s23 = sphi 0, %s21
      %s24 = sphi 0, %s22
      %s25 = sphi 0, %s23
      %s35 = sphi 0, %s37
      %s38 = sphi 0, %s35
      %s39 = sphi 0, %s38
      %s55 = sphi 0, %s39
      %s59 = sphi 0, %s59
      %s61 = sphi 0, %s59
      %s62 = sphi 0, %s61
      %s76 = sphi 0, %s62
      %s80 = sphi 0, %s80
      %s82 = sphi 0, %s80
      %s83 = sphi 0, %s82
      %s97 = sphi 0, %s83
      %s101 = sphi 0, %s101
      %s103 = sphi 0, %s101
      %s104 = sphi 0, %s103
      %s118 = sphi 0, %s104
      %s126 = sphi 0, %s128
      %s129 = sphi 0, %s126
      %s130 = sphi 0, %s129
      %s146 = sphi 0, %s130
    $region4: #{histosam_forward.3} parent=1 // loop_header_branch
      %16 = sbr.rel (%p14) target = $region8
    $region5: #{histosam_forward.3} parent=1 // loop_body
      %s18 = ssub.s32 %s13, 1
      %s19 = ssub.s32 %s13, 2
      %s26 = sadd.s32 1, %s21
      %p27 = scmp.ge.s32.totalorder %s26, 2
      %s28 = scalar_select %p27, 0, %s26
      %s29 = sadd.s32 1, %s20
      %s30 = scalar_select %p27, %s29, %s20
      %p31 = scmp.ge.s32.totalorder %s30, 2
      %s32 = scalar_select %p31, 0, %s30
      %s33 = ssub.s32 %s20, %s32
      %p34 = scmp.eq.s32.totalorder %s33, 0
      %s36 = sadd.s32 %s35, 1
      %s37 = scalar_select %p34, %s35, %s36
      %p40 = pneg %p34
      %p41 = scmp.eq.s32.totalorder %s13, 3
      %p42 = por %p40, %p41
      %p43 = scmp.ne.s32.totalorder %s35, %s38
      %p44 = scmp.eq.s32.totalorder %s13, 0
      %p45 = por %p43, %p44
      %p46 = scmp.ne.s32.totalorder %s35, %s38
      %p47 = scmp.eq.s32.totalorder %s18, 3
      %p48 = por %p46, %p47
      %p49 = scmp.ne.s32.totalorder %s38, %s39
      %p50 = scmp.eq.s32.totalorder %s18, 0
      %p51 = por %p49, %p50
      %p52 = scmp.ne.s32.totalorder %s38, %s39
      %p53 = scmp.eq.s32.totalorder %s19, 3
      %p54 = por %p52, %p53
      %p56 = scmp.ne.s32.totalorder %s39, %s55
      %p57 = scmp.eq.s32.totalorder %s19, 0
      %p58 = por %p56, %p57
      %s60 = sadd.s32 %s59, 1
      %p63 = scmp.eq.s32.totalorder %s13, 3
      %p64 = scmp.ne.s32.totalorder %s59, %s61
      %p65 = scmp.eq.s32.totalorder %s13, 0
      %p66 = por %p64, %p65
      %p67 = scmp.ne.s32.totalorder %s59, %s61
      %p68 = scmp.eq.s32.totalorder %s18, 3
      %p69 = por %p67, %p68
      %p70 = scmp.ne.s32.totalorder %s61, %s62
      %p71 = scmp.eq.s32.totalorder %s18, 0
      %p72 = por %p70, %p71
      %p73 = scmp.ne.s32.totalorder %s61, %s62
      %p74 = scmp.eq.s32.totalorder %s19, 3
      %p75 = por %p73, %p74
      %p77 = scmp.ne.s32.totalorder %s62, %s76
      %p78 = scmp.eq.s32.totalorder %s19, 0
      %p79 = por %p77, %p78
      %s81 = sadd.s32 %s80, 1
      %p84 = scmp.eq.s32.totalorder %s13, 3
      %p85 = scmp.ne.s32.totalorder %s80, %s82
      %p86 = scmp.eq.s32.totalorder %s13, 0
      %p87 = por %p85, %p86
      %p88 = scmp.ne.s32.totalorder %s80, %s82
      %p89 = scmp.eq.s32.totalorder %s18, 3
      %p90 = por %p88, %p89
      %p91 = scmp.ne.s32.totalorder %s82, %s83
      %p92 = scmp.eq.s32.totalorder %s18, 0
      %p93 = por %p91, %p92
      %p94 = scmp.ne.s32.totalorder %s82, %s83
      %p95 = scmp.eq.s32.totalorder %s19, 3
      %p96 = por %p94, %p95
      %p98 = scmp.ne.s32.totalorder %s83, %s97
      %p99 = scmp.eq.s32.totalorder %s19, 0
      %p100 = por %p98, %p99
      %s102 = sadd.s32 %s101, 1
      %p105 = scmp.eq.s32.totalorder %s13, 3
      %p106 = scmp.ne.s32.totalorder %s101, %s103
      %p107 = scmp.eq.s32.totalorder %s13, 0
      %p108 = por %p106, %p107
      %p109 = scmp.ne.s32.totalorder %s101, %s103
      %p110 = scmp.eq.s32.totalorder %s18, 3
      %p111 = por %p109, %p110
      %p112 = scmp.ne.s32.totalorder %s103, %s104
      %p113 = scmp.eq.s32.totalorder %s18, 0
      %p114 = por %p112, %p113
      %p115 = scmp.ne.s32.totalorder %s103, %s104
      %p116 = scmp.eq.s32.totalorder %s19, 3
      %p117 = por %p115, %p116
      %p119 = scmp.ne.s32.totalorder %s104, %s118
      %p120 = scmp.eq.s32.totalorder %s19, 0
      %p121 = por %p119, %p120
      %s122 = ssub.s32 %s20, %s32
      %s123 = ssub.s32 %s21, %s28
      %s124 = sor.u32 %s122, %s123
      %p125 = scmp.eq.s32.totalorder %s124, 0
      %s127 = sadd.s32 %s126, 1
      %s128 = scalar_select %p125, %s126, %s127
      %p131 = pneg %p125
      %p132 = scmp.eq.s32.totalorder %s13, 3
      %p133 = por %p131, %p132
      %p134 = scmp.ne.s32.totalorder %s126, %s129
      %p135 = scmp.eq.s32.totalorder %s13, 0
      %p136 = por %p134, %p135
      %p137 = scmp.ne.s32.totalorder %s126, %s129
      %p138 = scmp.eq.s32.totalorder %s18, 3
      %p139 = por %p137, %p138
      %p140 = scmp.ne.s32.totalorder %s129, %s130
      %p141 = scmp.eq.s32.totalorder %s18, 0
      %p142 = por %p140, %p141
      %p143 = scmp.ne.s32.totalorder %s129, %s130
      %p144 = scmp.eq.s32.totalorder %s19, 3
      %p145 = por %p143, %p144
      %p147 = scmp.ne.s32.totalorder %s130, %s146
      %p148 = scmp.eq.s32.totalorder %s19, 0
      %p149 = por %p147, %p148
      %p150 = scmp.le.s32.totalorder 1, %s13
      %p151 = scmp.lt.s32.totalorder %s13, 5
      %p152 = pnand %p150, %p151
      %p153 = pneg %p152
      // Predicated region
      $region9: #{histosam_forward.3} parent=5 // pred_check
        _
      $region10: #{histosam_forward.3} parent=5 // pred_check_branch
        %155 = sbr.rel (%p152) target = $region12
      $region11: #{histosam_forward.3} parent=5 // pred_region
        %s156 = ssub.s32 %s13, 1
        // Predicated region
        $region13: #{histosam_forward.3} parent=11 // pred_check
          %p157 = pneg %p72
        $region14: #{histosam_forward.3} parent=11 // pred_check_branch
          %159 = sbr.rel (%p157) target = $region16
        $region15: #{histosam_forward.3} parent=11 // pred_region
          _
        $region16: #{histosam_forward.3} parent=11 // pred_fallthru
          _
        // Predicated region
        $region17: #{histosam_forward.3} parent=11 // pred_check
          %p160 = pneg %p93
        $region18: #{histosam_forward.3} parent=11 // pred_check_branch
          %162 = sbr.rel (%p160) target = $region20
        $region19: #{histosam_forward.3} parent=11 // pred_region
          _
        $region20: #{histosam_forward.3} parent=11 // pred_fallthru
          _
        // Predicated region
        $region21: #{histosam_forward.3} parent=11 // pred_check
          %p163 = pneg %p114
        $region22: #{histosam_forward.3} parent=11 // pred_check_branch
          %165 = sbr.rel (%p163) target = $region24
        $region23: #{histosam_forward.3} parent=11 // pred_region
          _
        $region24: #{histosam_forward.3} parent=11 // pred_fallthru
          _
      $region12: #{histosam_forward.3} parent=5 // pred_fallthru
        _
      %p166 = scmp.lt.s32.totalorder %s13, 4
      // Predicated region
      $region25: #{histosam_forward.3} parent=5 // pred_check
        %p167 = pneg %p166
      $region26: #{histosam_forward.3} parent=5 // pred_check_branch
        %169 = sbr.rel (%p167) target = $region28
      $region27: #{histosam_forward.3} parent=5 // pred_region
        // Predicated region
        $region29: #{histosam_forward.3} parent=27 // pred_check
          %p170 = pneg %p45
        $region30: #{histosam_forward.3} parent=27 // pred_check_branch
          %172 = sbr.rel (%p170) target = $region32
        $region31: #{histosam_forward.3} parent=27 // pred_region
          %p173 = scmp.lt.s32.totalorder %s20, 1
          %s174 = scalar_select %p173, %s20, 1
          %s175 = smul.addr %s174, 16
          %s176 = smul.addr %s175, 4
          %s177 = scalar_lea.vmem %s0, %s176
        $region32: #{histosam_forward.3} parent=27 // pred_fallthru
          _
      $region28: #{histosam_forward.3} parent=5 // pred_fallthru
        _
      %p178 = scmp.le.s32.totalorder 1, %s13
      %p179 = scmp.lt.s32.totalorder %s13, 5
      %p180 = pnand %p178, %p179
      %p181 = pneg %p180
      // Predicated region
      $region33: #{histosam_forward.3} parent=5 // pred_check
        _
      $region34: #{histosam_forward.3} parent=5 // pred_check_branch
        %183 = sbr.rel (%p180) target = $region36
      $region35: #{histosam_forward.3} parent=5 // pred_region
        %s184 = ssub.s32 %s13, 1
        %p185 = scmp.lt.s32.totalorder %s22, 1
        %s186 = scalar_select %p185, %s22, 1
        %s187 = smul.addr %s186, 16
        %s188 = smul.addr %s187, 4
        %s189 = scalar_lea.vmem %s0, %s188
        %p190 = pneg %p51
        %p191 = pneg %p48
        %p192 = pneg %p72
        %p193 = pneg %p69
        %p194 = pneg %p93
        %p195 = pneg %p90
        %p196 = pneg %p114
        %p197 = pneg %p111
        %p198 = pneg %p142
        %p199 = pneg %p139
        %s200 = sand.u32 %s129, 1
        %s201 = scalar_lea.sflag [#allocation4], %s200
        %s202 = sand.u32 %s129, 1
        %s203 = smul.addr %s202, 64
        %s204 = scalar_lea.vmem [#allocation3], %s203
        %p205 = scmp.lt.s32.totalorder %s22, 1
        %s206 = scalar_select %p205, %s22, 1
        %s207 = smul.addr %s206, 16
        %s208 = smul.addr %s207, 4
        %s209 = scalar_lea.vmem %s0, %s208
        %s210 = smul.u32 4, %s23
        %p212 = scmp.eq.s32.totalorder %s23, 0
        // Predicated region
        $region37: #{histosam_forward.3} parent=35 // pred_check
          %p213 = pneg %p212
        $region38: #{histosam_forward.3} parent=35 // pred_check_branch
          %215 = sbr.rel (%p213) target = $region40
        $region39: #{histosam_forward.3} parent=35 // pred_region
          %216 = vst [vmem:[#allocation2] sm:$0xff] 0
          %217 = vst [vmem:[#allocation2 + $0x48] sm:$0xff] 0
          %v218 = vld [vmem:[%s209] sm:$0xff]
          %v219 = vld [vmem:[%s209 + $0x8] sm:$0xff]
          %v220 = vld [vmem:[%s209 + $0x10] sm:$0xff]
          %v221 = vld [vmem:[%s209 + $0x18] sm:$0xff]
          %v222 = vld [vmem:[%s209 + $0x20] sm:$0xff]
          %v223 = vld [vmem:[%s209 + $0x28] sm:$0xff]
          %v224 = vld [vmem:[%s209 + $0x30] sm:$0xff]
          %v225 = vld [vmem:[%s209 + $0x38] sm:$0xff]
          %226 = vst [vmem:[#allocation2 + $0x8] sm:$0xff] %v218
          %227 = vst [vmem:[#allocation2 + $0x10] sm:$0xff] %v219
          %228 = vst [vmem:[#allocation2 + $0x18] sm:$0xff] %v220
          %229 = vst [vmem:[#allocation2 + $0x20] sm:$0xff] %v221
          %230 = vst [vmem:[#allocation2 + $0x28] sm:$0xff] %v222
          %231 = vst [vmem:[#allocation2 + $0x30] sm:$0xff] %v223
          %232 = vst [vmem:[#allocation2 + $0x38] sm:$0xff] %v224
          %233 = vst [vmem:[#allocation2 + $0x40] sm:$0xff] %v225
        $region40: #{histosam_forward.3} parent=35 // pred_fallthru
          _
        %s234 = smul.u32 %s23, 32
        %s235 = sshra.s32 %s234, 3
        %s236 = sand.u32 %s234, 7
        %s237 = smul.u32 %s235, 2
        %s238 = smul.addr %s237, 4
        %s239 = scalar_lea.vmem [#allocation2], %s238
        %v240 = vld [vmem:[%s239] sm:$0xff]
        %v241 = vld [vmem:[%s239 + $0x8] sm:$0xff]
        %v242 = vld [vmem:[%s239 + $0x10] sm:$0xff]
        %v243 = vld [vmem:[%s239 + $0x18] sm:$0xff]
        %s244 = sadd.s32 %s234, 8
        %s245 = sshra.s32 %s244, 3
        %s246 = sand.u32 %s244, 7
        %s247 = smul.u32 %s245, 2
        %s248 = smul.addr %s247, 4
        %s249 = scalar_lea.vmem [#allocation2], %s248
        %v250 = vld [vmem:[%s249] sm:$0xff]
        %v251 = vld [vmem:[%s249 + $0x8] sm:$0xff]
        %v252 = vld [vmem:[%s249 + $0x10] sm:$0xff]
        %v253 = vld [vmem:[%s249 + $0x18] sm:$0xff]
        %s254 = sadd.s32 %s234, 16
        %s255 = sshra.s32 %s254, 3
        %s256 = sand.u32 %s254, 7
        %s257 = smul.u32 %s255, 2
        %s258 = smul.addr %s257, 4
        %s259 = scalar_lea.vmem [#allocation2], %s258
        %v260 = vld [vmem:[%s259] sm:$0xff]
        %v261 = vld [vmem:[%s259 + $0x8] sm:$0xff]
        %v262 = vld [vmem:[%s259 + $0x10] sm:$0xff]
        %v263 = vld [vmem:[%s259 + $0x18] sm:$0xff]
        %v264 = vlaneseq
        %v265 = vshrl.u32 %v264, 7
        %v266 = vadd.s32 %v265, 8
        %v267 = vadd.s32 %v265, 16
        %v268 = vadd.s32 %v265, 24
        %vm269 = vcmp.lt.s32.totalorder %v265, 0
        %v270 = vsub.s32 0, %v265
        %v271 = vsel %vm269, %v270, %v265
        %v272 = vshrl.u32 %v271, 3
        %v273 = vand.u32 %v271, 7
        %v274 = vsub.s32 0, %v273
        %v275 = vsel %vm269, %v274, %v273
        %vm276 = vcmp.lt.s32.totalorder %v266, 0
        %v277 = vsub.s32 0, %v266
        %v278 = vsel %vm276, %v277, %v266
        %v279 = vshrl.u32 %v278, 3
        %v280 = vand.u32 %v278, 7
        %v281 = vsub.s32 0, %v280
        %v282 = vsel %vm276, %v281, %v280
        %vm283 = vcmp.lt.s32.totalorder %v267, 0
        %v284 = vsub.s32 0, %v267
        %v285 = vsel %vm283, %v284, %v267
        %v286 = vshrl.u32 %v285, 3
        %v287 = vand.u32 %v285, 7
        %v288 = vsub.s32 0, %v287
        %v289 = vsel %vm283, %v288, %v287
        %vm290 = vcmp.lt.s32.totalorder %v268, 0
        %v291 = vsub.s32 0, %v268
        %v292 = vsel %vm290, %v291, %v268
        %v293 = vshrl.u32 %v292, 3
        %v294 = vand.u32 %v292, 7
        %v295 = vsub.s32 0, %v294
        %v296 = vsel %vm290, %v295, %v294
        %vm297 = vcmp.ne.s32.totalorder %v275, 0
        %vm298 = vcmp.ne.s32.totalorder %v282, 0
        %vm299 = vcmp.ne.s32.totalorder %v289, 0
        %vm300 = vcmp.ne.s32.totalorder %v296, 0
        %vm301 = vcmp.lt.s32.totalorder %v275, 0
        %vm302 = vcmp.lt.s32.totalorder %v282, 0
        %vm303 = vcmp.lt.s32.totalorder %v289, 0
        %vm304 = vcmp.lt.s32.totalorder %v296, 0
        %vm305 = vmand %vm301, %vm297
        %vm306 = vmand %vm302, %vm298
        %vm307 = vmand %vm303, %vm299
        %vm308 = vmand %vm304, %vm300
        %v309 = vadd.s32 %v275, 8
        %v310 = vadd.s32 %v282, 8
        %v311 = vadd.s32 %v289, 8
        %v312 = vadd.s32 %v296, 8
        %v313 = vsel %vm305, %v309, %v275
        %v314 = vsel %vm306, %v310, %v282
        %v315 = vsel %vm307, %v311, %v289
        %v316 = vsel %vm308, %v312, %v296
        %vm317 = vcmp.ne.s32.totalorder %v313, 0
        %vm318 = vcmp.ne.s32.totalorder %v314, 0
        %vm319 = vcmp.ne.s32.totalorder %v315, 0
        %vm320 = vcmp.ne.s32.totalorder %v316, 0
        %v321 = vsel %vm317, 1, 0
        %v322 = vsel %vm318, 1, 0
        %v323 = vsel %vm319, 1, 0
        %v324 = vsel %vm320, 1, 0
        %v325 = vcvt.s32.f32 %v321
        %v326 = vcvt.s32.f32 %v322
        %v327 = vcvt.s32.f32 %v323
        %v328 = vcvt.s32.f32 %v324
        %vm329 = vcmp.ne.s32.totalorder %v313, 7
        %vm330 = vcmp.ne.s32.totalorder %v314, 7
        %vm331 = vcmp.ne.s32.totalorder %v315, 7
        %vm332 = vcmp.ne.s32.totalorder %v316, 7
        %v333 = vsel %vm329, 1, 0
        %v334 = vsel %vm330, 1, 0
        %v335 = vsel %vm331, 1, 0
        %v336 = vsel %vm332, 1, 0
        %v337 = vcvt.s32.f32 %v333
        %v338 = vcvt.s32.f32 %v334
        %v339 = vcvt.s32.f32 %v335
        %v340 = vcvt.s32.f32 %v336
        %s341 = scalar_lea.vmem %s1, 256
        %v342 = vld [vmem:[%s341] sm:$0xff]
        %v343 = vld [vmem:[%s341 + $0x8] sm:$0xff]
        %v344 = vld [vmem:[%s341 + $0x10] sm:$0xff]
        %v345 = vld [vmem:[%s341 + $0x18] sm:$0xff]
        %v346 = vld [vmem:[%s341 + $0x20] sm:$0xff]
        %v347 = vld [vmem:[%s341 + $0x28] sm:$0xff]
        %v348 = vld [vmem:[%s341 + $0x30] sm:$0xff]
        %v349 = vld [vmem:[%s341 + $0x38] sm:$0xff]
        %v350 = vld [vmem:[%s341 + $0x40] sm:$0xff]
        %v351 = vld [vmem:[%s341 + $0x48] sm:$0xff]
        %v352 = vld [vmem:[%s341 + $0x50] sm:$0xff]
        %v353 = vld [vmem:[%s341 + $0x58] sm:$0xff]
        %v354 = vld [vmem:[%s341 + $0x60] sm:$0xff]
        %v355 = vld [vmem:[%s341 + $0x68] sm:$0xff]
        %v356 = vld [vmem:[%s341 + $0x70] sm:$0xff]
        %v357 = vld [vmem:[%s341 + $0x78] sm:$0xff]
        %v358 = vld [vmem:[%s341 + $0x80] sm:$0xff]
        %v359 = vld [vmem:[%s341 + $0x88] sm:$0xff]
        %v360 = vld [vmem:[%s341 + $0x90] sm:$0xff]
        %v361 = vld [vmem:[%s341 + $0x98] sm:$0xff]
        %v362 = vld [vmem:[%s341 + $0xa0] sm:$0xff]
        %v363 = vld [vmem:[%s341 + $0xa8] sm:$0xff]
        %v364 = vld [vmem:[%s341 + $0xb0] sm:$0xff]
        %v365 = vld [vmem:[%s341 + $0xb8] sm:$0xff]
        %v366 = vld [vmem:[%s341 + $0xc0] sm:$0xff]
        %v367 = vld [vmem:[%s341 + $0xc8] sm:$0xff]
        %v368 = vld [vmem:[%s341 + $0xd0] sm:$0xff]
        %v369 = vld [vmem:[%s341 + $0xd8] sm:$0xff]
        %v370 = vld [vmem:[%s341 + $0xe0] sm:$0xff]
        %v371 = vld [vmem:[%s341 + $0xe8] sm:$0xff]
        %v372 = vld [vmem:[%s341 + $0xf0] sm:$0xff]
        %v373 = vld [vmem:[%s341 + $0xf8] sm:$0xff]
        %s374 = scalar_lea.vmem %s1, 1024
        %v375 = vld [vmem:[%s374] sm:$0xff]
        %v376 = vld [vmem:[%s374 + $0x8] sm:$0xff]
        %v377 = vld [vmem:[%s374 + $0x10] sm:$0xff]
        %v378 = vld [vmem:[%s374 + $0x18] sm:$0xff]
        %v379 = vld [vmem:[%s374 + $0x20] sm:$0xff]
        %v380 = vld [vmem:[%s374 + $0x28] sm:$0xff]
        %v381 = vld [vmem:[%s374 + $0x30] sm:$0xff]
        %v382 = vld [vmem:[%s374 + $0x38] sm:$0xff]
        %v383 = vld [vmem:[%s374 + $0x40] sm:$0xff]
        %v384 = vld [vmem:[%s374 + $0x48] sm:$0xff]
        %v385 = vld [vmem:[%s374 + $0x50] sm:$0xff]
        %v386 = vld [vmem:[%s374 + $0x58] sm:$0xff]
        %v387 = vld [vmem:[%s374 + $0x60] sm:$0xff]
        %v388 = vld [vmem:[%s374 + $0x68] sm:$0xff]
        %v389 = vld [vmem:[%s374 + $0x70] sm:$0xff]
        %v390 = vld [vmem:[%s374 + $0x78] sm:$0xff]
        %v391 = vld [vmem:[%s374 + $0x80] sm:$0xff]
        %v392 = vld [vmem:[%s374 + $0x88] sm:$0xff]
        %v393 = vld [vmem:[%s374 + $0x90] sm:$0xff]
        %v394 = vld [vmem:[%s374 + $0x98] sm:$0xff]
        %v395 = vld [vmem:[%s374 + $0xa0] sm:$0xff]
        %v396 = vld [vmem:[%s374 + $0xa8] sm:$0xff]
        %v397 = vld [vmem:[%s374 + $0xb0] sm:$0xff]
        %v398 = vld [vmem:[%s374 + $0xb8] sm:$0xff]
        %v399 = vld [vmem:[%s374 + $0xc0] sm:$0xff]
        %v400 = vld [vmem:[%s374 + $0xc8] sm:$0xff]
        %v401 = vld [vmem:[%s374 + $0xd0] sm:$0xff]
        %v402 = vld [vmem:[%s374 + $0xd8] sm:$0xff]
        %v403 = vld [vmem:[%s374 + $0xe0] sm:$0xff]
        %v404 = vld [vmem:[%s374 + $0xe8] sm:$0xff]
        %v405 = vld [vmem:[%s374 + $0xf0] sm:$0xff]
        %v406 = vld [vmem:[%s374 + $0xf8] sm:$0xff]
        %v411 = vunpack.c.l.b16 %v250
        %v412 = vunpack.c.h.b16 %v250
        %v413 = vunpack.c.l.b16 %v251
        %v414 = vunpack.c.h.b16 %v251
        %v415 = vunpack.c.l.b16 %v252
        %v416 = vunpack.c.h.b16 %v252
        %v417 = vunpack.c.l.b16 %v253
        %v418 = vunpack.c.h.b16 %v253
        %v419 = vpack.c.b16 %v413, %v411
        %v420 = vpack.c.b16 %v414, %v412
        %v421 = vpack.c.b16 %v417, %v415
        %v422 = vpack.c.b16 %v418, %v416
        %v459 = vunpack.c.l.b16 %v375
        %v460 = vunpack.c.h.b16 %v375
        %v461 = vunpack.c.l.b16 %v376
        %v462 = vunpack.c.h.b16 %v376
        %v463 = vunpack.c.l.b16 %v377
        %v464 = vunpack.c.h.b16 %v377
        %v465 = vunpack.c.l.b16 %v378
        %v466 = vunpack.c.h.b16 %v378
        %v467 = vunpack.c.l.b16 %v379
        %v468 = vunpack.c.h.b16 %v379
        %v469 = vunpack.c.l.b16 %v380
        %v470 = vunpack.c.h.b16 %v380
        %v471 = vunpack.c.l.b16 %v381
        %v472 = vunpack.c.h.b16 %v381
        %v473 = vunpack.c.l.b16 %v382
        %v474 = vunpack.c.h.b16 %v382
        %v475 = vunpack.c.l.b16 %v383
        %v476 = vunpack.c.h.b16 %v383
        %v477 = vunpack.c.l.b16 %v384
        %v478 = vunpack.c.h.b16 %v384
        %v479 = vunpack.c.l.b16 %v385
        %v480 = vunpack.c.h.b16 %v385
        %v481 = vunpack.c.l.b16 %v386
        %v482 = vunpack.c.h.b16 %v386
        %v483 = vunpack.c.l.b16 %v387
        %v484 = vunpack.c.h.b16 %v387
        %v485 = vunpack.c.l.b16 %v388
        %v486 = vunpack.c.h.b16 %v388
        %v487 = vunpack.c.l.b16 %v389
        %v488 = vunpack.c.h.b16 %v389
        %v489 = vunpack.c.l.b16 %v390
        %v490 = vunpack.c.h.b16 %v390
        %v491 = vunpack.c.l.b16 %v391
        %v492 = vunpack.c.h.b16 %v391
        %v493 = vunpack.c.l.b16 %v392
        %v494 = vunpack.c.h.b16 %v392
        %v495 = vunpack.c.l.b16 %v393
        %v496 = vunpack.c.h.b16 %v393
        %v497 = vunpack.c.l.b16 %v394
        %v498 = vunpack.c.h.b16 %v394
        %v499 = vunpack.c.l.b16 %v395
        %v500 = vunpack.c.h.b16 %v395
        %v501 = vunpack.c.l.b16 %v396
        %v502 = vunpack.c.h.b16 %v396
        %v503 = vunpack.c.l.b16 %v397
        %v504 = vunpack.c.h.b16 %v397
        %v505 = vunpack.c.l.b16 %v398
        %v506 = vunpack.c.h.b16 %v398
        %v507 = vunpack.c.l.b16 %v399
        %v508 = vunpack.c.h.b16 %v399
        %v509 = vunpack.c.l.b16 %v400
        %v510 = vunpack.c.h.b16 %v400
        %v511 = vunpack.c.l.b16 %v401
        %v512 = vunpack.c.h.b16 %v401
        %v513 = vunpack.c.l.b16 %v402
        %v514 = vunpack.c.h.b16 %v402
        %v515 = vunpack.c.l.b16 %v403
        %v516 = vunpack.c.h.b16 %v403
        %v517 = vunpack.c.l.b16 %v404
        %v518 = vunpack.c.h.b16 %v404
        %v519 = vunpack.c.l.b16 %v405
        %v520 = vunpack.c.h.b16 %v405
        %v521 = vunpack.c.l.b16 %v406
        %v522 = vunpack.c.h.b16 %v406
        %v523 = vpack.c.b16 %v461, %v459
        %v524 = vpack.c.b16 %v462, %v460
        %v525 = vpack.c.b16 %v465, %v463
        %v526 = vpack.c.b16 %v466, %v464
        %v527 = vpack.c.b16 %v469, %v467
        %v528 = vpack.c.b16 %v470, %v468
        %v529 = vpack.c.b16 %v473, %v471
        %v530 = vpack.c.b16 %v474, %v472
        %v531 = vpack.c.b16 %v477, %v475
        %v532 = vpack.c.b16 %v478, %v476
        %v533 = vpack.c.b16 %v481, %v479
        %v534 = vpack.c.b16 %v482, %v480
        %v535 = vpack.c.b16 %v485, %v483
        %v536 = vpack.c.b16 %v486, %v484
        %v537 = vpack.c.b16 %v489, %v487
        %v538 = vpack.c.b16 %v490, %v488
        %v539 = vpack.c.b16 %v493, %v491
        %v540 = vpack.c.b16 %v494, %v492
        %v541 = vpack.c.b16 %v497, %v495
        %v542 = vpack.c.b16 %v498, %v496
        %v543 = vpack.c.b16 %v501, %v499
        %v544 = vpack.c.b16 %v502, %v500
        %v545 = vpack.c.b16 %v505, %v503
        %v546 = vpack.c.b16 %v506, %v504
        %v547 = vpack.c.b16 %v509, %v507
        %v548 = vpack.c.b16 %v510, %v508
        %v549 = vpack.c.b16 %v513, %v511
        %v550 = vpack.c.b16 %v514, %v512
        %v551 = vpack.c.b16 %v517, %v515
        %v552 = vpack.c.b16 %v518, %v516
        %v553 = vpack.c.b16 %v521, %v519
        %v554 = vpack.c.b16 %v522, %v520
        %587 = vmatpush.bf16.msra.mxu0 %v537
        %588 = vmatpush.bf16.msra.mxu0 %v535
        %589 = vmatpush.bf16.msra.mxu0 %v533
        %590 = vmatpush.bf16.msra.mxu0 %v531
        %591 = vmatpush.bf16.msra.mxu0 %v529
        %592 = vmatpush.bf16.msra.mxu0 %v527
        %593 = vmatpush.bf16.msra.mxu0 %v525
        %594 = vmatpush.bf16.msra.mxu0 %v523
        %595 = vmatmul.bf16.gmra.mxu0 %v419
        %v596 = vpop.f32.mrf.mxu0
        %v597 = vadd.f32 0.0, %v596
        %v598 = vpop.f32.mrf.mxu0
        %v599 = vadd.f32 0.0, %v598
        %600 = vmatmul.bf16.gmra.mxu0 %v421
        %v601 = vpop.f32.mrf.mxu0
        %v602 = vadd.f32 0.0, %v601
        %v603 = vpop.f32.mrf.mxu0
        %v604 = vadd.f32 0.0, %v603
        %605 = vdwg.mxu0
        %606 = vmatpush.bf16.msra.mxu0 %v553
        %607 = vmatpush.bf16.msra.mxu0 %v551
        %608 = vmatpush.bf16.msra.mxu0 %v549
        %609 = vmatpush.bf16.msra.mxu0 %v547
        %610 = vmatpush.bf16.msra.mxu0 %v545
        %611 = vmatpush.bf16.msra.mxu0 %v543
        %612 = vmatpush.bf16.msra.mxu0 %v541
        %613 = vmatpush.bf16.msra.mxu0 %v539
        %614 = vmatmul.bf16.gmra.mxu0 %v420
        %v615 = vpop.f32.mrf.mxu0
        %v616 = vadd.f32 %v597, %v615
        %v617 = vpop.f32.mrf.mxu0
        %v618 = vadd.f32 %v599, %v617
        %619 = vmatmul.bf16.gmra.mxu0 %v422
        %v620 = vpop.f32.mrf.mxu0
        %v621 = vadd.f32 %v602, %v620
        %v622 = vpop.f32.mrf.mxu0
        %v623 = vadd.f32 %v604, %v622
        %624 = vdwg.mxu0
        %625 = vmatpush.bf16.msra.mxu0 %v538
        %626 = vmatpush.bf16.msra.mxu0 %v536
        %627 = vmatpush.bf16.msra.mxu0 %v534
        %628 = vmatpush.bf16.msra.mxu0 %v532
        %629 = vmatpush.bf16.msra.mxu0 %v530
        %630 = vmatpush.bf16.msra.mxu0 %v528
        %631 = vmatpush.bf16.msra.mxu0 %v526
        %632 = vmatpush.bf16.msra.mxu0 %v524
        %633 = vmatmul.bf16.gmra.mxu0 %v419
        %v634 = vpop.f32.mrf.mxu0
        %v635 = vadd.f32 0.0, %v634
        %v636 = vpop.f32.mrf.mxu0
        %v637 = vadd.f32 0.0, %v636
        %638 = vmatmul.bf16.gmra.mxu0 %v421
        %v639 = vpop.f32.mrf.mxu0
        %v640 = vadd.f32 0.0, %v639
        %v641 = vpop.f32.mrf.mxu0
        %v642 = vadd.f32 0.0, %v641
        %643 = vdwg.mxu0
        %644 = vmatpush.bf16.msra.mxu0 %v554
        %645 = vmatpush.bf16.msra.mxu0 %v552
        %646 = vmatpush.bf16.msra.mxu0 %v550
        %647 = vmatpush.bf16.msra.mxu0 %v548
        %648 = vmatpush.bf16.msra.mxu0 %v546
        %649 = vmatpush.bf16.msra.mxu0 %v544
        %650 = vmatpush.bf16.msra.mxu0 %v542
        %651 = vmatpush.bf16.msra.mxu0 %v540
        %652 = vmatmul.bf16.gmra.mxu0 %v420
        %v653 = vpop.f32.mrf.mxu0
        %v654 = vadd.f32 %v635, %v653
        %v655 = vpop.f32.mrf.mxu0
        %v656 = vadd.f32 %v637, %v655
        %657 = vmatmul.bf16.gmra.mxu0 %v422
        %v658 = vpop.f32.mrf.mxu0
        %v659 = vadd.f32 %v640, %v658
        %v660 = vpop.f32.mrf.mxu0
        %v661 = vadd.f32 %v642, %v660
        %662 = vdwg.mxu0
        %v667 = vunpack.c.l.b16 %v240
        %v668 = vunpack.c.h.b16 %v240
        %v669 = vunpack.c.l.b16 %v241
        %v670 = vunpack.c.h.b16 %v241
        %v671 = vunpack.c.l.b16 %v242
        %v672 = vunpack.c.h.b16 %v242
        %v673 = vunpack.c.l.b16 %v243
        %v674 = vunpack.c.h.b16 %v243
        %v675 = vpack.c.b16 %v669, %v667
        %v676 = vpack.c.b16 %v670, %v668
        %v677 = vpack.c.b16 %v673, %v671
        %v678 = vpack.c.b16 %v674, %v672
        %v715 = vunpack.c.l.b16 %v342
        %v716 = vunpack.c.h.b16 %v342
        %v717 = vunpack.c.l.b16 %v343
        %v718 = vunpack.c.h.b16 %v343
        %v719 = vunpack.c.l.b16 %v344
        %v720 = vunpack.c.h.b16 %v344
        %v721 = vunpack.c.l.b16 %v345
        %v722 = vunpack.c.h.b16 %v345
        %v723 = vunpack.c.l.b16 %v346
        %v724 = vunpack.c.h.b16 %v346
        %v725 = vunpack.c.l.b16 %v347
        %v726 = vunpack.c.h.b16 %v347
        %v727 = vunpack.c.l.b16 %v348
        %v728 = vunpack.c.h.b16 %v348
        %v729 = vunpack.c.l.b16 %v349
        %v730 = vunpack.c.h.b16 %v349
        %v731 = vunpack.c.l.b16 %v350
        %v732 = vunpack.c.h.b16 %v350
        %v733 = vunpack.c.l.b16 %v351
        %v734 = vunpack.c.h.b16 %v351
        %v735 = vunpack.c.l.b16 %v352
        %v736 = vunpack.c.h.b16 %v352
        %v737 = vunpack.c.l.b16 %v353
        %v738 = vunpack.c.h.b16 %v353
        %v739 = vunpack.c.l.b16 %v354
        %v740 = vunpack.c.h.b16 %v354
        %v741 = vunpack.c.l.b16 %v355
        %v742 = vunpack.c.h.b16 %v355
        %v743 = vunpack.c.l.b16 %v356
        %v744 = vunpack.c.h.b16 %v356
        %v745 = vunpack.c.l.b16 %v357
        %v746 = vunpack.c.h.b16 %v357
        %v747 = vunpack.c.l.b16 %v358
        %v748 = vunpack.c.h.b16 %v358
        %v749 = vunpack.c.l.b16 %v359
        %v750 = vunpack.c.h.b16 %v359
        %v751 = vunpack.c.l.b16 %v360
        %v752 = vunpack.c.h.b16 %v360
        %v753 = vunpack.c.l.b16 %v361
        %v754 = vunpack.c.h.b16 %v361
        %v755 = vunpack.c.l.b16 %v362
        %v756 = vunpack.c.h.b16 %v362
        %v757 = vunpack.c.l.b16 %v363
        %v758 = vunpack.c.h.b16 %v363
        %v759 = vunpack.c.l.b16 %v364
        %v760 = vunpack.c.h.b16 %v364
        %v761 = vunpack.c.l.b16 %v365
        %v762 = vunpack.c.h.b16 %v365
        %v763 = vunpack.c.l.b16 %v366
        %v764 = vunpack.c.h.b16 %v366
        %v765 = vunpack.c.l.b16 %v367
        %v766 = vunpack.c.h.b16 %v367
        %v767 = vunpack.c.l.b16 %v368
        %v768 = vunpack.c.h.b16 %v368
        %v769 = vunpack.c.l.b16 %v369
        %v770 = vunpack.c.h.b16 %v369
        %v771 = vunpack.c.l.b16 %v370
        %v772 = vunpack.c.h.b16 %v370
        %v773 = vunpack.c.l.b16 %v371
        %v774 = vunpack.c.h.b16 %v371
        %v775 = vunpack.c.l.b16 %v372
        %v776 = vunpack.c.h.b16 %v372
        %v777 = vunpack.c.l.b16 %v373
        %v778 = vunpack.c.h.b16 %v373
        %v779 = vpack.c.b16 %v717, %v715
        %v780 = vpack.c.b16 %v718, %v716
        %v781 = vpack.c.b16 %v721, %v719
        %v782 = vpack.c.b16 %v722, %v720
        %v783 = vpack.c.b16 %v725, %v723
        %v784 = vpack.c.b16 %v726, %v724
        %v785 = vpack.c.b16 %v729, %v727
        %v786 = vpack.c.b16 %v730, %v728
        %v787 = vpack.c.b16 %v733, %v731
        %v788 = vpack.c.b16 %v734, %v732
        %v789 = vpack.c.b16 %v737, %v735
        %v790 = vpack.c.b16 %v738, %v736
        %v791 = vpack.c.b16 %v741, %v739
        %v792 = vpack.c.b16 %v742, %v740
        %v793 = vpack.c.b16 %v745, %v743
        %v794 = vpack.c.b16 %v746, %v744
        %v795 = vpack.c.b16 %v749, %v747
        %v796 = vpack.c.b16 %v750, %v748
        %v797 = vpack.c.b16 %v753, %v751
        %v798 = vpack.c.b16 %v754, %v752
        %v799 = vpack.c.b16 %v757, %v755
        %v800 = vpack.c.b16 %v758, %v756
        %v801 = vpack.c.b16 %v761, %v759
        %v802 = vpack.c.b16 %v762, %v760
        %v803 = vpack.c.b16 %v765, %v763
        %v804 = vpack.c.b16 %v766, %v764
        %v805 = vpack.c.b16 %v769, %v767
        %v806 = vpack.c.b16 %v770, %v768
        %v807 = vpack.c.b16 %v773, %v771
        %v808 = vpack.c.b16 %v774, %v772
        %v809 = vpack.c.b16 %v777, %v775
        %v810 = vpack.c.b16 %v778, %v776
        %843 = vmatpush.bf16.msra.mxu0 %v793
        %844 = vmatpush.bf16.msra.mxu0 %v791
        %845 = vmatpush.bf16.msra.mxu0 %v789
        %846 = vmatpush.bf16.msra.mxu0 %v787
        %847 = vmatpush.bf16.msra.mxu0 %v785
        %848 = vmatpush.bf16.msra.mxu0 %v783
        %849 = vmatpush.bf16.msra.mxu0 %v781
        %850 = vmatpush.bf16.msra.mxu0 %v779
        %851 = vmatmul.bf16.gmra.mxu0 %v675
        %v852 = vpop.f32.mrf.mxu0
        %v853 = vadd.f32 %v616, %v852
        %v854 = vpop.f32.mrf.mxu0
        %v855 = vadd.f32 %v618, %v854
        %856 = vmatmul.bf16.gmra.mxu0 %v677
        %v857 = vpop.f32.mrf.mxu0
        %v858 = vadd.f32 %v621, %v857
        %v859 = vpop.f32.mrf.mxu0
        %v860 = vadd.f32 %v623, %v859
        %861 = vdwg.mxu0
        %862 = vmatpush.bf16.msra.mxu0 %v809
        %863 = vmatpush.bf16.msra.mxu0 %v807
        %864 = vmatpush.bf16.msra.mxu0 %v805
        %865 = vmatpush.bf16.msra.mxu0 %v803
        %866 = vmatpush.bf16.msra.mxu0 %v801
        %867 = vmatpush.bf16.msra.mxu0 %v799
        %868 = vmatpush.bf16.msra.mxu0 %v797
        %869 = vmatpush.bf16.msra.mxu0 %v795
        %870 = vmatmul.bf16.gmra.mxu0 %v676
        %v871 = vpop.f32.mrf.mxu0
        %v872 = vadd.f32 %v853, %v871
        %v873 = vpop.f32.mrf.mxu0
        %v874 = vadd.f32 %v855, %v873
        %875 = vmatmul.bf16.gmra.mxu0 %v678
        %v876 = vpop.f32.mrf.mxu0
        %v877 = vadd.f32 %v858, %v876
        %v878 = vpop.f32.mrf.mxu0
        %v879 = vadd.f32 %v860, %v878
        %880 = vdwg.mxu0
        %881 = vmatpush.bf16.msra.mxu0 %v794
        %882 = vmatpush.bf16.msra.mxu0 %v792
        %883 = vmatpush.bf16.msra.mxu0 %v790
        %884 = vmatpush.bf16.msra.mxu0 %v788
        %885 = vmatpush.bf16.msra.mxu0 %v786
        %886 = vmatpush.bf16.msra.mxu0 %v784
        %887 = vmatpush.bf16.msra.mxu0 %v782
        %888 = vmatpush.bf16.msra.mxu0 %v780
        %889 = vmatmul.bf16.gmra.mxu0 %v675
        %v890 = vpop.f32.mrf.mxu0
        %v891 = vadd.f32 %v654, %v890
        %v892 = vpop.f32.mrf.mxu0
        %v893 = vadd.f32 %v656, %v892
        %894 = vmatmul.bf16.gmra.mxu0 %v677
        %v895 = vpop.f32.mrf.mxu0
        %v896 = vadd.f32 %v659, %v895
        %v897 = vpop.f32.mrf.mxu0
        %v898 = vadd.f32 %v661, %v897
        %899 = vdwg.mxu0
        %900 = vmatpush.bf16.msra.mxu0 %v810
        %901 = vmatpush.bf16.msra.mxu0 %v808
        %902 = vmatpush.bf16.msra.mxu0 %v806
        %903 = vmatpush.bf16.msra.mxu0 %v804
        %904 = vmatpush.bf16.msra.mxu0 %v802
        %905 = vmatpush.bf16.msra.mxu0 %v800
        %906 = vmatpush.bf16.msra.mxu0 %v798
        %907 = vmatpush.bf16.msra.mxu0 %v796
        %908 = vmatmul.bf16.gmra.mxu0 %v676
        %v909 = vpop.f32.mrf.mxu0
        %v910 = vadd.f32 %v891, %v909
        %v911 = vpop.f32.mrf.mxu0
        %v912 = vadd.f32 %v893, %v911
        %913 = vmatmul.bf16.gmra.mxu0 %v678
        %v914 = vpop.f32.mrf.mxu0
        %v915 = vadd.f32 %v896, %v914
        %v916 = vpop.f32.mrf.mxu0
        %v917 = vadd.f32 %v898, %v916
        %918 = vdwg.mxu0
        %s919 = scalar_lea.vmem %s1, 1792
        %v920 = vld [vmem:[%s919] sm:$0xff]
        %v921 = vld [vmem:[%s919 + $0x8] sm:$0xff]
        %v922 = vld [vmem:[%s919 + $0x10] sm:$0xff]
        %v923 = vld [vmem:[%s919 + $0x18] sm:$0xff]
        %v924 = vld [vmem:[%s919 + $0x20] sm:$0xff]
        %v925 = vld [vmem:[%s919 + $0x28] sm:$0xff]
        %v926 = vld [vmem:[%s919 + $0x30] sm:$0xff]
        %v927 = vld [vmem:[%s919 + $0x38] sm:$0xff]
        %v928 = vld [vmem:[%s919 + $0x40] sm:$0xff]
        %v929 = vld [vmem:[%s919 + $0x48] sm:$0xff]
        %v930 = vld [vmem:[%s919 + $0x50] sm:$0xff]
        %v931 = vld [vmem:[%s919 + $0x58] sm:$0xff]
        %v932 = vld [vmem:[%s919 + $0x60] sm:$0xff]
        %v933 = vld [vmem:[%s919 + $0x68] sm:$0xff]
        %v934 = vld [vmem:[%s919 + $0x70] sm:$0xff]
        %v935 = vld [vmem:[%s919 + $0x78] sm:$0xff]
        %v936 = vld [vmem:[%s919 + $0x80] sm:$0xff]
        %v937 = vld [vmem:[%s919 + $0x88] sm:$0xff]
        %v938 = vld [vmem:[%s919 + $0x90] sm:$0xff]
        %v939 = vld [vmem:[%s919 + $0x98] sm:$0xff]
        %v940 = vld [vmem:[%s919 + $0xa0] sm:$0xff]
        %v941 = vld [vmem:[%s919 + $0xa8] sm:$0xff]
        %v942 = vld [vmem:[%s919 + $0xb0] sm:$0xff]
        %v943 = vld [vmem:[%s919 + $0xb8] sm:$0xff]
        %v944 = vld [vmem:[%s919 + $0xc0] sm:$0xff]
        %v945 = vld [vmem:[%s919 + $0xc8] sm:$0xff]
        %v946 = vld [vmem:[%s919 + $0xd0] sm:$0xff]
        %v947 = vld [vmem:[%s919 + $0xd8] sm:$0xff]
        %v948 = vld [vmem:[%s919 + $0xe0] sm:$0xff]
        %v949 = vld [vmem:[%s919 + $0xe8] sm:$0xff]
        %v950 = vld [vmem:[%s919 + $0xf0] sm:$0xff]
        %v951 = vld [vmem:[%s919 + $0xf8] sm:$0xff]
        %v956 = vunpack.c.l.b16 %v260
        %v957 = vunpack.c.h.b16 %v260
        %v958 = vunpack.c.l.b16 %v261
        %v959 = vunpack.c.h.b16 %v261
        %v960 = vunpack.c.l.b16 %v262
        %v961 = vunpack.c.h.b16 %v262
        %v962 = vunpack.c.l.b16 %v263
        %v963 = vunpack.c.h.b16 %v263
        %v964 = vpack.c.b16 %v958, %v956
        %v965 = vpack.c.b16 %v959, %v957
        %v966 = vpack.c.b16 %v962, %v960
        %v967 = vpack.c.b16 %v963, %v961
        %v1004 = vunpack.c.l.b16 %v920
        %v1005 = vunpack.c.h.b16 %v920
        %v1006 = vunpack.c.l.b16 %v921
        %v1007 = vunpack.c.h.b16 %v921
        %v1008 = vunpack.c.l.b16 %v922
        %v1009 = vunpack.c.h.b16 %v922
        %v1010 = vunpack.c.l.b16 %v923
        %v1011 = vunpack.c.h.b16 %v923
        %v1012 = vunpack.c.l.b16 %v924
        %v1013 = vunpack.c.h.b16 %v924
        %v1014 = vunpack.c.l.b16 %v925
        %v1015 = vunpack.c.h.b16 %v925
        %v1016 = vunpack.c.l.b16 %v926
        %v1017 = vunpack.c.h.b16 %v926
        %v1018 = vunpack.c.l.b16 %v927
        %v1019 = vunpack.c.h.b16 %v927
        %v1020 = vunpack.c.l.b16 %v928
        %v1021 = vunpack.c.h.b16 %v928
        %v1022 = vunpack.c.l.b16 %v929
        %v1023 = vunpack.c.h.b16 %v929
        %v1024 = vunpack.c.l.b16 %v930
        %v1025 = vunpack.c.h.b16 %v930
        %v1026 = vunpack.c.l.b16 %v931
        %v1027 = vunpack.c.h.b16 %v931
        %v1028 = vunpack.c.l.b16 %v932
        %v1029 = vunpack.c.h.b16 %v932
        %v1030 = vunpack.c.l.b16 %v933
        %v1031 = vunpack.c.h.b16 %v933
        %v1032 = vunpack.c.l.b16 %v934
        %v1033 = vunpack.c.h.b16 %v934
        %v1034 = vunpack.c.l.b16 %v935
        %v1035 = vunpack.c.h.b16 %v935
        %v1036 = vunpack.c.l.b16 %v936
        %v1037 = vunpack.c.h.b16 %v936
        %v1038 = vunpack.c.l.b16 %v937
        %v1039 = vunpack.c.h.b16 %v937
        %v1040 = vunpack.c.l.b16 %v938
        %v1041 = vunpack.c.h.b16 %v938
        %v1042 = vunpack.c.l.b16 %v939
        %v1043 = vunpack.c.h.b16 %v939
        %v1044 = vunpack.c.l.b16 %v940
        %v1045 = vunpack.c.h.b16 %v940
        %v1046 = vunpack.c.l.b16 %v941
        %v1047 = vunpack.c.h.b16 %v941
        %v1048 = vunpack.c.l.b16 %v942
        %v1049 = vunpack.c.h.b16 %v942
        %v1050 = vunpack.c.l.b16 %v943
        %v1051 = vunpack.c.h.b16 %v943
        %v1052 = vunpack.c.l.b16 %v944
        %v1053 = vunpack.c.h.b16 %v944
        %v1054 = vunpack.c.l.b16 %v945
        %v1055 = vunpack.c.h.b16 %v945
        %v1056 = vunpack.c.l.b16 %v946
        %v1057 = vunpack.c.h.b16 %v946
        %v1058 = vunpack.c.l.b16 %v947
        %v1059 = vunpack.c.h.b16 %v947
        %v1060 = vunpack.c.l.b16 %v948
        %v1061 = vunpack.c.h.b16 %v948
        %v1062 = vunpack.c.l.b16 %v949
        %v1063 = vunpack.c.h.b16 %v949
        %v1064 = vunpack.c.l.b16 %v950
        %v1065 = vunpack.c.h.b16 %v950
        %v1066 = vunpack.c.l.b16 %v951
        %v1067 = vunpack.c.h.b16 %v951
        %v1068 = vpack.c.b16 %v1006, %v1004
        %v1069 = vpack.c.b16 %v1007, %v1005
        %v1070 = vpack.c.b16 %v1010, %v1008
        %v1071 = vpack.c.b16 %v1011, %v1009
        %v1072 = vpack.c.b16 %v1014, %v1012
        %v1073 = vpack.c.b16 %v1015, %v1013
        %v1074 = vpack.c.b16 %v1018, %v1016
        %v1075 = vpack.c.b16 %v1019, %v1017
        %v1076 = vpack.c.b16 %v1022, %v1020
        %v1077 = vpack.c.b16 %v1023, %v1021
        %v1078 = vpack.c.b16 %v1026, %v1024
        %v1079 = vpack.c.b16 %v1027, %v1025
        %v1080 = vpack.c.b16 %v1030, %v1028
        %v1081 = vpack.c.b16 %v1031, %v1029
        %v1082 = vpack.c.b16 %v1034, %v1032
        %v1083 = vpack.c.b16 %v1035, %v1033
        %v1084 = vpack.c.b16 %v1038, %v1036
        %v1085 = vpack.c.b16 %v1039, %v1037
        %v1086 = vpack.c.b16 %v1042, %v1040
        %v1087 = vpack.c.b16 %v1043, %v1041
        %v1088 = vpack.c.b16 %v1046, %v1044
        %v1089 = vpack.c.b16 %v1047, %v1045
        %v1090 = vpack.c.b16 %v1050, %v1048
        %v1091 = vpack.c.b16 %v1051, %v1049
        %v1092 = vpack.c.b16 %v1054, %v1052
        %v1093 = vpack.c.b16 %v1055, %v1053
        %v1094 = vpack.c.b16 %v1058, %v1056
        %v1095 = vpack.c.b16 %v1059, %v1057
        %v1096 = vpack.c.b16 %v1062, %v1060
        %v1097 = vpack.c.b16 %v1063, %v1061
        %v1098 = vpack.c.b16 %v1066, %v1064
        %v1099 = vpack.c.b16 %v1067, %v1065
        %1132 = vmatpush.bf16.msra.mxu0 %v1082
        %1133 = vmatpush.bf16.msra.mxu0 %v1080
        %1134 = vmatpush.bf16.msra.mxu0 %v1078
        %1135 = vmatpush.bf16.msra.mxu0 %v1076
        %1136 = vmatpush.bf16.msra.mxu0 %v1074
        %1137 = vmatpush.bf16.msra.mxu0 %v1072
        %1138 = vmatpush.bf16.msra.mxu0 %v1070
        %1139 = vmatpush.bf16.msra.mxu0 %v1068
        %1140 = vmatmul.bf16.gmra.mxu0 %v964
        %v1141 = vpop.f32.mrf.mxu0
        %v1142 = vadd.f32 0.0, %v1141
        %v1143 = vpop.f32.mrf.mxu0
        %v1144 = vadd.f32 0.0, %v1143
        %1145 = vmatmul.bf16.gmra.mxu0 %v966
        %v1146 = vpop.f32.mrf.mxu0
        %v1147 = vadd.f32 0.0, %v1146
        %v1148 = vpop.f32.mrf.mxu0
        %v1149 = vadd.f32 0.0, %v1148
        %1150 = vdwg.mxu0
        %1151 = vmatpush.bf16.msra.mxu0 %v1098
        %1152 = vmatpush.bf16.msra.mxu0 %v1096
        %1153 = vmatpush.bf16.msra.mxu0 %v1094
        %1154 = vmatpush.bf16.msra.mxu0 %v1092
        %1155 = vmatpush.bf16.msra.mxu0 %v1090
        %1156 = vmatpush.bf16.msra.mxu0 %v1088
        %1157 = vmatpush.bf16.msra.mxu0 %v1086
        %1158 = vmatpush.bf16.msra.mxu0 %v1084
        %1159 = vmatmul.bf16.gmra.mxu0 %v965
        %v1160 = vpop.f32.mrf.mxu0
        %v1161 = vadd.f32 %v1142, %v1160
        %v1162 = vpop.f32.mrf.mxu0
        %v1163 = vadd.f32 %v1144, %v1162
        %1164 = vmatmul.bf16.gmra.mxu0 %v967
        %v1165 = vpop.f32.mrf.mxu0
        %v1166 = vadd.f32 %v1147, %v1165
        %v1167 = vpop.f32.mrf.mxu0
        %v1168 = vadd.f32 %v1149, %v1167
        %1169 = vdwg.mxu0
        %1170 = vmatpush.bf16.msra.mxu0 %v1083
        %1171 = vmatpush.bf16.msra.mxu0 %v1081
        %1172 = vmatpush.bf16.msra.mxu0 %v1079
        %1173 = vmatpush.bf16.msra.mxu0 %v1077
        %1174 = vmatpush.bf16.msra.mxu0 %v1075
        %1175 = vmatpush.bf16.msra.mxu0 %v1073
        %1176 = vmatpush.bf16.msra.mxu0 %v1071
        %1177 = vmatpush.bf16.msra.mxu0 %v1069
        %1178 = vmatmul.bf16.gmra.mxu0 %v964
        %v1179 = vpop.f32.mrf.mxu0
        %v1180 = vadd.f32 0.0, %v1179
        %v1181 = vpop.f32.mrf.mxu0
        %v1182 = vadd.f32 0.0, %v1181
        %1183 = vmatmul.bf16.gmra.mxu0 %v966
        %v1184 = vpop.f32.mrf.mxu0
        %v1185 = vadd.f32 0.0, %v1184
        %v1186 = vpop.f32.mrf.mxu0
        %v1187 = vadd.f32 0.0, %v1186
        %1188 = vdwg.mxu0
        %1189 = vmatpush.bf16.msra.mxu0 %v1099
        %1190 = vmatpush.bf16.msra.mxu0 %v1097
        %1191 = vmatpush.bf16.msra.mxu0 %v1095
        %1192 = vmatpush.bf16.msra.mxu0 %v1093
        %1193 = vmatpush.bf16.msra.mxu0 %v1091
        %1194 = vmatpush.bf16.msra.mxu0 %v1089
        %1195 = vmatpush.bf16.msra.mxu0 %v1087
        %1196 = vmatpush.bf16.msra.mxu0 %v1085
        %1197 = vmatmul.bf16.gmra.mxu0 %v965
        %v1198 = vpop.f32.mrf.mxu0
        %v1199 = vadd.f32 %v1180, %v1198
        %v1200 = vpop.f32.mrf.mxu0
        %v1201 = vadd.f32 %v1182, %v1200
        %1202 = vmatmul.bf16.gmra.mxu0 %v967
        %v1203 = vpop.f32.mrf.mxu0
        %v1204 = vadd.f32 %v1185, %v1203
        %v1205 = vpop.f32.mrf.mxu0
        %v1206 = vadd.f32 %v1187, %v1205
        %1207 = vdwg.mxu0
        %v1208 = vadd.f32 %v872, %v1161
        %v1209 = vadd.f32 %v910, %v1199
        %v1210 = vadd.f32 %v874, %v1163
        %v1211 = vadd.f32 %v912, %v1201
        %v1212 = vadd.f32 %v877, %v1166
        %v1213 = vadd.f32 %v915, %v1204
        %v1214 = vadd.f32 %v879, %v1168
        %v1215 = vadd.f32 %v917, %v1206
        %v1216 = vld [vmem:[%s1] sm:$0xff]
        %v1217 = vld [vmem:[%s1 + $0x8] sm:$0xff]
        %v1218 = vld [vmem:[%s1 + $0x10] sm:$0xff]
        %v1219 = vld [vmem:[%s1 + $0x18] sm:$0xff]
        %v1220 = vld [vmem:[%s1 + $0x20] sm:$0xff]
        %v1221 = vld [vmem:[%s1 + $0x28] sm:$0xff]
        %v1222 = vld [vmem:[%s1 + $0x30] sm:$0xff]
        %v1223 = vld [vmem:[%s1 + $0x38] sm:$0xff]
        %v1224 = vld [vmem:[%s1 + $0x40] sm:$0xff]
        %v1225 = vld [vmem:[%s1 + $0x48] sm:$0xff]
        %v1226 = vld [vmem:[%s1 + $0x50] sm:$0xff]
        %v1227 = vld [vmem:[%s1 + $0x58] sm:$0xff]
        %v1228 = vld [vmem:[%s1 + $0x60] sm:$0xff]
        %v1229 = vld [vmem:[%s1 + $0x68] sm:$0xff]
        %v1230 = vld [vmem:[%s1 + $0x70] sm:$0xff]
        %v1231 = vld [vmem:[%s1 + $0x78] sm:$0xff]
        %v1232 = vld [vmem:[%s1 + $0x80] sm:$0xff]
        %v1233 = vld [vmem:[%s1 + $0x88] sm:$0xff]
        %v1234 = vld [vmem:[%s1 + $0x90] sm:$0xff]
        %v1235 = vld [vmem:[%s1 + $0x98] sm:$0xff]
        %v1236 = vld [vmem:[%s1 + $0xa0] sm:$0xff]
        %v1237 = vld [vmem:[%s1 + $0xa8] sm:$0xff]
        %v1238 = vld [vmem:[%s1 + $0xb0] sm:$0xff]
        %v1239 = vld [vmem:[%s1 + $0xb8] sm:$0xff]
        %v1240 = vld [vmem:[%s1 + $0xc0] sm:$0xff]
        %v1241 = vld [vmem:[%s1 + $0xc8] sm:$0xff]
        %v1242 = vld [vmem:[%s1 + $0xd0] sm:$0xff]
        %v1243 = vld [vmem:[%s1 + $0xd8] sm:$0xff]
        %v1244 = vld [vmem:[%s1 + $0xe0] sm:$0xff]
        %v1245 = vld [vmem:[%s1 + $0xe8] sm:$0xff]
        %v1246 = vld [vmem:[%s1 + $0xf0] sm:$0xff]
        %v1247 = vld [vmem:[%s1 + $0xf8] sm:$0xff]
        %s1248 = scalar_lea.vmem %s1, 768
        %v1249 = vld [vmem:[%s1248] sm:$0xff]
        %v1250 = vld [vmem:[%s1248 + $0x8] sm:$0xff]
        %v1251 = vld [vmem:[%s1248 + $0x10] sm:$0xff]
        %v1252 = vld [vmem:[%s1248 + $0x18] sm:$0xff]
        %v1253 = vld [vmem:[%s1248 + $0x20] sm:$0xff]
        %v1254 = vld [vmem:[%s1248 + $0x28] sm:$0xff]
        %v1255 = vld [vmem:[%s1248 + $0x30] sm:$0xff]
        %v1256 = vld [vmem:[%s1248 + $0x38] sm:$0xff]
        %v1257 = vld [vmem:[%s1248 + $0x40] sm:$0xff]
        %v1258 = vld [vmem:[%s1248 + $0x48] sm:$0xff]
        %v1259 = vld [vmem:[%s1248 + $0x50] sm:$0xff]
        %v1260 = vld [vmem:[%s1248 + $0x58] sm:$0xff]
        %v1261 = vld [vmem:[%s1248 + $0x60] sm:$0xff]
        %v1262 = vld [vmem:[%s1248 + $0x68] sm:$0xff]
        %v1263 = vld [vmem:[%s1248 + $0x70] sm:$0xff]
        %v1264 = vld [vmem:[%s1248 + $0x78] sm:$0xff]
        %v1265 = vld [vmem:[%s1248 + $0x80] sm:$0xff]
        %v1266 = vld [vmem:[%s1248 + $0x88] sm:$0xff]
        %v1267 = vld [vmem:[%s1248 + $0x90] sm:$0xff]
        %v1268 = vld [vmem:[%s1248 + $0x98] sm:$0xff]
        %v1269 = vld [vmem:[%s1248 + $0xa0] sm:$0xff]
        %v1270 = vld [vmem:[%s1248 + $0xa8] sm:$0xff]
        %v1271 = vld [vmem:[%s1248 + $0xb0] sm:$0xff]
        %v1272 = vld [vmem:[%s1248 + $0xb8] sm:$0xff]
        %v1273 = vld [vmem:[%s1248 + $0xc0] sm:$0xff]
        %v1274 = vld [vmem:[%s1248 + $0xc8] sm:$0xff]
        %v1275 = vld [vmem:[%s1248 + $0xd0] sm:$0xff]
        %v1276 = vld [vmem:[%s1248 + $0xd8] sm:$0xff]
        %v1277 = vld [vmem:[%s1248 + $0xe0] sm:$0xff]
        %v1278 = vld [vmem:[%s1248 + $0xe8] sm:$0xff]
        %v1279 = vld [vmem:[%s1248 + $0xf0] sm:$0xff]
        %v1280 = vld [vmem:[%s1248 + $0xf8] sm:$0xff]
        %v1313 = vunpack.c.l.b16 %v1249
        %v1314 = vunpack.c.h.b16 %v1249
        %v1315 = vunpack.c.l.b16 %v1250
        %v1316 = vunpack.c.h.b16 %v1250
        %v1317 = vunpack.c.l.b16 %v1251
        %v1318 = vunpack.c.h.b16 %v1251
        %v1319 = vunpack.c.l.b16 %v1252
        %v1320 = vunpack.c.h.b16 %v1252
        %v1321 = vunpack.c.l.b16 %v1253
        %v1322 = vunpack.c.h.b16 %v1253
        %v1323 = vunpack.c.l.b16 %v1254
        %v1324 = vunpack.c.h.b16 %v1254
        %v1325 = vunpack.c.l.b16 %v1255
        %v1326 = vunpack.c.h.b16 %v1255
        %v1327 = vunpack.c.l.b16 %v1256
        %v1328 = vunpack.c.h.b16 %v1256
        %v1329 = vunpack.c.l.b16 %v1257
        %v1330 = vunpack.c.h.b16 %v1257
        %v1331 = vunpack.c.l.b16 %v1258
        %v1332 = vunpack.c.h.b16 %v1258
        %v1333 = vunpack.c.l.b16 %v1259
        %v1334 = vunpack.c.h.b16 %v1259
        %v1335 = vunpack.c.l.b16 %v1260
        %v1336 = vunpack.c.h.b16 %v1260
        %v1337 = vunpack.c.l.b16 %v1261
        %v1338 = vunpack.c.h.b16 %v1261
        %v1339 = vunpack.c.l.b16 %v1262
        %v1340 = vunpack.c.h.b16 %v1262
        %v1341 = vunpack.c.l.b16 %v1263
        %v1342 = vunpack.c.h.b16 %v1263
        %v1343 = vunpack.c.l.b16 %v1264
        %v1344 = vunpack.c.h.b16 %v1264
        %v1345 = vunpack.c.l.b16 %v1265
        %v1346 = vunpack.c.h.b16 %v1265
        %v1347 = vunpack.c.l.b16 %v1266
        %v1348 = vunpack.c.h.b16 %v1266
        %v1349 = vunpack.c.l.b16 %v1267
        %v1350 = vunpack.c.h.b16 %v1267
        %v1351 = vunpack.c.l.b16 %v1268
        %v1352 = vunpack.c.h.b16 %v1268
        %v1353 = vunpack.c.l.b16 %v1269
        %v1354 = vunpack.c.h.b16 %v1269
        %v1355 = vunpack.c.l.b16 %v1270
        %v1356 = vunpack.c.h.b16 %v1270
        %v1357 = vunpack.c.l.b16 %v1271
        %v1358 = vunpack.c.h.b16 %v1271
        %v1359 = vunpack.c.l.b16 %v1272
        %v1360 = vunpack.c.h.b16 %v1272
        %v1361 = vunpack.c.l.b16 %v1273
        %v1362 = vunpack.c.h.b16 %v1273
        %v1363 = vunpack.c.l.b16 %v1274
        %v1364 = vunpack.c.h.b16 %v1274
        %v1365 = vunpack.c.l.b16 %v1275
        %v1366 = vunpack.c.h.b16 %v1275
        %v1367 = vunpack.c.l.b16 %v1276
        %v1368 = vunpack.c.h.b16 %v1276
        %v1369 = vunpack.c.l.b16 %v1277
        %v1370 = vunpack.c.h.b16 %v1277
        %v1371 = vunpack.c.l.b16 %v1278
        %v1372 = vunpack.c.h.b16 %v1278
        %v1373 = vunpack.c.l.b16 %v1279
        %v1374 = vunpack.c.h.b16 %v1279
        %v1375 = vunpack.c.l.b16 %v1280
        %v1376 = vunpack.c.h.b16 %v1280
        %v1377 = vpack.c.b16 %v1315, %v1313
        %v1378 = vpack.c.b16 %v1316, %v1314
        %v1379 = vpack.c.b16 %v1319, %v1317
        %v1380 = vpack.c.b16 %v1320, %v1318
        %v1381 = vpack.c.b16 %v1323, %v1321
        %v1382 = vpack.c.b16 %v1324, %v1322
        %v1383 = vpack.c.b16 %v1327, %v1325
        %v1384 = vpack.c.b16 %v1328, %v1326
        %v1385 = vpack.c.b16 %v1331, %v1329
        %v1386 = vpack.c.b16 %v1332, %v1330
        %v1387 = vpack.c.b16 %v1335, %v1333
        %v1388 = vpack.c.b16 %v1336, %v1334
        %v1389 = vpack.c.b16 %v1339, %v1337
        %v1390 = vpack.c.b16 %v1340, %v1338
        %v1391 = vpack.c.b16 %v1343, %v1341
        %v1392 = vpack.c.b16 %v1344, %v1342
        %v1393 = vpack.c.b16 %v1347, %v1345
        %v1394 = vpack.c.b16 %v1348, %v1346
        %v1395 = vpack.c.b16 %v1351, %v1349
        %v1396 = vpack.c.b16 %v1352, %v1350
        %v1397 = vpack.c.b16 %v1355, %v1353
        %v1398 = vpack.c.b16 %v1356, %v1354
        %v1399 = vpack.c.b16 %v1359, %v1357
        %v1400 = vpack.c.b16 %v1360, %v1358
        %v1401 = vpack.c.b16 %v1363, %v1361
        %v1402 = vpack.c.b16 %v1364, %v1362
        %v1403 = vpack.c.b16 %v1367, %v1365
        %v1404 = vpack.c.b16 %v1368, %v1366
        %v1405 = vpack.c.b16 %v1371, %v1369
        %v1406 = vpack.c.b16 %v1372, %v1370
        %v1407 = vpack.c.b16 %v1375, %v1373
        %v1408 = vpack.c.b16 %v1376, %v1374
        %1441 = vmatpush.bf16.msra.mxu0 %v1391
        %1442 = vmatpush.bf16.msra.mxu0 %v1389
        %1443 = vmatpush.bf16.msra.mxu0 %v1387
        %1444 = vmatpush.bf16.msra.mxu0 %v1385
        %1445 = vmatpush.bf16.msra.mxu0 %v1383
        %1446 = vmatpush.bf16.msra.mxu0 %v1381
        %1447 = vmatpush.bf16.msra.mxu0 %v1379
        %1448 = vmatpush.bf16.msra.mxu0 %v1377
        %1449 = vmatmul.bf16.gmra.mxu0 %v419
        %v1450 = vpop.f32.mrf.mxu0
        %v1451 = vadd.f32 0.0, %v1450
        %v1452 = vpop.f32.mrf.mxu0
        %v1453 = vadd.f32 0.0, %v1452
        %1454 = vmatmul.bf16.gmra.mxu0 %v421
        %v1455 = vpop.f32.mrf.mxu0
        %v1456 = vadd.f32 0.0, %v1455
        %v1457 = vpop.f32.mrf.mxu0
        %v1458 = vadd.f32 0.0, %v1457
        %1459 = vdwg.mxu0
        %1460 = vmatpush.bf16.msra.mxu0 %v1407
        %1461 = vmatpush.bf16.msra.mxu0 %v1405
        %1462 = vmatpush.bf16.msra.mxu0 %v1403
        %1463 = vmatpush.bf16.msra.mxu0 %v1401
        %1464 = vmatpush.bf16.msra.mxu0 %v1399
        %1465 = vmatpush.bf16.msra.mxu0 %v1397
        %1466 = vmatpush.bf16.msra.mxu0 %v1395
        %1467 = vmatpush.bf16.msra.mxu0 %v1393
        %1468 = vmatmul.bf16.gmra.mxu0 %v420
        %v1469 = vpop.f32.mrf.mxu0
        %v1470 = vadd.f32 %v1451, %v1469
        %v1471 = vpop.f32.mrf.mxu0
        %v1472 = vadd.f32 %v1453, %v1471
        %1473 = vmatmul.bf16.gmra.mxu0 %v422
        %v1474 = vpop.f32.mrf.mxu0
        %v1475 = vadd.f32 %v1456, %v1474
        %v1476 = vpop.f32.mrf.mxu0
        %v1477 = vadd.f32 %v1458, %v1476
        %1478 = vdwg.mxu0
        %1479 = vmatpush.bf16.msra.mxu0 %v1392
        %1480 = vmatpush.bf16.msra.mxu0 %v1390
        %1481 = vmatpush.bf16.msra.mxu0 %v1388
        %1482 = vmatpush.bf16.msra.mxu0 %v1386
        %1483 = vmatpush.bf16.msra.mxu0 %v1384
        %1484 = vmatpush.bf16.msra.mxu0 %v1382
        %1485 = vmatpush.bf16.msra.mxu0 %v1380
        %1486 = vmatpush.bf16.msra.mxu0 %v1378
        %1487 = vmatmul.bf16.gmra.mxu0 %v419
        %v1488 = vpop.f32.mrf.mxu0
        %v1489 = vadd.f32 0.0, %v1488
        %v1490 = vpop.f32.mrf.mxu0
        %v1491 = vadd.f32 0.0, %v1490
        %1492 = vmatmul.bf16.gmra.mxu0 %v421
        %v1493 = vpop.f32.mrf.mxu0
        %v1494 = vadd.f32 0.0, %v1493
        %v1495 = vpop.f32.mrf.mxu0
        %v1496 = vadd.f32 0.0, %v1495
        %1497 = vdwg.mxu0
        %1498 = vmatpush.bf16.msra.mxu0 %v1408
        %1499 = vmatpush.bf16.msra.mxu0 %v1406
        %1500 = vmatpush.bf16.msra.mxu0 %v1404
        %1501 = vmatpush.bf16.msra.mxu0 %v1402
        %1502 = vmatpush.bf16.msra.mxu0 %v1400
        %1503 = vmatpush.bf16.msra.mxu0 %v1398
        %1504 = vmatpush.bf16.msra.mxu0 %v1396
        %1505 = vmatpush.bf16.msra.mxu0 %v1394
        %1506 = vmatmul.bf16.gmra.mxu0 %v420
        %v1507 = vpop.f32.mrf.mxu0
        %v1508 = vadd.f32 %v1489, %v1507
        %v1509 = vpop.f32.mrf.mxu0
        %v1510 = vadd.f32 %v1491, %v1509
        %1511 = vmatmul.bf16.gmra.mxu0 %v422
        %v1512 = vpop.f32.mrf.mxu0
        %v1513 = vadd.f32 %v1494, %v1512
        %v1514 = vpop.f32.mrf.mxu0
        %v1515 = vadd.f32 %v1496, %v1514
        %1516 = vdwg.mxu0
        %v1549 = vunpack.c.l.b16 %v1216
        %v1550 = vunpack.c.h.b16 %v1216
        %v1551 = vunpack.c.l.b16 %v1217
        %v1552 = vunpack.c.h.b16 %v1217
        %v1553 = vunpack.c.l.b16 %v1218
        %v1554 = vunpack.c.h.b16 %v1218
        %v1555 = vunpack.c.l.b16 %v1219
        %v1556 = vunpack.c.h.b16 %v1219
        %v1557 = vunpack.c.l.b16 %v1220
        %v1558 = vunpack.c.h.b16 %v1220
        %v1559 = vunpack.c.l.b16 %v1221
        %v1560 = vunpack.c.h.b16 %v1221
        %v1561 = vunpack.c.l.b16 %v1222
        %v1562 = vunpack.c.h.b16 %v1222
        %v1563 = vunpack.c.l.b16 %v1223
        %v1564 = vunpack.c.h.b16 %v1223
        %v1565 = vunpack.c.l.b16 %v1224
        %v1566 = vunpack.c.h.b16 %v1224
        %v1567 = vunpack.c.l.b16 %v1225
        %v1568 = vunpack.c.h.b16 %v1225
        %v1569 = vunpack.c.l.b16 %v1226
        %v1570 = vunpack.c.h.b16 %v1226
        %v1571 = vunpack.c.l.b16 %v1227
        %v1572 = vunpack.c.h.b16 %v1227
        %v1573 = vunpack.c.l.b16 %v1228
        %v1574 = vunpack.c.h.b16 %v1228
        %v1575 = vunpack.c.l.b16 %v1229
        %v1576 = vunpack.c.h.b16 %v1229
        %v1577 = vunpack.c.l.b16 %v1230
        %v1578 = vunpack.c.h.b16 %v1230
        %v1579 = vunpack.c.l.b16 %v1231
        %v1580 = vunpack.c.h.b16 %v1231
        %v1581 = vunpack.c.l.b16 %v1232
        %v1582 = vunpack.c.h.b16 %v1232
        %v1583 = vunpack.c.l.b16 %v1233
        %v1584 = vunpack.c.h.b16 %v1233
        %v1585 = vunpack.c.l.b16 %v1234
        %v1586 = vunpack.c.h.b16 %v1234
        %v1587 = vunpack.c.l.b16 %v1235
        %v1588 = vunpack.c.h.b16 %v1235
        %v1589 = vunpack.c.l.b16 %v1236
        %v1590 = vunpack.c.h.b16 %v1236
        %v1591 = vunpack.c.l.b16 %v1237
        %v1592 = vunpack.c.h.b16 %v1237
        %v1593 = vunpack.c.l.b16 %v1238
        %v1594 = vunpack.c.h.b16 %v1238
        %v1595 = vunpack.c.l.b16 %v1239
        %v1596 = vunpack.c.h.b16 %v1239
        %v1597 = vunpack.c.l.b16 %v1240
        %v1598 = vunpack.c.h.b16 %v1240
        %v1599 = vunpack.c.l.b16 %v1241
        %v1600 = vunpack.c.h.b16 %v1241
        %v1601 = vunpack.c.l.b16 %v1242
        %v1602 = vunpack.c.h.b16 %v1242
        %v1603 = vunpack.c.l.b16 %v1243
        %v1604 = vunpack.c.h.b16 %v1243
        %v1605 = vunpack.c.l.b16 %v1244
        %v1606 = vunpack.c.h.b16 %v1244
        %v1607 = vunpack.c.l.b16 %v1245
        %v1608 = vunpack.c.h.b16 %v1245
        %v1609 = vunpack.c.l.b16 %v1246
        %v1610 = vunpack.c.h.b16 %v1246
        %v1611 = vunpack.c.l.b16 %v1247
        %v1612 = vunpack.c.h.b16 %v1247
        %v1613 = vpack.c.b16 %v1551, %v1549
        %v1614 = vpack.c.b16 %v1552, %v1550
        %v1615 = vpack.c.b16 %v1555, %v1553
        %v1616 = vpack.c.b16 %v1556, %v1554
        %v1617 = vpack.c.b16 %v1559, %v1557
        %v1618 = vpack.c.b16 %v1560, %v1558
        %v1619 = vpack.c.b16 %v1563, %v1561
        %v1620 = vpack.c.b16 %v1564, %v1562
        %v1621 = vpack.c.b16 %v1567, %v1565
        %v1622 = vpack.c.b16 %v1568, %v1566
        %v1623 = vpack.c.b16 %v1571, %v1569
        %v1624 = vpack.c.b16 %v1572, %v1570
        %v1625 = vpack.c.b16 %v1575, %v1573
        %v1626 = vpack.c.b16 %v1576, %v1574
        %v1627 = vpack.c.b16 %v1579, %v1577
        %v1628 = vpack.c.b16 %v1580, %v1578
        %v1629 = vpack.c.b16 %v1583, %v1581
        %v1630 = vpack.c.b16 %v1584, %v1582
        %v1631 = vpack.c.b16 %v1587, %v1585
        %v1632 = vpack.c.b16 %v1588, %v1586
        %v1633 = vpack.c.b16 %v1591, %v1589
        %v1634 = vpack.c.b16 %v1592, %v1590
        %v1635 = vpack.c.b16 %v1595, %v1593
        %v1636 = vpack.c.b16 %v1596, %v1594
        %v1637 = vpack.c.b16 %v1599, %v1597
        %v1638 = vpack.c.b16 %v1600, %v1598
        %v1639 = vpack.c.b16 %v1603, %v1601
        %v1640 = vpack.c.b16 %v1604, %v1602
        %v1641 = vpack.c.b16 %v1607, %v1605
        %v1642 = vpack.c.b16 %v1608, %v1606
        %v1643 = vpack.c.b16 %v1611, %v1609
        %v1644 = vpack.c.b16 %v1612, %v1610
        %1677 = vmatpush.bf16.msra.mxu0 %v1627
        %1678 = vmatpush.bf16.msra.mxu0 %v1625
        %1679 = vmatpush.bf16.msra.mxu0 %v1623
        %1680 = vmatpush.bf16.msra.mxu0 %v1621
        %1681 = vmatpush.bf16.msra.mxu0 %v1619
        %1682 = vmatpush.bf16.msra.mxu0 %v1617
        %1683 = vmatpush.bf16.msra.mxu0 %v1615
        %1684 = vmatpush.bf16.msra.mxu0 %v1613
        %1685 = vmatmul.bf16.gmra.mxu0 %v675
        %v1686 = vpop.f32.mrf.mxu0
        %v1687 = vadd.f32 %v1470, %v1686
        %v1688 = vpop.f32.mrf.mxu0
        %v1689 = vadd.f32 %v1472, %v1688
        %1690 = vmatmul.bf16.gmra.mxu0 %v677
        %v1691 = vpop.f32.mrf.mxu0
        %v1692 = vadd.f32 %v1475, %v1691
        %v1693 = vpop.f32.mrf.mxu0
        %v1694 = vadd.f32 %v1477, %v1693
        %1695 = vdwg.mxu0
        %1696 = vmatpush.bf16.msra.mxu0 %v1643
        %1697 = vmatpush.bf16.msra.mxu0 %v1641
        %1698 = vmatpush.bf16.msra.mxu0 %v1639
        %1699 = vmatpush.bf16.msra.mxu0 %v1637
        %1700 = vmatpush.bf16.msra.mxu0 %v1635
        %1701 = vmatpush.bf16.msra.mxu0 %v1633
        %1702 = vmatpush.bf16.msra.mxu0 %v1631
        %1703 = vmatpush.bf16.msra.mxu0 %v1629
        %1704 = vmatmul.bf16.gmra.mxu0 %v676
        %v1705 = vpop.f32.mrf.mxu0
        %v1706 = vadd.f32 %v1687, %v1705
        %v1707 = vpop.f32.mrf.mxu0
        %v1708 = vadd.f32 %v1689, %v1707
        %1709 = vmatmul.bf16.gmra.mxu0 %v678
        %v1710 = vpop.f32.mrf.mxu0
        %v1711 = vadd.f32 %v1692, %v1710
        %v1712 = vpop.f32.mrf.mxu0
        %v1713 = vadd.f32 %v1694, %v1712
        %1714 = vdwg.mxu0
        %1715 = vmatpush.bf16.msra.mxu0 %v1628
        %1716 = vmatpush.bf16.msra.mxu0 %v1626
        %1717 = vmatpush.bf16.msra.mxu0 %v1624
        %1718 = vmatpush.bf16.msra.mxu0 %v1622
        %1719 = vmatpush.bf16.msra.mxu0 %v1620
        %1720 = vmatpush.bf16.msra.mxu0 %v1618
        %1721 = vmatpush.bf16.msra.mxu0 %v1616
        %1722 = vmatpush.bf16.msra.mxu0 %v1614
        %1723 = vmatmul.bf16.gmra.mxu0 %v675
        %v1724 = vpop.f32.mrf.mxu0
        %v1725 = vadd.f32 %v1508, %v1724
        %v1726 = vpop.f32.mrf.mxu0
        %v1727 = vadd.f32 %v1510, %v1726
        %1728 = vmatmul.bf16.gmra.mxu0 %v677
        %v1729 = vpop.f32.mrf.mxu0
        %v1730 = vadd.f32 %v1513, %v1729
        %v1731 = vpop.f32.mrf.mxu0
        %v1732 = vadd.f32 %v1515, %v1731
        %1733 = vdwg.mxu0
        %1734 = vmatpush.bf16.msra.mxu0 %v1644
        %1735 = vmatpush.bf16.msra.mxu0 %v1642
        %1736 = vmatpush.bf16.msra.mxu0 %v1640
        %1737 = vmatpush.bf16.msra.mxu0 %v1638
        %1738 = vmatpush.bf16.msra.mxu0 %v1636
        %1739 = vmatpush.bf16.msra.mxu0 %v1634
        %1740 = vmatpush.bf16.msra.mxu0 %v1632
        %1741 = vmatpush.bf16.msra.mxu0 %v1630
        %1742 = vmatmul.bf16.gmra.mxu0 %v676
        %v1743 = vpop.f32.mrf.mxu0
        %v1744 = vadd.f32 %v1725, %v1743
        %v1745 = vpop.f32.mrf.mxu0
        %v1746 = vadd.f32 %v1727, %v1745
        %1747 = vmatmul.bf16.gmra.mxu0 %v678
        %v1748 = vpop.f32.mrf.mxu0
        %v1749 = vadd.f32 %v1730, %v1748
        %v1750 = vpop.f32.mrf.mxu0
        %v1751 = vadd.f32 %v1732, %v1750
        %1752 = vdwg.mxu0
        %s1753 = scalar_lea.vmem %s1, 1536
        %v1754 = vld [vmem:[%s1753] sm:$0xff]
        %v1755 = vld [vmem:[%s1753 + $0x8] sm:$0xff]
        %v1756 = vld [vmem:[%s1753 + $0x10] sm:$0xff]
        %v1757 = vld [vmem:[%s1753 + $0x18] sm:$0xff]
        %v1758 = vld [vmem:[%s1753 + $0x20] sm:$0xff]
        %v1759 = vld [vmem:[%s1753 + $0x28] sm:$0xff]
        %v1760 = vld [vmem:[%s1753 + $0x30] sm:$0xff]
        %v1761 = vld [vmem:[%s1753 + $0x38] sm:$0xff]
        %v1762 = vld [vmem:[%s1753 + $0x40] sm:$0xff]
        %v1763 = vld [vmem:[%s1753 + $0x48] sm:$0xff]
        %v1764 = vld [vmem:[%s1753 + $0x50] sm:$0xff]
        %v1765 = vld [vmem:[%s1753 + $0x58] sm:$0xff]
        %v1766 = vld [vmem:[%s1753 + $0x60] sm:$0xff]
        %v1767 = vld [vmem:[%s1753 + $0x68] sm:$0xff]
        %v1768 = vld [vmem:[%s1753 + $0x70] sm:$0xff]
        %v1769 = vld [vmem:[%s1753 + $0x78] sm:$0xff]
        %v1770 = vld [vmem:[%s1753 + $0x80] sm:$0xff]
        %v1771 = vld [vmem:[%s1753 + $0x88] sm:$0xff]
        %v1772 = vld [vmem:[%s1753 + $0x90] sm:$0xff]
        %v1773 = vld [vmem:[%s1753 + $0x98] sm:$0xff]
        %v1774 = vld [vmem:[%s1753 + $0xa0] sm:$0xff]
        %v1775 = vld [vmem:[%s1753 + $0xa8] sm:$0xff]
        %v1776 = vld [vmem:[%s1753 + $0xb0] sm:$0xff]
        %v1777 = vld [vmem:[%s1753 + $0xb8] sm:$0xff]
        %v1778 = vld [vmem:[%s1753 + $0xc0] sm:$0xff]
        %v1779 = vld [vmem:[%s1753 + $0xc8] sm:$0xff]
        %v1780 = vld [vmem:[%s1753 + $0xd0] sm:$0xff]
        %v1781 = vld [vmem:[%s1753 + $0xd8] sm:$0xff]
        %v1782 = vld [vmem:[%s1753 + $0xe0] sm:$0xff]
        %v1783 = vld [vmem:[%s1753 + $0xe8] sm:$0xff]
        %v1784 = vld [vmem:[%s1753 + $0xf0] sm:$0xff]
        %v1785 = vld [vmem:[%s1753 + $0xf8] sm:$0xff]
        %v1818 = vunpack.c.l.b16 %v1754
        %v1819 = vunpack.c.h.b16 %v1754
        %v1820 = vunpack.c.l.b16 %v1755
        %v1821 = vunpack.c.h.b16 %v1755
        %v1822 = vunpack.c.l.b16 %v1756
        %v1823 = vunpack.c.h.b16 %v1756
        %v1824 = vunpack.c.l.b16 %v1757
        %v1825 = vunpack.c.h.b16 %v1757
        %v1826 = vunpack.c.l.b16 %v1758
        %v1827 = vunpack.c.h.b16 %v1758
        %v1828 = vunpack.c.l.b16 %v1759
        %v1829 = vunpack.c.h.b16 %v1759
        %v1830 = vunpack.c.l.b16 %v1760
        %v1831 = vunpack.c.h.b16 %v1760
        %v1832 = vunpack.c.l.b16 %v1761
        %v1833 = vunpack.c.h.b16 %v1761
        %v1834 = vunpack.c.l.b16 %v1762
        %v1835 = vunpack.c.h.b16 %v1762
        %v1836 = vunpack.c.l.b16 %v1763
        %v1837 = vunpack.c.h.b16 %v1763
        %v1838 = vunpack.c.l.b16 %v1764
        %v1839 = vunpack.c.h.b16 %v1764
        %v1840 = vunpack.c.l.b16 %v1765
        %v1841 = vunpack.c.h.b16 %v1765
        %v1842 = vunpack.c.l.b16 %v1766
        %v1843 = vunpack.c.h.b16 %v1766
        %v1844 = vunpack.c.l.b16 %v1767
        %v1845 = vunpack.c.h.b16 %v1767
        %v1846 = vunpack.c.l.b16 %v1768
        %v1847 = vunpack.c.h.b16 %v1768
        %v1848 = vunpack.c.l.b16 %v1769
        %v1849 = vunpack.c.h.b16 %v1769
        %v1850 = vunpack.c.l.b16 %v1770
        %v1851 = vunpack.c.h.b16 %v1770
        %v1852 = vunpack.c.l.b16 %v1771
        %v1853 = vunpack.c.h.b16 %v1771
        %v1854 = vunpack.c.l.b16 %v1772
        %v1855 = vunpack.c.h.b16 %v1772
        %v1856 = vunpack.c.l.b16 %v1773
        %v1857 = vunpack.c.h.b16 %v1773
        %v1858 = vunpack.c.l.b16 %v1774
        %v1859 = vunpack.c.h.b16 %v1774
        %v1860 = vunpack.c.l.b16 %v1775
        %v1861 = vunpack.c.h.b16 %v1775
        %v1862 = vunpack.c.l.b16 %v1776
        %v1863 = vunpack.c.h.b16 %v1776
        %v1864 = vunpack.c.l.b16 %v1777
        %v1865 = vunpack.c.h.b16 %v1777
        %v1866 = vunpack.c.l.b16 %v1778
        %v1867 = vunpack.c.h.b16 %v1778
        %v1868 = vunpack.c.l.b16 %v1779
        %v1869 = vunpack.c.h.b16 %v1779
        %v1870 = vunpack.c.l.b16 %v1780
        %v1871 = vunpack.c.h.b16 %v1780
        %v1872 = vunpack.c.l.b16 %v1781
        %v1873 = vunpack.c.h.b16 %v1781
        %v1874 = vunpack.c.l.b16 %v1782
        %v1875 = vunpack.c.h.b16 %v1782
        %v1876 = vunpack.c.l.b16 %v1783
        %v1877 = vunpack.c.h.b16 %v1783
        %v1878 = vunpack.c.l.b16 %v1784
        %v1879 = vunpack.c.h.b16 %v1784
        %v1880 = vunpack.c.l.b16 %v1785
        %v1881 = vunpack.c.h.b16 %v1785
        %v1882 = vpack.c.b16 %v1820, %v1818
        %v1883 = vpack.c.b16 %v1821, %v1819
        %v1884 = vpack.c.b16 %v1824, %v1822
        %v1885 = vpack.c.b16 %v1825, %v1823
        %v1886 = vpack.c.b16 %v1828, %v1826
        %v1887 = vpack.c.b16 %v1829, %v1827
        %v1888 = vpack.c.b16 %v1832, %v1830
        %v1889 = vpack.c.b16 %v1833, %v1831
        %v1890 = vpack.c.b16 %v1836, %v1834
        %v1891 = vpack.c.b16 %v1837, %v1835
        %v1892 = vpack.c.b16 %v1840, %v1838
        %v1893 = vpack.c.b16 %v1841, %v1839
        %v1894 = vpack.c.b16 %v1844, %v1842
        %v1895 = vpack.c.b16 %v1845, %v1843
        %v1896 = vpack.c.b16 %v1848, %v1846
        %v1897 = vpack.c.b16 %v1849, %v1847
        %v1898 = vpack.c.b16 %v1852, %v1850
        %v1899 = vpack.c.b16 %v1853, %v1851
        %v1900 = vpack.c.b16 %v1856, %v1854
        %v1901 = vpack.c.b16 %v1857, %v1855
        %v1902 = vpack.c.b16 %v1860, %v1858
        %v1903 = vpack.c.b16 %v1861, %v1859
        %v1904 = vpack.c.b16 %v1864, %v1862
        %v1905 = vpack.c.b16 %v1865, %v1863
        %v1906 = vpack.c.b16 %v1868, %v1866
        %v1907 = vpack.c.b16 %v1869, %v1867
        %v1908 = vpack.c.b16 %v1872, %v1870
        %v1909 = vpack.c.b16 %v1873, %v1871
        %v1910 = vpack.c.b16 %v1876, %v1874
        %v1911 = vpack.c.b16 %v1877, %v1875
        %v1912 = vpack.c.b16 %v1880, %v1878
        %v1913 = vpack.c.b16 %v1881, %v1879
        %1946 = vmatpush.bf16.msra.mxu0 %v1896
        %1947 = vmatpush.bf16.msra.mxu0 %v1894
        %1948 = vmatpush.bf16.msra.mxu0 %v1892
        %1949 = vmatpush.bf16.msra.mxu0 %v1890
        %1950 = vmatpush.bf16.msra.mxu0 %v1888
        %1951 = vmatpush.bf16.msra.mxu0 %v1886
        %1952 = vmatpush.bf16.msra.mxu0 %v1884
        %1953 = vmatpush.bf16.msra.mxu0 %v1882
        %1954 = vmatmul.bf16.gmra.mxu0 %v964
        %v1955 = vpop.f32.mrf.mxu0
        %v1956 = vadd.f32 0.0, %v1955
        %v1957 = vpop.f32.mrf.mxu0
        %v1958 = vadd.f32 0.0, %v1957
        %1959 = vmatmul.bf16.gmra.mxu0 %v966
        %v1960 = vpop.f32.mrf.mxu0
        %v1961 = vadd.f32 0.0, %v1960
        %v1962 = vpop.f32.mrf.mxu0
        %v1963 = vadd.f32 0.0, %v1962
        %1964 = vdwg.mxu0
        %1965 = vmatpush.bf16.msra.mxu0 %v1912
        %1966 = vmatpush.bf16.msra.mxu0 %v1910
        %1967 = vmatpush.bf16.msra.mxu0 %v1908
        %1968 = vmatpush.bf16.msra.mxu0 %v1906
        %1969 = vmatpush.bf16.msra.mxu0 %v1904
        %1970 = vmatpush.bf16.msra.mxu0 %v1902
        %1971 = vmatpush.bf16.msra.mxu0 %v1900
        %1972 = vmatpush.bf16.msra.mxu0 %v1898
        %1973 = vmatmul.bf16.gmra.mxu0 %v965
        %v1974 = vpop.f32.mrf.mxu0
        %v1975 = vadd.f32 %v1956, %v1974
        %v1976 = vpop.f32.mrf.mxu0
        %v1977 = vadd.f32 %v1958, %v1976
        %1978 = vmatmul.bf16.gmra.mxu0 %v967
        %v1979 = vpop.f32.mrf.mxu0
        %v1980 = vadd.f32 %v1961, %v1979
        %v1981 = vpop.f32.mrf.mxu0
        %v1982 = vadd.f32 %v1963, %v1981
        %1983 = vdwg.mxu0
        %1984 = vmatpush.bf16.msra.mxu0 %v1897
        %1985 = vmatpush.bf16.msra.mxu0 %v1895
        %1986 = vmatpush.bf16.msra.mxu0 %v1893
        %1987 = vmatpush.bf16.msra.mxu0 %v1891
        %1988 = vmatpush.bf16.msra.mxu0 %v1889
        %1989 = vmatpush.bf16.msra.mxu0 %v1887
        %1990 = vmatpush.bf16.msra.mxu0 %v1885
        %1991 = vmatpush.bf16.msra.mxu0 %v1883
        %1992 = vmatmul.bf16.gmra.mxu0 %v964
        %v1993 = vpop.f32.mrf.mxu0
        %v1994 = vadd.f32 0.0, %v1993
        %v1995 = vpop.f32.mrf.mxu0
        %v1996 = vadd.f32 0.0, %v1995
        %1997 = vmatmul.bf16.gmra.mxu0 %v966
        %v1998 = vpop.f32.mrf.mxu0
        %v1999 = vadd.f32 0.0, %v1998
        %v2000 = vpop.f32.mrf.mxu0
        %v2001 = vadd.f32 0.0, %v2000
        %2002 = vdwg.mxu0
        %2003 = vmatpush.bf16.msra.mxu0 %v1913
        %2004 = vmatpush.bf16.msra.mxu0 %v1911
        %2005 = vmatpush.bf16.msra.mxu0 %v1909
        %2006 = vmatpush.bf16.msra.mxu0 %v1907
        %2007 = vmatpush.bf16.msra.mxu0 %v1905
        %2008 = vmatpush.bf16.msra.mxu0 %v1903
        %2009 = vmatpush.bf16.msra.mxu0 %v1901
        %2010 = vmatpush.bf16.msra.mxu0 %v1899
        %2011 = vmatmul.bf16.gmra.mxu0 %v965
        %v2012 = vpop.f32.mrf.mxu0
        %v2013 = vadd.f32 %v1994, %v2012
        %v2014 = vpop.f32.mrf.mxu0
        %v2015 = vadd.f32 %v1996, %v2014
        %2016 = vmatmul.bf16.gmra.mxu0 %v967
        %v2017 = vpop.f32.mrf.mxu0
        %v2018 = vadd.f32 %v1999, %v2017
        %v2019 = vpop.f32.mrf.mxu0
        %v2020 = vadd.f32 %v2001, %v2019
        %2021 = vdwg.mxu0
        %v2022 = vadd.f32 %v1706, %v1975
        %v2023 = vadd.f32 %v1744, %v2013
        %v2024 = vadd.f32 %v1708, %v1977
        %v2025 = vadd.f32 %v1746, %v2015
        %v2026 = vadd.f32 %v1711, %v1980
        %v2027 = vadd.f32 %v1749, %v2018
        %v2028 = vadd.f32 %v1713, %v1982
        %v2029 = vadd.f32 %v1751, %v2020
        %v2030 = vrot.slane %v2022, 7
        %v2031 = vrot.slane %v2023, 7
        %v2032 = vrot.slane %v2024, 7
        %v2033 = vrot.slane %v2025, 7
        %v2034 = vrot.slane %v2026, 7
        %v2035 = vrot.slane %v2027, 7
        %v2036 = vrot.slane %v2028, 7
        %v2037 = vrot.slane %v2029, 7
        %vm2038 = vcmp.lt.s32.totalorder %v265, 1
        %v2039 = vsel %vm2038, %v2034, %v2036
        %v2040 = vsel %vm2038, %v2035, %v2037
        %v2041 = vsel %vm2038, %v2032, %v2034
        %v2042 = vsel %vm2038, %v2033, %v2035
        %v2043 = vsel %vm2038, %v2030, %v2032
        %v2044 = vsel %vm2038, %v2031, %v2033
        %v2045 = vsel %vm2038, %v2036, %v2030
        %v2046 = vsel %vm2038, %v2037, %v2031
        %v2047 = vmul.f32 %v325, %v2045
        %v2048 = vmul.f32 %v325, %v2046
        %v2049 = vmul.f32 %v326, %v2043
        %v2050 = vmul.f32 %v326, %v2044
        %v2051 = vmul.f32 %v327, %v2041
        %v2052 = vmul.f32 %v327, %v2042
        %v2053 = vmul.f32 %v328, %v2039
        %v2054 = vmul.f32 %v328, %v2040
        %v2055 = vadd.f32 %v1208, %v2047
        %v2056 = vadd.f32 %v1209, %v2048
        %v2057 = vadd.f32 %v1210, %v2049
        %v2058 = vadd.f32 %v1211, %v2050
        %v2059 = vadd.f32 %v1212, %v2051
        %v2060 = vadd.f32 %v1213, %v2052
        %v2061 = vadd.f32 %v1214, %v2053
        %v2062 = vadd.f32 %v1215, %v2054
        %s2063 = scalar_lea.vmem %s1, 512
        %v2064 = vld [vmem:[%s2063] sm:$0xff]
        %v2065 = vld [vmem:[%s2063 + $0x8] sm:$0xff]
        %v2066 = vld [vmem:[%s2063 + $0x10] sm:$0xff]
        %v2067 = vld [vmem:[%s2063 + $0x18] sm:$0xff]
        %v2068 = vld [vmem:[%s2063 + $0x20] sm:$0xff]
        %v2069 = vld [vmem:[%s2063 + $0x28] sm:$0xff]
        %v2070 = vld [vmem:[%s2063 + $0x30] sm:$0xff]
        %v2071 = vld [vmem:[%s2063 + $0x38] sm:$0xff]
        %v2072 = vld [vmem:[%s2063 + $0x40] sm:$0xff]
        %v2073 = vld [vmem:[%s2063 + $0x48] sm:$0xff]
        %v2074 = vld [vmem:[%s2063 + $0x50] sm:$0xff]
        %v2075 = vld [vmem:[%s2063 + $0x58] sm:$0xff]
        %v2076 = vld [vmem:[%s2063 + $0x60] sm:$0xff]
        %v2077 = vld [vmem:[%s2063 + $0x68] sm:$0xff]
        %v2078 = vld [vmem:[%s2063 + $0x70] sm:$0xff]
        %v2079 = vld [vmem:[%s2063 + $0x78] sm:$0xff]
        %v2080 = vld [vmem:[%s2063 + $0x80] sm:$0xff]
        %v2081 = vld [vmem:[%s2063 + $0x88] sm:$0xff]
        %v2082 = vld [vmem:[%s2063 + $0x90] sm:$0xff]
        %v2083 = vld [vmem:[%s2063 + $0x98] sm:$0xff]
        %v2084 = vld [vmem:[%s2063 + $0xa0] sm:$0xff]
        %v2085 = vld [vmem:[%s2063 + $0xa8] sm:$0xff]
        %v2086 = vld [vmem:[%s2063 + $0xb0] sm:$0xff]
        %v2087 = vld [vmem:[%s2063 + $0xb8] sm:$0xff]
        %v2088 = vld [vmem:[%s2063 + $0xc0] sm:$0xff]
        %v2089 = vld [vmem:[%s2063 + $0xc8] sm:$0xff]
        %v2090 = vld [vmem:[%s2063 + $0xd0] sm:$0xff]
        %v2091 = vld [vmem:[%s2063 + $0xd8] sm:$0xff]
        %v2092 = vld [vmem:[%s2063 + $0xe0] sm:$0xff]
        %v2093 = vld [vmem:[%s2063 + $0xe8] sm:$0xff]
        %v2094 = vld [vmem:[%s2063 + $0xf0] sm:$0xff]
        %v2095 = vld [vmem:[%s2063 + $0xf8] sm:$0xff]
        %s2096 = scalar_lea.vmem %s1, 1280
        %v2097 = vld [vmem:[%s2096] sm:$0xff]
        %v2098 = vld [vmem:[%s2096 + $0x8] sm:$0xff]
        %v2099 = vld [vmem:[%s2096 + $0x10] sm:$0xff]
        %v2100 = vld [vmem:[%s2096 + $0x18] sm:$0xff]
        %v2101 = vld [vmem:[%s2096 + $0x20] sm:$0xff]
        %v2102 = vld [vmem:[%s2096 + $0x28] sm:$0xff]
        %v2103 = vld [vmem:[%s2096 + $0x30] sm:$0xff]
        %v2104 = vld [vmem:[%s2096 + $0x38] sm:$0xff]
        %v2105 = vld [vmem:[%s2096 + $0x40] sm:$0xff]
        %v2106 = vld [vmem:[%s2096 + $0x48] sm:$0xff]
        %v2107 = vld [vmem:[%s2096 + $0x50] sm:$0xff]
        %v2108 = vld [vmem:[%s2096 + $0x58] sm:$0xff]
        %v2109 = vld [vmem:[%s2096 + $0x60] sm:$0xff]
        %v2110 = vld [vmem:[%s2096 + $0x68] sm:$0xff]
        %v2111 = vld [vmem:[%s2096 + $0x70] sm:$0xff]
        %v2112 = vld [vmem:[%s2096 + $0x78] sm:$0xff]
        %v2113 = vld [vmem:[%s2096 + $0x80] sm:$0xff]
        %v2114 = vld [vmem:[%s2096 + $0x88] sm:$0xff]
        %v2115 = vld [vmem:[%s2096 + $0x90] sm:$0xff]
        %v2116 = vld [vmem:[%s2096 + $0x98] sm:$0xff]
        %v2117 = vld [vmem:[%s2096 + $0xa0] sm:$0xff]
        %v2118 = vld [vmem:[%s2096 + $0xa8] sm:$0xff]
        %v2119 = vld [vmem:[%s2096 + $0xb0] sm:$0xff]
        %v2120 = vld [vmem:[%s2096 + $0xb8] sm:$0xff]
        %v2121 = vld [vmem:[%s2096 + $0xc0] sm:$0xff]
        %v2122 = vld [vmem:[%s2096 + $0xc8] sm:$0xff]
        %v2123 = vld [vmem:[%s2096 + $0xd0] sm:$0xff]
        %v2124 = vld [vmem:[%s2096 + $0xd8] sm:$0xff]
        %v2125 = vld [vmem:[%s2096 + $0xe0] sm:$0xff]
        %v2126 = vld [vmem:[%s2096 + $0xe8] sm:$0xff]
        %v2127 = vld [vmem:[%s2096 + $0xf0] sm:$0xff]
        %v2128 = vld [vmem:[%s2096 + $0xf8] sm:$0xff]
        %v2161 = vunpack.c.l.b16 %v2097
        %v2162 = vunpack.c.h.b16 %v2097
        %v2163 = vunpack.c.l.b16 %v2098
        %v2164 = vunpack.c.h.b16 %v2098
        %v2165 = vunpack.c.l.b16 %v2099
        %v2166 = vunpack.c.h.b16 %v2099
        %v2167 = vunpack.c.l.b16 %v2100
        %v2168 = vunpack.c.h.b16 %v2100
        %v2169 = vunpack.c.l.b16 %v2101
        %v2170 = vunpack.c.h.b16 %v2101
        %v2171 = vunpack.c.l.b16 %v2102
        %v2172 = vunpack.c.h.b16 %v2102
        %v2173 = vunpack.c.l.b16 %v2103
        %v2174 = vunpack.c.h.b16 %v2103
        %v2175 = vunpack.c.l.b16 %v2104
        %v2176 = vunpack.c.h.b16 %v2104
        %v2177 = vunpack.c.l.b16 %v2105
        %v2178 = vunpack.c.h.b16 %v2105
        %v2179 = vunpack.c.l.b16 %v2106
        %v2180 = vunpack.c.h.b16 %v2106
        %v2181 = vunpack.c.l.b16 %v2107
        %v2182 = vunpack.c.h.b16 %v2107
        %v2183 = vunpack.c.l.b16 %v2108
        %v2184 = vunpack.c.h.b16 %v2108
        %v2185 = vunpack.c.l.b16 %v2109
        %v2186 = vunpack.c.h.b16 %v2109
        %v2187 = vunpack.c.l.b16 %v2110
        %v2188 = vunpack.c.h.b16 %v2110
        %v2189 = vunpack.c.l.b16 %v2111
        %v2190 = vunpack.c.h.b16 %v2111
        %v2191 = vunpack.c.l.b16 %v2112
        %v2192 = vunpack.c.h.b16 %v2112
        %v2193 = vunpack.c.l.b16 %v2113
        %v2194 = vunpack.c.h.b16 %v2113
        %v2195 = vunpack.c.l.b16 %v2114
        %v2196 = vunpack.c.h.b16 %v2114
        %v2197 = vunpack.c.l.b16 %v2115
        %v2198 = vunpack.c.h.b16 %v2115
        %v2199 = vunpack.c.l.b16 %v2116
        %v2200 = vunpack.c.h.b16 %v2116
        %v2201 = vunpack.c.l.b16 %v2117
        %v2202 = vunpack.c.h.b16 %v2117
        %v2203 = vunpack.c.l.b16 %v2118
        %v2204 = vunpack.c.h.b16 %v2118
        %v2205 = vunpack.c.l.b16 %v2119
        %v2206 = vunpack.c.h.b16 %v2119
        %v2207 = vunpack.c.l.b16 %v2120
        %v2208 = vunpack.c.h.b16 %v2120
        %v2209 = vunpack.c.l.b16 %v2121
        %v2210 = vunpack.c.h.b16 %v2121
        %v2211 = vunpack.c.l.b16 %v2122
        %v2212 = vunpack.c.h.b16 %v2122
        %v2213 = vunpack.c.l.b16 %v2123
        %v2214 = vunpack.c.h.b16 %v2123
        %v2215 = vunpack.c.l.b16 %v2124
        %v2216 = vunpack.c.h.b16 %v2124
        %v2217 = vunpack.c.l.b16 %v2125
        %v2218 = vunpack.c.h.b16 %v2125
        %v2219 = vunpack.c.l.b16 %v2126
        %v2220 = vunpack.c.h.b16 %v2126
        %v2221 = vunpack.c.l.b16 %v2127
        %v2222 = vunpack.c.h.b16 %v2127
        %v2223 = vunpack.c.l.b16 %v2128
        %v2224 = vunpack.c.h.b16 %v2128
        %v2225 = vpack.c.b16 %v2163, %v2161
        %v2226 = vpack.c.b16 %v2164, %v2162
        %v2227 = vpack.c.b16 %v2167, %v2165
        %v2228 = vpack.c.b16 %v2168, %v2166
        %v2229 = vpack.c.b16 %v2171, %v2169
        %v2230 = vpack.c.b16 %v2172, %v2170
        %v2231 = vpack.c.b16 %v2175, %v2173
        %v2232 = vpack.c.b16 %v2176, %v2174
        %v2233 = vpack.c.b16 %v2179, %v2177
        %v2234 = vpack.c.b16 %v2180, %v2178
        %v2235 = vpack.c.b16 %v2183, %v2181
        %v2236 = vpack.c.b16 %v2184, %v2182
        %v2237 = vpack.c.b16 %v2187, %v2185
        %v2238 = vpack.c.b16 %v2188, %v2186
        %v2239 = vpack.c.b16 %v2191, %v2189
        %v2240 = vpack.c.b16 %v2192, %v2190
        %v2241 = vpack.c.b16 %v2195, %v2193
        %v2242 = vpack.c.b16 %v2196, %v2194
        %v2243 = vpack.c.b16 %v2199, %v2197
        %v2244 = vpack.c.b16 %v2200, %v2198
        %v2245 = vpack.c.b16 %v2203, %v2201
        %v2246 = vpack.c.b16 %v2204, %v2202
        %v2247 = vpack.c.b16 %v2207, %v2205
        %v2248 = vpack.c.b16 %v2208, %v2206
        %v2249 = vpack.c.b16 %v2211, %v2209
        %v2250 = vpack.c.b16 %v2212, %v2210
        %v2251 = vpack.c.b16 %v2215, %v2213
        %v2252 = vpack.c.b16 %v2216, %v2214
        %v2253 = vpack.c.b16 %v2219, %v2217
        %v2254 = vpack.c.b16 %v2220, %v2218
        %v2255 = vpack.c.b16 %v2223, %v2221
        %v2256 = vpack.c.b16 %v2224, %v2222
        %2289 = vmatpush.bf16.msra.mxu0 %v2239
        %2290 = vmatpush.bf16.msra.mxu0 %v2237
        %2291 = vmatpush.bf16.msra.mxu0 %v2235
        %2292 = vmatpush.bf16.msra.mxu0 %v2233
        %2293 = vmatpush.bf16.msra.mxu0 %v2231
        %2294 = vmatpush.bf16.msra.mxu0 %v2229
        %2295 = vmatpush.bf16.msra.mxu0 %v2227
        %2296 = vmatpush.bf16.msra.mxu0 %v2225
        %2297 = vmatmul.bf16.gmra.mxu0 %v419
        %v2298 = vpop.f32.mrf.mxu0
        %v2299 = vadd.f32 0.0, %v2298
        %v2300 = vpop.f32.mrf.mxu0
        %v2301 = vadd.f32 0.0, %v2300
        %2302 = vmatmul.bf16.gmra.mxu0 %v421
        %v2303 = vpop.f32.mrf.mxu0
        %v2304 = vadd.f32 0.0, %v2303
        %v2305 = vpop.f32.mrf.mxu0
        %v2306 = vadd.f32 0.0, %v2305
        %2307 = vdwg.mxu0
        %2308 = vmatpush.bf16.msra.mxu0 %v2255
        %2309 = vmatpush.bf16.msra.mxu0 %v2253
        %2310 = vmatpush.bf16.msra.mxu0 %v2251
        %2311 = vmatpush.bf16.msra.mxu0 %v2249
        %2312 = vmatpush.bf16.msra.mxu0 %v2247
        %2313 = vmatpush.bf16.msra.mxu0 %v2245
        %2314 = vmatpush.bf16.msra.mxu0 %v2243
        %2315 = vmatpush.bf16.msra.mxu0 %v2241
        %2316 = vmatmul.bf16.gmra.mxu0 %v420
        %v2317 = vpop.f32.mrf.mxu0
        %v2318 = vadd.f32 %v2299, %v2317
        %v2319 = vpop.f32.mrf.mxu0
        %v2320 = vadd.f32 %v2301, %v2319
        %2321 = vmatmul.bf16.gmra.mxu0 %v422
        %v2322 = vpop.f32.mrf.mxu0
        %v2323 = vadd.f32 %v2304, %v2322
        %v2324 = vpop.f32.mrf.mxu0
        %v2325 = vadd.f32 %v2306, %v2324
        %2326 = vdwg.mxu0
        %2327 = vmatpush.bf16.msra.mxu0 %v2240
        %2328 = vmatpush.bf16.msra.mxu0 %v2238
        %2329 = vmatpush.bf16.msra.mxu0 %v2236
        %2330 = vmatpush.bf16.msra.mxu0 %v2234
        %2331 = vmatpush.bf16.msra.mxu0 %v2232
        %2332 = vmatpush.bf16.msra.mxu0 %v2230
        %2333 = vmatpush.bf16.msra.mxu0 %v2228
        %2334 = vmatpush.bf16.msra.mxu0 %v2226
        %2335 = vmatmul.bf16.gmra.mxu0 %v419
        %v2336 = vpop.f32.mrf.mxu0
        %v2337 = vadd.f32 0.0, %v2336
        %v2338 = vpop.f32.mrf.mxu0
        %v2339 = vadd.f32 0.0, %v2338
        %2340 = vmatmul.bf16.gmra.mxu0 %v421
        %v2341 = vpop.f32.mrf.mxu0
        %v2342 = vadd.f32 0.0, %v2341
        %v2343 = vpop.f32.mrf.mxu0
        %v2344 = vadd.f32 0.0, %v2343
        %2345 = vdwg.mxu0
        %2346 = vmatpush.bf16.msra.mxu0 %v2256
        %2347 = vmatpush.bf16.msra.mxu0 %v2254
        %2348 = vmatpush.bf16.msra.mxu0 %v2252
        %2349 = vmatpush.bf16.msra.mxu0 %v2250
        %2350 = vmatpush.bf16.msra.mxu0 %v2248
        %2351 = vmatpush.bf16.msra.mxu0 %v2246
        %2352 = vmatpush.bf16.msra.mxu0 %v2244
        %2353 = vmatpush.bf16.msra.mxu0 %v2242
        %2354 = vmatmul.bf16.gmra.mxu0 %v420
        %v2355 = vpop.f32.mrf.mxu0
        %v2356 = vadd.f32 %v2337, %v2355
        %v2357 = vpop.f32.mrf.mxu0
        %v2358 = vadd.f32 %v2339, %v2357
        %2359 = vmatmul.bf16.gmra.mxu0 %v422
        %v2360 = vpop.f32.mrf.mxu0
        %v2361 = vadd.f32 %v2342, %v2360
        %v2362 = vpop.f32.mrf.mxu0
        %v2363 = vadd.f32 %v2344, %v2362
        %2364 = vdwg.mxu0
        %v2397 = vunpack.c.l.b16 %v2064
        %v2398 = vunpack.c.h.b16 %v2064
        %v2399 = vunpack.c.l.b16 %v2065
        %v2400 = vunpack.c.h.b16 %v2065
        %v2401 = vunpack.c.l.b16 %v2066
        %v2402 = vunpack.c.h.b16 %v2066
        %v2403 = vunpack.c.l.b16 %v2067
        %v2404 = vunpack.c.h.b16 %v2067
        %v2405 = vunpack.c.l.b16 %v2068
        %v2406 = vunpack.c.h.b16 %v2068
        %v2407 = vunpack.c.l.b16 %v2069
        %v2408 = vunpack.c.h.b16 %v2069
        %v2409 = vunpack.c.l.b16 %v2070
        %v2410 = vunpack.c.h.b16 %v2070
        %v2411 = vunpack.c.l.b16 %v2071
        %v2412 = vunpack.c.h.b16 %v2071
        %v2413 = vunpack.c.l.b16 %v2072
        %v2414 = vunpack.c.h.b16 %v2072
        %v2415 = vunpack.c.l.b16 %v2073
        %v2416 = vunpack.c.h.b16 %v2073
        %v2417 = vunpack.c.l.b16 %v2074
        %v2418 = vunpack.c.h.b16 %v2074
        %v2419 = vunpack.c.l.b16 %v2075
        %v2420 = vunpack.c.h.b16 %v2075
        %v2421 = vunpack.c.l.b16 %v2076
        %v2422 = vunpack.c.h.b16 %v2076
        %v2423 = vunpack.c.l.b16 %v2077
        %v2424 = vunpack.c.h.b16 %v2077
        %v2425 = vunpack.c.l.b16 %v2078
        %v2426 = vunpack.c.h.b16 %v2078
        %v2427 = vunpack.c.l.b16 %v2079
        %v2428 = vunpack.c.h.b16 %v2079
        %v2429 = vunpack.c.l.b16 %v2080
        %v2430 = vunpack.c.h.b16 %v2080
        %v2431 = vunpack.c.l.b16 %v2081
        %v2432 = vunpack.c.h.b16 %v2081
        %v2433 = vunpack.c.l.b16 %v2082
        %v2434 = vunpack.c.h.b16 %v2082
        %v2435 = vunpack.c.l.b16 %v2083
        %v2436 = vunpack.c.h.b16 %v2083
        %v2437 = vunpack.c.l.b16 %v2084
        %v2438 = vunpack.c.h.b16 %v2084
        %v2439 = vunpack.c.l.b16 %v2085
        %v2440 = vunpack.c.h.b16 %v2085
        %v2441 = vunpack.c.l.b16 %v2086
        %v2442 = vunpack.c.h.b16 %v2086
        %v2443 = vunpack.c.l.b16 %v2087
        %v2444 = vunpack.c.h.b16 %v2087
        %v2445 = vunpack.c.l.b16 %v2088
        %v2446 = vunpack.c.h.b16 %v2088
        %v2447 = vunpack.c.l.b16 %v2089
        %v2448 = vunpack.c.h.b16 %v2089
        %v2449 = vunpack.c.l.b16 %v2090
        %v2450 = vunpack.c.h.b16 %v2090
        %v2451 = vunpack.c.l.b16 %v2091
        %v2452 = vunpack.c.h.b16 %v2091
        %v2453 = vunpack.c.l.b16 %v2092
        %v2454 = vunpack.c.h.b16 %v2092
        %v2455 = vunpack.c.l.b16 %v2093
        %v2456 = vunpack.c.h.b16 %v2093
        %v2457 = vunpack.c.l.b16 %v2094
        %v2458 = vunpack.c.h.b16 %v2094
        %v2459 = vunpack.c.l.b16 %v2095
        %v2460 = vunpack.c.h.b16 %v2095
        %v2461 = vpack.c.b16 %v2399, %v2397
        %v2462 = vpack.c.b16 %v2400, %v2398
        %v2463 = vpack.c.b16 %v2403, %v2401
        %v2464 = vpack.c.b16 %v2404, %v2402
        %v2465 = vpack.c.b16 %v2407, %v2405
        %v2466 = vpack.c.b16 %v2408, %v2406
        %v2467 = vpack.c.b16 %v2411, %v2409
        %v2468 = vpack.c.b16 %v2412, %v2410
        %v2469 = vpack.c.b16 %v2415, %v2413
        %v2470 = vpack.c.b16 %v2416, %v2414
        %v2471 = vpack.c.b16 %v2419, %v2417
        %v2472 = vpack.c.b16 %v2420, %v2418
        %v2473 = vpack.c.b16 %v2423, %v2421
        %v2474 = vpack.c.b16 %v2424, %v2422
        %v2475 = vpack.c.b16 %v2427, %v2425
        %v2476 = vpack.c.b16 %v2428, %v2426
        %v2477 = vpack.c.b16 %v2431, %v2429
        %v2478 = vpack.c.b16 %v2432, %v2430
        %v2479 = vpack.c.b16 %v2435, %v2433
        %v2480 = vpack.c.b16 %v2436, %v2434
        %v2481 = vpack.c.b16 %v2439, %v2437
        %v2482 = vpack.c.b16 %v2440, %v2438
        %v2483 = vpack.c.b16 %v2443, %v2441
        %v2484 = vpack.c.b16 %v2444, %v2442
        %v2485 = vpack.c.b16 %v2447, %v2445
        %v2486 = vpack.c.b16 %v2448, %v2446
        %v2487 = vpack.c.b16 %v2451, %v2449
        %v2488 = vpack.c.b16 %v2452, %v2450
        %v2489 = vpack.c.b16 %v2455, %v2453
        %v2490 = vpack.c.b16 %v2456, %v2454
        %v2491 = vpack.c.b16 %v2459, %v2457
        %v2492 = vpack.c.b16 %v2460, %v2458
        %2525 = vmatpush.bf16.msra.mxu0 %v2475
        %2526 = vmatpush.bf16.msra.mxu0 %v2473
        %2527 = vmatpush.bf16.msra.mxu0 %v2471
        %2528 = vmatpush.bf16.msra.mxu0 %v2469
        %2529 = vmatpush.bf16.msra.mxu0 %v2467
        %2530 = vmatpush.bf16.msra.mxu0 %v2465
        %2531 = vmatpush.bf16.msra.mxu0 %v2463
        %2532 = vmatpush.bf16.msra.mxu0 %v2461
        %2533 = vmatmul.bf16.gmra.mxu0 %v675
        %v2534 = vpop.f32.mrf.mxu0
        %v2535 = vadd.f32 %v2318, %v2534
        %v2536 = vpop.f32.mrf.mxu0
        %v2537 = vadd.f32 %v2320, %v2536
        %2538 = vmatmul.bf16.gmra.mxu0 %v677
        %v2539 = vpop.f32.mrf.mxu0
        %v2540 = vadd.f32 %v2323, %v2539
        %v2541 = vpop.f32.mrf.mxu0
        %v2542 = vadd.f32 %v2325, %v2541
        %2543 = vdwg.mxu0
        %2544 = vmatpush.bf16.msra.mxu0 %v2491
        %2545 = vmatpush.bf16.msra.mxu0 %v2489
        %2546 = vmatpush.bf16.msra.mxu0 %v2487
        %2547 = vmatpush.bf16.msra.mxu0 %v2485
        %2548 = vmatpush.bf16.msra.mxu0 %v2483
        %2549 = vmatpush.bf16.msra.mxu0 %v2481
        %2550 = vmatpush.bf16.msra.mxu0 %v2479
        %2551 = vmatpush.bf16.msra.mxu0 %v2477
        %2552 = vmatmul.bf16.gmra.mxu0 %v676
        %v2553 = vpop.f32.mrf.mxu0
        %v2554 = vadd.f32 %v2535, %v2553
        %v2555 = vpop.f32.mrf.mxu0
        %v2556 = vadd.f32 %v2537, %v2555
        %2557 = vmatmul.bf16.gmra.mxu0 %v678
        %v2558 = vpop.f32.mrf.mxu0
        %v2559 = vadd.f32 %v2540, %v2558
        %v2560 = vpop.f32.mrf.mxu0
        %v2561 = vadd.f32 %v2542, %v2560
        %2562 = vdwg.mxu0
        %2563 = vmatpush.bf16.msra.mxu0 %v2476
        %2564 = vmatpush.bf16.msra.mxu0 %v2474
        %2565 = vmatpush.bf16.msra.mxu0 %v2472
        %2566 = vmatpush.bf16.msra.mxu0 %v2470
        %2567 = vmatpush.bf16.msra.mxu0 %v2468
        %2568 = vmatpush.bf16.msra.mxu0 %v2466
        %2569 = vmatpush.bf16.msra.mxu0 %v2464
        %2570 = vmatpush.bf16.msra.mxu0 %v2462
        %2571 = vmatmul.bf16.gmra.mxu0 %v675
        %v2572 = vpop.f32.mrf.mxu0
        %v2573 = vadd.f32 %v2356, %v2572
        %v2574 = vpop.f32.mrf.mxu0
        %v2575 = vadd.f32 %v2358, %v2574
        %2576 = vmatmul.bf16.gmra.mxu0 %v677
        %v2577 = vpop.f32.mrf.mxu0
        %v2578 = vadd.f32 %v2361, %v2577
        %v2579 = vpop.f32.mrf.mxu0
        %v2580 = vadd.f32 %v2363, %v2579
        %2581 = vdwg.mxu0
        %2582 = vmatpush.bf16.msra.mxu0 %v2492
        %2583 = vmatpush.bf16.msra.mxu0 %v2490
        %2584 = vmatpush.bf16.msra.mxu0 %v2488
        %2585 = vmatpush.bf16.msra.mxu0 %v2486
        %2586 = vmatpush.bf16.msra.mxu0 %v2484
        %2587 = vmatpush.bf16.msra.mxu0 %v2482
        %2588 = vmatpush.bf16.msra.mxu0 %v2480
        %2589 = vmatpush.bf16.msra.mxu0 %v2478
        %2590 = vmatmul.bf16.gmra.mxu0 %v676
        %v2591 = vpop.f32.mrf.mxu0
        %v2592 = vadd.f32 %v2573, %v2591
        %v2593 = vpop.f32.mrf.mxu0
        %v2594 = vadd.f32 %v2575, %v2593
        %2595 = vmatmul.bf16.gmra.mxu0 %v678
        %v2596 = vpop.f32.mrf.mxu0
        %v2597 = vadd.f32 %v2578, %v2596
        %v2598 = vpop.f32.mrf.mxu0
        %v2599 = vadd.f32 %v2580, %v2598
        %2600 = vdwg.mxu0
        %s2601 = scalar_lea.vmem %s1, 2048
        %v2602 = vld [vmem:[%s2601] sm:$0xff]
        %v2603 = vld [vmem:[%s2601 + $0x8] sm:$0xff]
        %v2604 = vld [vmem:[%s2601 + $0x10] sm:$0xff]
        %v2605 = vld [vmem:[%s2601 + $0x18] sm:$0xff]
        %v2606 = vld [vmem:[%s2601 + $0x20] sm:$0xff]
        %v2607 = vld [vmem:[%s2601 + $0x28] sm:$0xff]
        %v2608 = vld [vmem:[%s2601 + $0x30] sm:$0xff]
        %v2609 = vld [vmem:[%s2601 + $0x38] sm:$0xff]
        %v2610 = vld [vmem:[%s2601 + $0x40] sm:$0xff]
        %v2611 = vld [vmem:[%s2601 + $0x48] sm:$0xff]
        %v2612 = vld [vmem:[%s2601 + $0x50] sm:$0xff]
        %v2613 = vld [vmem:[%s2601 + $0x58] sm:$0xff]
        %v2614 = vld [vmem:[%s2601 + $0x60] sm:$0xff]
        %v2615 = vld [vmem:[%s2601 + $0x68] sm:$0xff]
        %v2616 = vld [vmem:[%s2601 + $0x70] sm:$0xff]
        %v2617 = vld [vmem:[%s2601 + $0x78] sm:$0xff]
        %v2618 = vld [vmem:[%s2601 + $0x80] sm:$0xff]
        %v2619 = vld [vmem:[%s2601 + $0x88] sm:$0xff]
        %v2620 = vld [vmem:[%s2601 + $0x90] sm:$0xff]
        %v2621 = vld [vmem:[%s2601 + $0x98] sm:$0xff]
        %v2622 = vld [vmem:[%s2601 + $0xa0] sm:$0xff]
        %v2623 = vld [vmem:[%s2601 + $0xa8] sm:$0xff]
        %v2624 = vld [vmem:[%s2601 + $0xb0] sm:$0xff]
        %v2625 = vld [vmem:[%s2601 + $0xb8] sm:$0xff]
        %v2626 = vld [vmem:[%s2601 + $0xc0] sm:$0xff]
        %v2627 = vld [vmem:[%s2601 + $0xc8] sm:$0xff]
        %v2628 = vld [vmem:[%s2601 + $0xd0] sm:$0xff]
        %v2629 = vld [vmem:[%s2601 + $0xd8] sm:$0xff]
        %v2630 = vld [vmem:[%s2601 + $0xe0] sm:$0xff]
        %v2631 = vld [vmem:[%s2601 + $0xe8] sm:$0xff]
        %v2632 = vld [vmem:[%s2601 + $0xf0] sm:$0xff]
        %v2633 = vld [vmem:[%s2601 + $0xf8] sm:$0xff]
        %v2666 = vunpack.c.l.b16 %v2602
        %v2667 = vunpack.c.h.b16 %v2602
        %v2668 = vunpack.c.l.b16 %v2603
        %v2669 = vunpack.c.h.b16 %v2603
        %v2670 = vunpack.c.l.b16 %v2604
        %v2671 = vunpack.c.h.b16 %v2604
        %v2672 = vunpack.c.l.b16 %v2605
        %v2673 = vunpack.c.h.b16 %v2605
        %v2674 = vunpack.c.l.b16 %v2606
        %v2675 = vunpack.c.h.b16 %v2606
        %v2676 = vunpack.c.l.b16 %v2607
        %v2677 = vunpack.c.h.b16 %v2607
        %v2678 = vunpack.c.l.b16 %v2608
        %v2679 = vunpack.c.h.b16 %v2608
        %v2680 = vunpack.c.l.b16 %v2609
        %v2681 = vunpack.c.h.b16 %v2609
        %v2682 = vunpack.c.l.b16 %v2610
        %v2683 = vunpack.c.h.b16 %v2610
        %v2684 = vunpack.c.l.b16 %v2611
        %v2685 = vunpack.c.h.b16 %v2611
        %v2686 = vunpack.c.l.b16 %v2612
        %v2687 = vunpack.c.h.b16 %v2612
        %v2688 = vunpack.c.l.b16 %v2613
        %v2689 = vunpack.c.h.b16 %v2613
        %v2690 = vunpack.c.l.b16 %v2614
        %v2691 = vunpack.c.h.b16 %v2614
        %v2692 = vunpack.c.l.b16 %v2615
        %v2693 = vunpack.c.h.b16 %v2615
        %v2694 = vunpack.c.l.b16 %v2616
        %v2695 = vunpack.c.h.b16 %v2616
        %v2696 = vunpack.c.l.b16 %v2617
        %v2697 = vunpack.c.h.b16 %v2617
        %v2698 = vunpack.c.l.b16 %v2618
        %v2699 = vunpack.c.h.b16 %v2618
        %v2700 = vunpack.c.l.b16 %v2619
        %v2701 = vunpack.c.h.b16 %v2619
        %v2702 = vunpack.c.l.b16 %v2620
        %v2703 = vunpack.c.h.b16 %v2620
        %v2704 = vunpack.c.l.b16 %v2621
        %v2705 = vunpack.c.h.b16 %v2621
        %v2706 = vunpack.c.l.b16 %v2622
        %v2707 = vunpack.c.h.b16 %v2622
        %v2708 = vunpack.c.l.b16 %v2623
        %v2709 = vunpack.c.h.b16 %v2623
        %v2710 = vunpack.c.l.b16 %v2624
        %v2711 = vunpack.c.h.b16 %v2624
        %v2712 = vunpack.c.l.b16 %v2625
        %v2713 = vunpack.c.h.b16 %v2625
        %v2714 = vunpack.c.l.b16 %v2626
        %v2715 = vunpack.c.h.b16 %v2626
        %v2716 = vunpack.c.l.b16 %v2627
        %v2717 = vunpack.c.h.b16 %v2627
        %v2718 = vunpack.c.l.b16 %v2628
        %v2719 = vunpack.c.h.b16 %v2628
        %v2720 = vunpack.c.l.b16 %v2629
        %v2721 = vunpack.c.h.b16 %v2629
        %v2722 = vunpack.c.l.b16 %v2630
        %v2723 = vunpack.c.h.b16 %v2630
        %v2724 = vunpack.c.l.b16 %v2631
        %v2725 = vunpack.c.h.b16 %v2631
        %v2726 = vunpack.c.l.b16 %v2632
        %v2727 = vunpack.c.h.b16 %v2632
        %v2728 = vunpack.c.l.b16 %v2633
        %v2729 = vunpack.c.h.b16 %v2633
        %v2730 = vpack.c.b16 %v2668, %v2666
        %v2731 = vpack.c.b16 %v2669, %v2667
        %v2732 = vpack.c.b16 %v2672, %v2670
        %v2733 = vpack.c.b16 %v2673, %v2671
        %v2734 = vpack.c.b16 %v2676, %v2674
        %v2735 = vpack.c.b16 %v2677, %v2675
        %v2736 = vpack.c.b16 %v2680, %v2678
        %v2737 = vpack.c.b16 %v2681, %v2679
        %v2738 = vpack.c.b16 %v2684, %v2682
        %v2739 = vpack.c.b16 %v2685, %v2683
        %v2740 = vpack.c.b16 %v2688, %v2686
        %v2741 = vpack.c.b16 %v2689, %v2687
        %v2742 = vpack.c.b16 %v2692, %v2690
        %v2743 = vpack.c.b16 %v2693, %v2691
        %v2744 = vpack.c.b16 %v2696, %v2694
        %v2745 = vpack.c.b16 %v2697, %v2695
        %v2746 = vpack.c.b16 %v2700, %v2698
        %v2747 = vpack.c.b16 %v2701, %v2699
        %v2748 = vpack.c.b16 %v2704, %v2702
        %v2749 = vpack.c.b16 %v2705, %v2703
        %v2750 = vpack.c.b16 %v2708, %v2706
        %v2751 = vpack.c.b16 %v2709, %v2707
        %v2752 = vpack.c.b16 %v2712, %v2710
        %v2753 = vpack.c.b16 %v2713, %v2711
        %v2754 = vpack.c.b16 %v2716, %v2714
        %v2755 = vpack.c.b16 %v2717, %v2715
        %v2756 = vpack.c.b16 %v2720, %v2718
        %v2757 = vpack.c.b16 %v2721, %v2719
        %v2758 = vpack.c.b16 %v2724, %v2722
        %v2759 = vpack.c.b16 %v2725, %v2723
        %v2760 = vpack.c.b16 %v2728, %v2726
        %v2761 = vpack.c.b16 %v2729, %v2727
        %2794 = vmatpush.bf16.msra.mxu0 %v2744
        %2795 = vmatpush.bf16.msra.mxu0 %v2742
        %2796 = vmatpush.bf16.msra.mxu0 %v2740
        %2797 = vmatpush.bf16.msra.mxu0 %v2738
        %2798 = vmatpush.bf16.msra.mxu0 %v2736
        %2799 = vmatpush.bf16.msra.mxu0 %v2734
        %2800 = vmatpush.bf16.msra.mxu0 %v2732
        %2801 = vmatpush.bf16.msra.mxu0 %v2730
        %2802 = vmatmul.bf16.gmra.mxu0 %v964
        %v2803 = vpop.f32.mrf.mxu0
        %v2804 = vadd.f32 0.0, %v2803
        %v2805 = vpop.f32.mrf.mxu0
        %v2806 = vadd.f32 0.0, %v2805
        %2807 = vmatmul.bf16.gmra.mxu0 %v966
        %v2808 = vpop.f32.mrf.mxu0
        %v2809 = vadd.f32 0.0, %v2808
        %v2810 = vpop.f32.mrf.mxu0
        %v2811 = vadd.f32 0.0, %v2810
        %2812 = vdwg.mxu0
        %2813 = vmatpush.bf16.msra.mxu0 %v2760
        %2814 = vmatpush.bf16.msra.mxu0 %v2758
        %2815 = vmatpush.bf16.msra.mxu0 %v2756
        %2816 = vmatpush.bf16.msra.mxu0 %v2754
        %2817 = vmatpush.bf16.msra.mxu0 %v2752
        %2818 = vmatpush.bf16.msra.mxu0 %v2750
        %2819 = vmatpush.bf16.msra.mxu0 %v2748
        %2820 = vmatpush.bf16.msra.mxu0 %v2746
        %2821 = vmatmul.bf16.gmra.mxu0 %v965
        %v2822 = vpop.f32.mrf.mxu0
        %v2823 = vadd.f32 %v2804, %v2822
        %v2824 = vpop.f32.mrf.mxu0
        %v2825 = vadd.f32 %v2806, %v2824
        %2826 = vmatmul.bf16.gmra.mxu0 %v967
        %v2827 = vpop.f32.mrf.mxu0
        %v2828 = vadd.f32 %v2809, %v2827
        %v2829 = vpop.f32.mrf.mxu0
        %v2830 = vadd.f32 %v2811, %v2829
        %2831 = vdwg.mxu0
        %2832 = vmatpush.bf16.msra.mxu0 %v2745
        %2833 = vmatpush.bf16.msra.mxu0 %v2743
        %2834 = vmatpush.bf16.msra.mxu0 %v2741
        %2835 = vmatpush.bf16.msra.mxu0 %v2739
        %2836 = vmatpush.bf16.msra.mxu0 %v2737
        %2837 = vmatpush.bf16.msra.mxu0 %v2735
        %2838 = vmatpush.bf16.msra.mxu0 %v2733
        %2839 = vmatpush.bf16.msra.mxu0 %v2731
        %2840 = vmatmul.bf16.gmra.mxu0 %v964
        %v2841 = vpop.f32.mrf.mxu0
        %v2842 = vadd.f32 0.0, %v2841
        %v2843 = vpop.f32.mrf.mxu0
        %v2844 = vadd.f32 0.0, %v2843
        %2845 = vmatmul.bf16.gmra.mxu0 %v966
        %v2846 = vpop.f32.mrf.mxu0
        %v2847 = vadd.f32 0.0, %v2846
        %v2848 = vpop.f32.mrf.mxu0
        %v2849 = vadd.f32 0.0, %v2848
        %2850 = vdwg.mxu0
        %2851 = vmatpush.bf16.msra.mxu0 %v2761
        %2852 = vmatpush.bf16.msra.mxu0 %v2759
        %2853 = vmatpush.bf16.msra.mxu0 %v2757
        %2854 = vmatpush.bf16.msra.mxu0 %v2755
        %2855 = vmatpush.bf16.msra.mxu0 %v2753
        %2856 = vmatpush.bf16.msra.mxu0 %v2751
        %2857 = vmatpush.bf16.msra.mxu0 %v2749
        %2858 = vmatpush.bf16.msra.mxu0 %v2747
        %2859 = vmatmul.bf16.gmra.mxu0 %v965
        %v2860 = vpop.f32.mrf.mxu0
        %v2861 = vadd.f32 %v2842, %v2860
        %v2862 = vpop.f32.mrf.mxu0
        %v2863 = vadd.f32 %v2844, %v2862
        %2864 = vmatmul.bf16.gmra.mxu0 %v967
        %v2865 = vpop.f32.mrf.mxu0
        %v2866 = vadd.f32 %v2847, %v2865
        %v2867 = vpop.f32.mrf.mxu0
        %v2868 = vadd.f32 %v2849, %v2867
        %2869 = vdwg.mxu0
        %v2870 = vadd.f32 %v2554, %v2823
        %v2871 = vadd.f32 %v2592, %v2861
        %v2872 = vadd.f32 %v2556, %v2825
        %v2873 = vadd.f32 %v2594, %v2863
        %v2874 = vadd.f32 %v2559, %v2828
        %v2875 = vadd.f32 %v2597, %v2866
        %v2876 = vadd.f32 %v2561, %v2830
        %v2877 = vadd.f32 %v2599, %v2868
        %v2878 = vrot.slane %v2870, 1
        %v2879 = vrot.slane %v2871, 1
        %v2880 = vrot.slane %v2872, 1
        %v2881 = vrot.slane %v2873, 1
        %v2882 = vrot.slane %v2874, 1
        %v2883 = vrot.slane %v2875, 1
        %v2884 = vrot.slane %v2876, 1
        %v2885 = vrot.slane %v2877, 1
        %vm2886 = vcmp.lt.s32.totalorder %v265, 7
        %v2887 = vsel %vm2886, %v2882, %v2884
        %v2888 = vsel %vm2886, %v2883, %v2885
        %v2889 = vsel %vm2886, %v2880, %v2882
        %v2890 = vsel %vm2886, %v2881, %v2883
        %v2891 = vsel %vm2886, %v2878, %v2880
        %v2892 = vsel %vm2886, %v2879, %v2881
        %v2893 = vsel %vm2886, %v2884, %v2878
        %v2894 = vsel %vm2886, %v2885, %v2879
        %v2895 = vmul.f32 %v337, %v2891
        %v2896 = vmul.f32 %v337, %v2892
        %v2897 = vmul.f32 %v338, %v2889
        %v2898 = vmul.f32 %v338, %v2890
        %v2899 = vmul.f32 %v339, %v2887
        %v2900 = vmul.f32 %v339, %v2888
        %v2901 = vmul.f32 %v340, %v2893
        %v2902 = vmul.f32 %v340, %v2894
        %v2903 = vadd.f32 %v2055, %v2895
        %v2904 = vadd.f32 %v2056, %v2896
        %v2905 = vadd.f32 %v2057, %v2897
        %v2906 = vadd.f32 %v2058, %v2898
        %v2907 = vadd.f32 %v2059, %v2899
        %v2908 = vadd.f32 %v2060, %v2900
        %v2909 = vadd.f32 %v2061, %v2901
        %v2910 = vadd.f32 %v2062, %v2902
        %v2911 = vadd.f32 %v2903, %v2904
        %2912 = vadd.xlane.f32.xlu0 %v2911
        %v2913 = vpop.xlane.xlu0 %2912
        %v2914 = vadd.f32 %v2905, %v2906
        %2915 = vadd.xlane.f32.xlu0 %v2914
        %v2916 = vpop.xlane.xlu0 %2915
        %v2917 = vadd.f32 %v2907, %v2908
        %2918 = vadd.xlane.f32.xlu0 %v2917
        %v2919 = vpop.xlane.xlu0 %2918
        %v2920 = vadd.f32 %v2909, %v2910
        %2921 = vadd.xlane.f32.xlu0 %v2920
        %v2922 = vpop.xlane.xlu0 %2921
        %v2923 = vrcp.pop 256.0
        %v2924 = vmul.f32 256.0, %v2923
        %v2925 = vsub.f32 1.0, %v2924
        %v2926 = vmul.f32 %v2923, %v2925
        %v2927 = vadd.f32 %v2923, %v2926
        %vm2928 = vweird.f32 %v2923
        %v2929 = vsel %vm2928, %v2923, %v2927
        %v2930 = vmul.f32 %v2913, %v2929
        %v2931 = vmul.f32 %v2916, %v2929
        %v2932 = vmul.f32 %v2919, %v2929
        %v2933 = vmul.f32 %v2922, %v2929
        %v2934 = vsub.f32 %v2903, %v2930
        %v2935 = vsub.f32 %v2904, %v2930
        %v2936 = vsub.f32 %v2905, %v2931
        %v2937 = vsub.f32 %v2906, %v2931
        %v2938 = vsub.f32 %v2907, %v2932
        %v2939 = vsub.f32 %v2908, %v2932
        %v2940 = vsub.f32 %v2909, %v2933
        %v2941 = vsub.f32 %v2910, %v2933
        %v2942 = vmul.f32 %v2934, %v2934
        %v2943 = vmul.f32 %v2935, %v2935
        %v2944 = vmul.f32 %v2936, %v2936
        %v2945 = vmul.f32 %v2937, %v2937
        %v2946 = vmul.f32 %v2938, %v2938
        %v2947 = vmul.f32 %v2939, %v2939
        %v2948 = vmul.f32 %v2940, %v2940
        %v2949 = vmul.f32 %v2941, %v2941
        %v2950 = vadd.f32 %v2942, %v2943
        %2951 = vadd.xlane.f32.xlu0 %v2950
        %v2952 = vpop.xlane.xlu0 %2951
        %v2953 = vadd.f32 %v2944, %v2945
        %2954 = vadd.xlane.f32.xlu0 %v2953
        %v2955 = vpop.xlane.xlu0 %2954
        %v2956 = vadd.f32 %v2946, %v2947
        %2957 = vadd.xlane.f32.xlu0 %v2956
        %v2958 = vpop.xlane.xlu0 %2957
        %v2959 = vadd.f32 %v2948, %v2949
        %2960 = vadd.xlane.f32.xlu0 %v2959
        %v2961 = vpop.xlane.xlu0 %2960
        %v2962 = vmul.f32 %v2952, %v2929
        %v2963 = vmul.f32 %v2955, %v2929
        %v2964 = vmul.f32 %v2958, %v2929
        %v2965 = vmul.f32 %v2961, %v2929
        %v2966 = vadd.f32 %v2962, 1e-06
        %v2967 = vadd.f32 %v2963, 1e-06
        %v2968 = vadd.f32 %v2964, 1e-06
        %v2969 = vadd.f32 %v2965, 1e-06
        %v2970 = vrsqrt.pop %v2966
        %v2971 = vmul.f32 %v2970, %v2966
        %v2972 = vmul.f32 %v2971, %v2970
        %v2973 = vmul.f32 0.5, %v2972
        %v2974 = vsub.f32 1.5, %v2973
        %v2975 = vmul.f32 %v2970, %v2974
        %vm2976 = vweird.f32 %v2966
        %vm2977 = vweird.f32 %v2970
        %vm2978 = vmor %vm2976, %vm2977
        %v2979 = vsel %vm2978, %v2970, %v2975
        %v2980 = vrsqrt.pop %v2967
        %v2981 = vmul.f32 %v2980, %v2967
        %v2982 = vmul.f32 %v2981, %v2980
        %v2983 = vmul.f32 0.5, %v2982
        %v2984 = vsub.f32 1.5, %v2983
        %v2985 = vmul.f32 %v2980, %v2984
        %vm2986 = vweird.f32 %v2967
        %vm2987 = vweird.f32 %v2980
        %vm2988 = vmor %vm2986, %vm2987
        %v2989 = vsel %vm2988, %v2980, %v2985
        %v2990 = vrsqrt.pop %v2968
        %v2991 = vmul.f32 %v2990, %v2968
        %v2992 = vmul.f32 %v2991, %v2990
        %v2993 = vmul.f32 0.5, %v2992
        %v2994 = vsub.f32 1.5, %v2993
        %v2995 = vmul.f32 %v2990, %v2994
        %vm2996 = vweird.f32 %v2968
        %vm2997 = vweird.f32 %v2990
        %vm2998 = vmor %vm2996, %vm2997
        %v2999 = vsel %vm2998, %v2990, %v2995
        %v3000 = vrsqrt.pop %v2969
        %v3001 = vmul.f32 %v3000, %v2969
        %v3002 = vmul.f32 %v3001, %v3000
        %v3003 = vmul.f32 0.5, %v3002
        %v3004 = vsub.f32 1.5, %v3003
        %v3005 = vmul.f32 %v3000, %v3004
        %vm3006 = vweird.f32 %v2969
        %vm3007 = vweird.f32 %v3000
        %vm3008 = vmor %vm3006, %vm3007
        %v3009 = vsel %vm3008, %v3000, %v3005
        %v3010 = vmul.f32 %v2934, %v2979
        %v3011 = vmul.f32 %v2935, %v2979
        %v3012 = vmul.f32 %v2936, %v2989
        %v3013 = vmul.f32 %v2937, %v2989
        %v3014 = vmul.f32 %v2938, %v2999
        %v3015 = vmul.f32 %v2939, %v2999
        %v3016 = vmul.f32 %v2940, %v3009
        %v3017 = vmul.f32 %v2941, %v3009
        %v3018 = vld [vmem:[%s2] sm:$0x3]
        %v3020 = vperm.slane %v3018, 0
        %v3021 = vperm.slane %v3018, 1
        %v3024 = vmul.f32 %v3010, %v3020
        %v3025 = vmul.f32 %v3011, %v3021
        %v3026 = vmul.f32 %v3012, %v3020
        %v3027 = vmul.f32 %v3013, %v3021
        %v3028 = vmul.f32 %v3014, %v3020
        %v3029 = vmul.f32 %v3015, %v3021
        %v3030 = vmul.f32 %v3016, %v3020
        %v3031 = vmul.f32 %v3017, %v3021
        %v3032 = vld [vmem:[%s3] sm:$0x3]
        %v3034 = vperm.slane %v3032, 0
        %v3035 = vperm.slane %v3032, 1
        %v3038 = vadd.f32 %v3024, %v3034
        %v3039 = vadd.f32 %v3025, %v3035
        %v3040 = vadd.f32 %v3026, %v3034
        %v3041 = vadd.f32 %v3027, %v3035
        %v3042 = vadd.f32 %v3028, %v3034
        %v3043 = vadd.f32 %v3029, %v3035
        %v3044 = vadd.f32 %v3030, %v3034
        %v3045 = vadd.f32 %v3031, %v3035
        %3046 = vst [vmem:[%s204] sm:$0xff] %v3038
        %3047 = vst [vmem:[%s204 + $0x8] sm:$0xff] %v3039
        %3048 = vst [vmem:[%s204 + $0x10] sm:$0xff] %v3040
        %3049 = vst [vmem:[%s204 + $0x18] sm:$0xff] %v3041
        %3050 = vst [vmem:[%s204 + $0x20] sm:$0xff] %v3042
        %3051 = vst [vmem:[%s204 + $0x28] sm:$0xff] %v3043
        %3052 = vst [vmem:[%s204 + $0x30] sm:$0xff] %v3044
        %3053 = vst [vmem:[%s204 + $0x38] sm:$0xff] %v3045
        %s3054 = sand.u32 %s129, 1
        %s3055 = scalar_lea.sflag [#allocation4], %s3054
        %s3056 = sand.u32 %s129, 1
        %s3057 = smul.addr %s3056, 64
        %s3058 = scalar_lea.vmem [#allocation3], %s3057
        // Predicated region
        $region41: #{histosam_forward.3} parent=35 // pred_check
          %p3059 = pneg %p139
        $region42: #{histosam_forward.3} parent=35 // pred_check_branch
          %3061 = sbr.rel (%p3059) target = $region44
        $region43: #{histosam_forward.3} parent=35 // pred_region
          %s3062 = smul.u32 4, %s23
          %3064 = vsyncadd %s3055, 0
          %s3065 = smul.addr %s3062, 2
          %s3066 = smul.addr %s22, 16
          %s3067 = sadd.s32 %s3065, %s3066
          %s3068 = smul.addr %s3067, 8
          %s3069 = scalar_lea.hbm %s4, %s3068
          %s3070 = sshll.u32 %s3058, 4
          %s3071 = int_to_ptr.vmem [resolvable:$true] %s3070
          %s3072 = sshll.u32 %s3069, 4
          %s3073 = int_to_ptr.hbm [resolvable:$true] %s3072
          %3078 = dma.vmem_to_hbm [thread:$0]  %s3071, 1024, %s3073, %s3055, 256, 256, 16
        $region44: #{histosam_forward.3} parent=35 // pred_fallthru
          _
      $region36: #{histosam_forward.3} parent=5 // pred_fallthru
        _
      %p3079 = scmp.le.s32.totalorder 2, %s13
      // Predicated region
      $region45: #{histosam_forward.3} parent=5 // pred_check
        %p3080 = pneg %p3079
      $region46: #{histosam_forward.3} parent=5 // pred_check_branch
        %3082 = sbr.rel (%p3080) target = $region48
      $region47: #{histosam_forward.3} parent=5 // pred_region
        %s3083 = ssub.s32 %s13, 2
        // Predicated region
        $region49: #{histosam_forward.3} parent=47 // pred_check
          %p3084 = pneg %p145
        $region50: #{histosam_forward.3} parent=47 // pred_check_branch
          %3086 = sbr.rel (%p3084) target = $region52
        $region51: #{histosam_forward.3} parent=47 // pred_region
          %s3087 = sand.u32 %s130, 1
          %s3088 = scalar_lea.sflag [#allocation4], %s3087
          %s3089 = sand.u32 %s130, 1
          %s3090 = smul.addr %s3089, 64
          %s3091 = scalar_lea.vmem [#allocation3], %s3090
          %3093 = dma.done %s3088, 1024
        $region52: #{histosam_forward.3} parent=47 // pred_fallthru
          _
      $region48: #{histosam_forward.3} parent=5 // pred_fallthru
        _
    $region6: #{histosam_forward.3} parent=1 // loop_footer
      %s17 = sadd.s32 1, %s13
    $region7: #{histosam_forward.3} parent=1 // loop_footer_branch
      %12 = sbr.rel target = $region3
    $region8: #{histosam_forward.3} parent=1 // loop_exit
      _
    %3094 = vsyncpa [#allocation4], 1
    %s3095 = scalar_lea.sflag [#allocation4], 1
    %3096 = vsyncpa %s3095, 1

</llo_original>
